<compile_context>
chip_gen: v5e
topology: v5e:2x2
jax: 0.10.0
libtpu: 0.0.40
codegen_flags: <defaults>
</compile_context>

<pallas_src>
import jax
import jax.numpy as jnp
from jax import lax
from jax.experimental import pallas as pl
from jax.experimental.pallas import tpu as pltpu


def _round_up(x, m):
    return ((x + m - 1) // m) * m


# ---------------------------------------------------------------------------
# Fused Pallas kernel: all LSTM layers + FC head
# ---------------------------------------------------------------------------
def fused_lstm_fc_kernel(x_ref, w_ih_ref, w_hh_ref, b_ref, w_fc_ref, b_fc_ref,
                         h0_ref, c0_ref,
                         out_ref, hN_ref, cN_ref,
                         act_ref, gx_ref):
    """x_ref: (T, B_pad, DI) time-major, padded.
    w_ih_ref: (L, DI, 4*H_pad), w_hh_ref: (L, H_pad, 4*H_pad), b_ref: (L, 1, 4*H_pad)
    w_fc_ref: (H_pad, O_pad), b_fc_ref: (1, O_pad)
    act_ref scratch: (T, B_pad, H_pad)   gx_ref scratch: (T, B_pad, 4*H_pad)
    """
    T, B_pad, DI = x_ref.shape
    L, H_pad, G = w_hh_ref.shape
    O_pad = out_ref.shape[-1]
    unroll = True if T <= 32 else 8

    for l in range(L):                       # static layer unroll (L is small)
        # ---- Phase 1: hoisted input projection, one lane-dense MXU matmul ----
        if l == 0:
            x_flat = x_ref[...].reshape(T * B_pad, DI)
            w_in = w_ih_ref[l]                       # (DI, G)
        else:
            x_flat = act_ref[...].reshape(T * B_pad, H_pad)
            w_in = w_ih_ref[l][:H_pad, :]            # (H_pad, G)
        gx = jnp.dot(x_flat, w_in, preferred_element_type=jnp.float32) + b_ref[l]
        gx_ref[...] = gx.reshape(T, B_pad, G)

        # ---- Phase 2: serial recurrence, h/c carried in loop-carry vregs ----
        w_hh_l = w_hh_ref[l]                          # (H_pad, G), loop-invariant

        def step(t, carry):
            h, c = carry
            gates = gx_ref[t] + jnp.dot(h, w_hh_l,
                                        preferred_element_type=jnp.float32)
            # lane-aligned gate slices (H_pad is a multiple of 128)
            i = jax.nn.sigmoid(gates[:, 0 * H_pad:1 * H_pad])
            f = jax.nn.sigmoid(gates[:, 1 * H_pad:2 * H_pad])
            g = jnp.tanh(gates[:, 2 * H_pad:3 * H_pad])
            o = jax.nn.sigmoid(gates[:, 3 * H_pad:4 * H_pad])
            c_new = f * c + i * g
            h_new = o * jnp.tanh(c_new)
            act_ref[t] = h_new                        # lane-dense (B_pad, H_pad) store
            return (h_new, c_new)

        h_fin, c_fin = lax.fori_loop(0, T, step, (h0_ref[l], c0_ref[l]),
                                     unroll=unroll)
        hN_ref[l] = h_fin
        cN_ref[l] = c_fin

    # ---- Phase 3: fused FC head over all (T*B) rows, lane-dense output ----
    act_flat = act_ref[...].reshape(T * B_pad, H_pad)
    y = (jnp.dot(act_flat, w_fc_ref[...], preferred_element_type=jnp.float32)
         + b_fc_ref[...])
    out_ref[...] = y.reshape(T, B_pad, O_pad)


_VMEM = pl.BlockSpec(memory_space=pltpu.MemorySpace.VMEM)


# ---------------------------------------------------------------------------
# Parameter init (PyTorch-equivalent logical params) and padded packing
# ---------------------------------------------------------------------------
def init_params(key, input_dim, hidden_dim, num_layers, output_dim):
    """PyTorch-style uniform(-1/sqrt(H), 1/sqrt(H)) init, deterministic.
    Weights stored pre-transposed: (din, 4H) / (H, 4H); gate order i, f, g, o."""
    k = 1.0 / jnp.sqrt(jnp.float32(hidden_dim))
    w_ih, w_hh, bias = [], [], []
    for l in range(num_layers):
        din = input_dim if l == 0 else hidden_dim
        key, k1, k2, k3, k4 = jax.random.split(key, 5)
        w_ih.append(jax.random.uniform(k1, (din, 4 * hidden_dim), jnp.float32, -k, k))
        w_hh.append(jax.random.uniform(k2, (hidden_dim, 4 * hidden_dim), jnp.float32, -k, k))
        b_ih = jax.random.uniform(k3, (4 * hidden_dim,), jnp.float32, -k, k)
        b_hh = jax.random.uniform(k4, (4 * hidden_dim,), jnp.float32, -k, k)
        bias.append((b_ih + b_hh).reshape(1, 4 * hidden_dim))
    key, k5, k6 = jax.random.split(key, 3)
    w_fc = jax.random.uniform(k5, (hidden_dim, output_dim), jnp.float32, -k, k)
    b_fc = jax.random.uniform(k6, (1, output_dim), jnp.float32, -k, k)
    return dict(w_ih=w_ih, w_hh=w_hh, b=bias, w_fc=w_fc, b_fc=b_fc,
                hidden_dim=hidden_dim, num_layers=num_layers)


def pack_params(params):
    """Pad H -> multiple of 128 (per gate block), input dim -> DI, output -> 128,
    and stack layer weights so the kernel gets lane-aligned operands.
    Zero padding keeps the recurrence exact: padded hidden lanes stay 0."""
    H, L = params["hidden_dim"], params["num_layers"]
    H_pad = _round_up(H, 128)
    G = 4 * H_pad
    din0 = params["w_ih"][0].shape[0]
    DI = max(_round_up(din0, 128), H_pad)
    O = params["w_fc"].shape[1]
    O_pad = _round_up(O, 128)

    def pad_gate_cols(w):                     # (..., 4H) -> (..., 4*H_pad)
        parts = [w[..., k * H:(k + 1) * H] for k in range(4)]
        pads = [(0, 0)] * (w.ndim - 1) + [(0, H_pad - H)]
        return jnp.concatenate([jnp.pad(p, pads) for p in parts], axis=-1)

    w_ih, w_hh, b = [], [], []
    for l in range(L):
        wi = pad_gate_cols(params["w_ih"][l])                 # (din_l, G)
        wi = jnp.pad(wi, ((0, DI - wi.shape[0]), (0, 0)))     # (DI, G)
        w_ih.append(wi)
        wh = pad_gate_cols(params["w_hh"][l])                 # (H, G)
        w_hh.append(jnp.pad(wh, ((0, H_pad - H), (0, 0))))    # (H_pad, G)
        b.append(pad_gate_cols(params["b"][l]))               # (1, G)
    w_fc = jnp.pad(params["w_fc"], ((0, H_pad - H), (0, O_pad - O)))
    b_fc = jnp.pad(params["b_fc"], ((0, 0), (0, O_pad - O)))
    return dict(w_ih=jnp.stack(w_ih), w_hh=jnp.stack(w_hh), b=jnp.stack(b),
                w_fc=w_fc, b_fc=b_fc,
                H=H, L=L, O=O, H_pad=H_pad, DI=DI, O_pad=O_pad)


# ---------------------------------------------------------------------------
# Forward wrapper (mirrors LSTM_model.forward, batch_first)
# ---------------------------------------------------------------------------
def lstm_model_forward(params, x, hidden=None):
    """x: (B, T, input_dim). Returns (linear_out (B, T, output_dim),
    (h_n, c_n) each (num_layers, B, hidden_dim))."""
    packed = pack_params(params)
    B, T, Din = x.shape
    H, L = packed["H"], packed["L"]
    H_pad, DI, O_pad, O = packed["H_pad"], packed["DI"], packed["O_pad"], packed["O"]
    B_pad = _round_up(max(B, 8), 8)

    # TODO(synk): for large sequences fold this transpose/pad into the hoisted
    #             input-projection matmul layout to avoid an HBM round trip.
    x_t = jnp.transpose(x, (1, 0, 2)).astype(jnp.float32)          # (T, B, Din)
    x_pad = jnp.pad(x_t, ((0, 0), (0, B_pad - B), (0, DI - Din)))  # (T, B_pad, DI)

    if hidden is None:
        h0 = jnp.zeros((L, B_pad, H_pad), jnp.float32)
        c0 = jnp.zeros((L, B_pad, H_pad), jnp.float32)
    else:
        h0_in, c0_in = hidden
        h0 = jnp.pad(h0_in.astype(jnp.float32),
                     ((0, 0), (0, B_pad - B), (0, H_pad - H)))
        c0 = jnp.pad(c0_in.astype(jnp.float32),
                     ((0, 0), (0, B_pad - B), (0, H_pad - H)))

    out_pad, hN, cN = pl.pallas_call(
        fused_lstm_fc_kernel,
        out_shape=(jax.ShapeDtypeStruct((T, B_pad, O_pad), jnp.float32),
                   jax.ShapeDtypeStruct((L, B_pad, H_pad), jnp.float32),
                   jax.ShapeDtypeStruct((L, B_pad, H_pad), jnp.float32)),
        in_specs=[_VMEM] * 8,
        out_specs=(_VMEM, _VMEM, _VMEM),
        scratch_shapes=[pltpu.VMEM((T, B_pad, H_pad), jnp.float32),     # act slab
                        pltpu.VMEM((T, B_pad, 4 * H_pad), jnp.float32)],  # gates_x
        compiler_params=pltpu.CompilerParams(vmem_limit_bytes=32 * 1024 * 1024),
    )(x_pad, packed["w_ih"], packed["w_hh"], packed["b"],
      packed["w_fc"], packed["b_fc"], h0, c0)

    out = jnp.transpose(out_pad[:, :B, :O], (1, 0, 2))     # (B, T, O)
    h_n = hN[:, :B, :H]
    c_n = cN[:, :B, :H]
    return out, (h_n, c_n)


# ---------------------------------------------------------------------------
# Pure-JAX reference (for correctness check)
# ---------------------------------------------------------------------------
def lstm_model_ref(params, x):
    B, T, _ = x.shape
    H, L = params["hidden_dim"], params["num_layers"]
    layer_in = x.astype(jnp.float32)
    hs, cs = [], []
    for l in range(L):
        h = jnp.zeros((B, H), jnp.float32)
        c = jnp.zeros((B, H), jnp.float32)
        ys = []
        for t in range(T):
            g = (layer_in[:, t, :] @ params["w_ih"][l]
                 + h @ params["w_hh"][l] + params["b"][l])
            i = jax.nn.sigmoid(g[:, 0 * H:1 * H])
            f = jax.nn.sigmoid(g[:, 1 * H:2 * H])
            gg = jnp.tanh(g[:, 2 * H:3 * H])
            o = jax.nn.sigmoid(g[:, 3 * H:4 * H])
            c = f * c + i * gg
            h = o * jnp.tanh(c)
            ys.append(h)
        layer_in = jnp.stack(ys, axis=1)
        hs.append(h)
        cs.append(c)
    out = layer_in @ params["w_fc"] + params["b_fc"]
    return out, (jnp.stack(hs), jnp.stack(cs))


# ---------------------------------------------------------------------------
if __name__ == "__main__":
    input_dim, hidden_dim, num_layers, output_dim = 4, 32, 2, 8
    B, T = 2, 8

    key = jax.random.PRNGKey(0)
    key, pkey, xkey = jax.random.split(key, 3)
    params = init_params(pkey, input_dim, hidden_dim, num_layers, output_dim)
    x = jax.random.normal(xkey, (B, T, input_dim), jnp.float32)

    out, (h_n, c_n) = lstm_model_forward(params, x)
    jax.block_until_ready((out, h_n, c_n))

    ref_out, (ref_h, ref_c) = lstm_model_ref(params, x)
    assert out.shape == (B, T, output_dim)
    assert h_n.shape == (num_layers, B, hidden_dim)
    assert c_n.shape == (num_layers, B, hidden_dim)
    assert jnp.allclose(out, ref_out, atol=1e-4, rtol=1e-4)
    assert jnp.allclose(h_n, ref_h, atol=1e-4, rtol=1e-4)
    assert jnp.allclose(c_n, ref_c, atol=1e-4, rtol=1e-4)

    print("KERNEL_OK")
</pallas_src>

<mosaic_0001>
module attributes {stable_mosaic.version = 11 : i64} {
  func.func @fused_lstm_fc_kernel(%arg0: memref<8x8x128xf32, #tpu.memory_space<vmem>>, %arg1: memref<2x128x512xf32, #tpu.memory_space<vmem>>, %arg2: memref<2x128x512xf32, #tpu.memory_space<vmem>>, %arg3: memref<2x1x512xf32, #tpu.memory_space<vmem>>, %arg4: memref<128x128xf32, #tpu.memory_space<vmem>>, %arg5: memref<1x128xf32, #tpu.memory_space<vmem>>, %arg6: memref<2x8x128xf32, #tpu.memory_space<vmem>>, %arg7: memref<2x8x128xf32, #tpu.memory_space<vmem>>, %arg8: memref<8x8x128xf32, #tpu.memory_space<vmem>>, %arg9: memref<2x8x128xf32, #tpu.memory_space<vmem>>, %arg10: memref<2x8x128xf32, #tpu.memory_space<vmem>>, %arg11: memref<8x8x128xf32, #tpu.memory_space<vmem>>, %arg12: memref<8x8x512xf32, #tpu.memory_space<vmem>>) attributes {dimension_semantics = [], scalar_prefetch = 0 : i64, scratch_operands = 2 : i64, tpu.core_type = #tpu.core_type<tc>} {
    %c0 = arith.constant 0 : index
    %c0_0 = arith.constant 0 : index
    %c0_1 = arith.constant 0 : index
    %0 = vector.load %arg0[%c0, %c0_0, %c0_1] : memref<8x8x128xf32, #tpu.memory_space<vmem>>, vector<8x8x128xf32>
    %1 = vector.shape_cast %0 : vector<8x8x128xf32> to vector<64x128xf32>
    %c0_2 = arith.constant 0 : index
    %c0_3 = arith.constant 0 : index
    %c0_4 = arith.constant 0 : index
    %2 = vector.load %arg1[%c0_2, %c0_3, %c0_4] : memref<2x128x512xf32, #tpu.memory_space<vmem>>, vector<1x128x512xf32>
    %3 = vector.shape_cast %2 : vector<1x128x512xf32> to vector<128x512xf32>
    %cst = arith.constant dense<0.000000e+00> : vector<64x512xf32>
    %4 = tpu.matmul %1, %3, %cst {dimension_numbers = #tpu.dot_dimension_numbers<[1], [0], [0], [1], [0, 0, 1, 1], [], []>} : vector<64x128xf32>, vector<128x512xf32>, vector<64x512xf32> -> vector<64x512xf32>
    %c0_5 = arith.constant 0 : index
    %c0_6 = arith.constant 0 : index
    %c0_7 = arith.constant 0 : index
    %5 = vector.load %arg3[%c0_5, %c0_6, %c0_7] : memref<2x1x512xf32, #tpu.memory_space<vmem>>, vector<1x1x512xf32>
    %6 = vector.shape_cast %5 : vector<1x1x512xf32> to vector<1x512xf32>
    %7 = vector.broadcast %6 : vector<1x512xf32> to vector<64x512xf32>
    %8 = arith.addf %4, %7 : vector<64x512xf32>
    %9 = vector.shape_cast %8 : vector<64x512xf32> to vector<8x8x512xf32>
    %c0_8 = arith.constant 0 : index
    %c0_9 = arith.constant 0 : index
    %c0_10 = arith.constant 0 : index
    %10 = vector.load %arg12[%c0_8, %c0_9, %c0_10] : memref<8x8x512xf32, #tpu.memory_space<vmem>>, vector<8x8x512xf32>
    tpu.vector_store %arg12[%c0_8, %c0_9, %c0_10], %9 {strides = array<i32>} : memref<8x8x512xf32, #tpu.memory_space<vmem>>, vector<8x8x512xf32>,
    %c0_11 = arith.constant 0 : index
    %c0_12 = arith.constant 0 : index
    %c0_13 = arith.constant 0 : index
    %11 = vector.load %arg2[%c0_11, %c0_12, %c0_13] : memref<2x128x512xf32, #tpu.memory_space<vmem>>, vector<1x128x512xf32>
    %12 = vector.shape_cast %11 : vector<1x128x512xf32> to vector<128x512xf32>
    %c0_14 = arith.constant 0 : index
    %c0_15 = arith.constant 0 : index
    %c0_16 = arith.constant 0 : index
    %13 = vector.load %arg6[%c0_14, %c0_15, %c0_16] : memref<2x8x128xf32, #tpu.memory_space<vmem>>, vector<1x8x128xf32>
    %14 = vector.shape_cast %13 : vector<1x8x128xf32> to vector<8x128xf32>
    %c0_17 = arith.constant 0 : index
    %c0_18 = arith.constant 0 : index
    %c0_19 = arith.constant 0 : index
    %15 = vector.load %arg7[%c0_17, %c0_18, %c0_19] : memref<2x8x128xf32, #tpu.memory_space<vmem>>, vector<1x8x128xf32>
    %16 = vector.shape_cast %15 : vector<1x8x128xf32> to vector<8x128xf32>
    %c0_i32 = arith.constant 0 : i32
    %17 = arith.index_cast %c0_i32 : i32 to index
    %c0_20 = arith.constant 0 : index
    %c0_21 = arith.constant 0 : index
    %18 = vector.load %arg12[%17, %c0_20, %c0_21] : memref<8x8x512xf32, #tpu.memory_space<vmem>>, vector<1x8x512xf32>
    %19 = vector.shape_cast %18 : vector<1x8x512xf32> to vector<8x512xf32>
    %cst_22 = arith.constant dense<0.000000e+00> : vector<8x512xf32>
    %20 = tpu.matmul %14, %12, %cst_22 {dimension_numbers = #tpu.dot_dimension_numbers<[1], [0], [0], [1], [0, 0, 1, 1], [], []>} : vector<8x128xf32>, vector<128x512xf32>, vector<8x512xf32> -> vector<8x512xf32>
    %21 = arith.addf %19, %20 : vector<8x512xf32>
    %22 = vector.extract_strided_slice %21 {offsets = [0, 0], sizes = [8, 128], strides = [1, 1]} : vector<8x512xf32> to vector<8x128xf32>
    %23 = arith.negf %22 : vector<8x128xf32>
    %24 = math.exp %23 : vector<8x128xf32>
    %cst_23 = arith.constant 1.000000e+00 : f32
    %25 = vector.broadcast %cst_23 : f32 to vector<8x128xf32>
    %26 = arith.addf %25, %24 : vector<8x128xf32>
    %27 = arith.divf %25, %26 : vector<8x128xf32>
    %28 = vector.extract_strided_slice %21 {offsets = [0, 128], sizes = [8, 128], strides = [1, 1]} : vector<8x512xf32> to vector<8x128xf32>
    %29 = arith.negf %28 : vector<8x128xf32>
    %30 = math.exp %29 : vector<8x128xf32>
    %cst_24 = arith.constant 1.000000e+00 : f32
    %31 = vector.broadcast %cst_24 : f32 to vector<8x128xf32>
    %32 = arith.addf %31, %30 : vector<8x128xf32>
    %33 = arith.divf %31, %32 : vector<8x128xf32>
    %34 = vector.extract_strided_slice %21 {offsets = [0, 256], sizes = [8, 128], strides = [1, 1]} : vector<8x512xf32> to vector<8x128xf32>
    %35 = math.tanh %34 : vector<8x128xf32>
    %36 = vector.extract_strided_slice %21 {offsets = [0, 384], sizes = [8, 128], strides = [1, 1]} : vector<8x512xf32> to vector<8x128xf32>
    %37 = arith.negf %36 : vector<8x128xf32>
    %38 = math.exp %37 : vector<8x128xf32>
    %cst_25 = arith.constant 1.000000e+00 : f32
    %39 = vector.broadcast %cst_25 : f32 to vector<8x128xf32>
    %40 = arith.addf %39, %38 : vector<8x128xf32>
    %41 = arith.divf %39, %40 : vector<8x128xf32>
    %42 = arith.mulf %33, %16 : vector<8x128xf32>
    %43 = arith.mulf %27, %35 : vector<8x128xf32>
    %44 = arith.addf %42, %43 : vector<8x128xf32>
    %45 = math.tanh %44 : vector<8x128xf32>
    %46 = arith.mulf %41, %45 : vector<8x128xf32>
    %47 = arith.index_cast %c0_i32 : i32 to index
    %c0_26 = arith.constant 0 : index
    %c0_27 = arith.constant 0 : index
    %48 = vector.load %arg11[%47, %c0_26, %c0_27] : memref<8x8x128xf32, #tpu.memory_space<vmem>>, vector<1x8x128xf32>
    %49 = vector.shape_cast %48 : vector<1x8x128xf32> to vector<8x128xf32>
    %50 = vector.shape_cast %46 : vector<8x128xf32> to vector<1x8x128xf32>
    tpu.vector_store %arg11[%47, %c0_26, %c0_27], %50 {strides = array<i32>} : memref<8x8x128xf32, #tpu.memory_space<vmem>>, vector<1x8x128xf32>,
    %c1_i32 = arith.constant 1 : i32
    %51 = arith.index_cast %c1_i32 : i32 to index
    %c0_28 = arith.constant 0 : index
    %c0_29 = arith.constant 0 : index
    %52 = vector.load %arg12[%51, %c0_28, %c0_29] : memref<8x8x512xf32, #tpu.memory_space<vmem>>, vector<1x8x512xf32>
    %53 = vector.shape_cast %52 : vector<1x8x512xf32> to vector<8x512xf32>
    %cst_30 = arith.constant dense<0.000000e+00> : vector<8x512xf32>
    %54 = tpu.matmul %46, %12, %cst_30 {dimension_numbers = #tpu.dot_dimension_numbers<[1], [0], [0], [1], [0, 0, 1, 1], [], []>} : vector<8x128xf32>, vector<128x512xf32>, vector<8x512xf32> -> vector<8x512xf32>
    %55 = arith.addf %53, %54 : vector<8x512xf32>
    %56 = vector.extract_strided_slice %55 {offsets = [0, 0], sizes = [8, 128], strides = [1, 1]} : vector<8x512xf32> to vector<8x128xf32>
    %57 = arith.negf %56 : vector<8x128xf32>
    %58 = math.exp %57 : vector<8x128xf32>
    %cst_31 = arith.constant 1.000000e+00 : f32
    %59 = vector.broadcast %cst_31 : f32 to vector<8x128xf32>
    %60 = arith.addf %59, %58 : vector<8x128xf32>
    %61 = arith.divf %59, %60 : vector<8x128xf32>
    %62 = vector.extract_strided_slice %55 {offsets = [0, 128], sizes = [8, 128], strides = [1, 1]} : vector<8x512xf32> to vector<8x128xf32>
    %63 = arith.negf %62 : vector<8x128xf32>
    %64 = math.exp %63 : vector<8x128xf32>
    %cst_32 = arith.constant 1.000000e+00 : f32
    %65 = vector.broadcast %cst_32 : f32 to vector<8x128xf32>
    %66 = arith.addf %65, %64 : vector<8x128xf32>
    %67 = arith.divf %65, %66 : vector<8x128xf32>
    %68 = vector.extract_strided_slice %55 {offsets = [0, 256], sizes = [8, 128], strides = [1, 1]} : vector<8x512xf32> to vector<8x128xf32>
    %69 = math.tanh %68 : vector<8x128xf32>
    %70 = vector.extract_strided_slice %55 {offsets = [0, 384], sizes = [8, 128], strides = [1, 1]} : vector<8x512xf32> to vector<8x128xf32>
    %71 = arith.negf %70 : vector<8x128xf32>
    %72 = math.exp %71 : vector<8x128xf32>
    %cst_33 = arith.constant 1.000000e+00 : f32
    %73 = vector.broadcast %cst_33 : f32 to vector<8x128xf32>
    %74 = arith.addf %73, %72 : vector<8x128xf32>
    %75 = arith.divf %73, %74 : vector<8x128xf32>
    %76 = arith.mulf %67, %44 : vector<8x128xf32>
    %77 = arith.mulf %61, %69 : vector<8x128xf32>
    %78 = arith.addf %76, %77 : vector<8x128xf32>
    %79 = math.tanh %78 : vector<8x128xf32>
    %80 = arith.mulf %75, %79 : vector<8x128xf32>
    %81 = arith.index_cast %c1_i32 : i32 to index
    %c0_34 = arith.constant 0 : index
    %c0_35 = arith.constant 0 : index
    %82 = vector.load %arg11[%81, %c0_34, %c0_35] : memref<8x8x128xf32, #tpu.memory_space<vmem>>, vector<1x8x128xf32>
    %83 = vector.shape_cast %82 : vector<1x8x128xf32> to vector<8x128xf32>
    %84 = vector.shape_cast %80 : vector<8x128xf32> to vector<1x8x128xf32>
    tpu.vector_store %arg11[%81, %c0_34, %c0_35], %84 {strides = array<i32>} : memref<8x8x128xf32, #tpu.memory_space<vmem>>, vector<1x8x128xf32>,
    %c2_i32 = arith.constant 2 : i32
    %85 = arith.index_cast %c2_i32 : i32 to index
    %c0_36 = arith.constant 0 : index
    %c0_37 = arith.constant 0 : index
    %86 = vector.load %arg12[%85, %c0_36, %c0_37] : memref<8x8x512xf32, #tpu.memory_space<vmem>>, vector<1x8x512xf32>
    %87 = vector.shape_cast %86 : vector<1x8x512xf32> to vector<8x512xf32>
    %cst_38 = arith.constant dense<0.000000e+00> : vector<8x512xf32>
    %88 = tpu.matmul %80, %12, %cst_38 {dimension_numbers = #tpu.dot_dimension_numbers<[1], [0], [0], [1], [0, 0, 1, 1], [], []>} : vector<8x128xf32>, vector<128x512xf32>, vector<8x512xf32> -> vector<8x512xf32>
    %89 = arith.addf %87, %88 : vector<8x512xf32>
    %90 = vector.extract_strided_slice %89 {offsets = [0, 0], sizes = [8, 128], strides = [1, 1]} : vector<8x512xf32> to vector<8x128xf32>
    %91 = arith.negf %90 : vector<8x128xf32>
    %92 = math.exp %91 : vector<8x128xf32>
    %cst_39 = arith.constant 1.000000e+00 : f32
    %93 = vector.broadcast %cst_39 : f32 to vector<8x128xf32>
    %94 = arith.addf %93, %92 : vector<8x128xf32>
    %95 = arith.divf %93, %94 : vector<8x128xf32>
    %96 = vector.extract_strided_slice %89 {offsets = [0, 128], sizes = [8, 128], strides = [1, 1]} : vector<8x512xf32> to vector<8x128xf32>
    %97 = arith.negf %96 : vector<8x128xf32>
    %98 = math.exp %97 : vector<8x128xf32>
    %cst_40 = arith.constant 1.000000e+00 : f32
    %99 = vector.broadcast %cst_40 : f32 to vector<8x128xf32>
    %100 = arith.addf %99, %98 : vector<8x128xf32>
    %101 = arith.divf %99, %100 : vector<8x128xf32>
    %102 = vector.extract_strided_slice %89 {offsets = [0, 256], sizes = [8, 128], strides = [1, 1]} : vector<8x512xf32> to vector<8x128xf32>
    %103 = math.tanh %102 : vector<8x128xf32>
    %104 = vector.extract_strided_slice %89 {offsets = [0, 384], sizes = [8, 128], strides = [1, 1]} : vector<8x512xf32> to vector<8x128xf32>
    %105 = arith.negf %104 : vector<8x128xf32>
    %106 = math.exp %105 : vector<8x128xf32>
    %cst_41 = arith.constant 1.000000e+00 : f32
    %107 = vector.broadcast %cst_41 : f32 to vector<8x128xf32>
    %108 = arith.addf %107, %106 : vector<8x128xf32>
    %109 = arith.divf %107, %108 : vector<8x128xf32>
    %110 = arith.mulf %101, %78 : vector<8x128xf32>
    %111 = arith.mulf %95, %103 : vector<8x128xf32>
    %112 = arith.addf %110, %111 : vector<8x128xf32>
    %113 = math.tanh %112 : vector<8x128xf32>
    %114 = arith.mulf %109, %113 : vector<8x128xf32>
    %115 = arith.index_cast %c2_i32 : i32 to index
    %c0_42 = arith.constant 0 : index
    %c0_43 = arith.constant 0 : index
    %116 = vector.load %arg11[%115, %c0_42, %c0_43] : memref<8x8x128xf32, #tpu.memory_space<vmem>>, vector<1x8x128xf32>
    %117 = vector.shape_cast %116 : vector<1x8x128xf32> to vector<8x128xf32>
    %118 = vector.shape_cast %114 : vector<8x128xf32> to vector<1x8x128xf32>
    tpu.vector_store %arg11[%115, %c0_42, %c0_43], %118 {strides = array<i32>} : memref<8x8x128xf32, #tpu.memory_space<vmem>>, vector<1x8x128xf32>,
    %c3_i32 = arith.constant 3 : i32
    %119 = arith.index_cast %c3_i32 : i32 to index
    %c0_44 = arith.constant 0 : index
    %c0_45 = arith.constant 0 : index
    %120 = vector.load %arg12[%119, %c0_44, %c0_45] : memref<8x8x512xf32, #tpu.memory_space<vmem>>, vector<1x8x512xf32>
    %121 = vector.shape_cast %120 : vector<1x8x512xf32> to vector<8x512xf32>
    %cst_46 = arith.constant dense<0.000000e+00> : vector<8x512xf32>
    %122 = tpu.matmul %114, %12, %cst_46 {dimension_numbers = #tpu.dot_dimension_numbers<[1], [0], [0], [1], [0, 0, 1, 1], [], []>} : vector<8x128xf32>, vector<128x512xf32>, vector<8x512xf32> -> vector<8x512xf32>
    %123 = arith.addf %121, %122 : vector<8x512xf32>
    %124 = vector.extract_strided_slice %123 {offsets = [0, 0], sizes = [8, 128], strides = [1, 1]} : vector<8x512xf32> to vector<8x128xf32>
    %125 = arith.negf %124 : vector<8x128xf32>
    %126 = math.exp %125 : vector<8x128xf32>
    %cst_47 = arith.constant 1.000000e+00 : f32
    %127 = vector.broadcast %cst_47 : f32 to vector<8x128xf32>
    %128 = arith.addf %127, %126 : vector<8x128xf32>
    %129 = arith.divf %127, %128 : vector<8x128xf32>
    %130 = vector.extract_strided_slice %123 {offsets = [0, 128], sizes = [8, 128], strides = [1, 1]} : vector<8x512xf32> to vector<8x128xf32>
    %131 = arith.negf %130 : vector<8x128xf32>
    %132 = math.exp %131 : vector<8x128xf32>
    %cst_48 = arith.constant 1.000000e+00 : f32
    %133 = vector.broadcast %cst_48 : f32 to vector<8x128xf32>
    %134 = arith.addf %133, %132 : vector<8x128xf32>
    %135 = arith.divf %133, %134 : vector<8x128xf32>
    %136 = vector.extract_strided_slice %123 {offsets = [0, 256], sizes = [8, 128], strides = [1, 1]} : vector<8x512xf32> to vector<8x128xf32>
    %137 = math.tanh %136 : vector<8x128xf32>
    %138 = vector.extract_strided_slice %123 {offsets = [0, 384], sizes = [8, 128], strides = [1, 1]} : vector<8x512xf32> to vector<8x128xf32>
    %139 = arith.negf %138 : vector<8x128xf32>
    %140 = math.exp %139 : vector<8x128xf32>
    %cst_49 = arith.constant 1.000000e+00 : f32
    %141 = vector.broadcast %cst_49 : f32 to vector<8x128xf32>
    %142 = arith.addf %141, %140 : vector<8x128xf32>
    %143 = arith.divf %141, %142 : vector<8x128xf32>
    %144 = arith.mulf %135, %112 : vector<8x128xf32>
    %145 = arith.mulf %129, %137 : vector<8x128xf32>
    %146 = arith.addf %144, %145 : vector<8x128xf32>
    %147 = math.tanh %146 : vector<8x128xf32>
    %148 = arith.mulf %143, %147 : vector<8x128xf32>
    %149 = arith.index_cast %c3_i32 : i32 to index
    %c0_50 = arith.constant 0 : index
    %c0_51 = arith.constant 0 : index
    %150 = vector.load %arg11[%149, %c0_50, %c0_51] : memref<8x8x128xf32, #tpu.memory_space<vmem>>, vector<1x8x128xf32>
    %151 = vector.shape_cast %150 : vector<1x8x128xf32> to vector<8x128xf32>
    %152 = vector.shape_cast %148 : vector<8x128xf32> to vector<1x8x128xf32>
    tpu.vector_store %arg11[%149, %c0_50, %c0_51], %152 {strides = array<i32>} : memref<8x8x128xf32, #tpu.memory_space<vmem>>, vector<1x8x128xf32>,
    %c4_i32 = arith.constant 4 : i32
    %153 = arith.index_cast %c4_i32 : i32 to index
    %c0_52 = arith.constant 0 : index
    %c0_53 = arith.constant 0 : index
    %154 = vector.load %arg12[%153, %c0_52, %c0_53] : memref<8x8x512xf32, #tpu.memory_space<vmem>>, vector<1x8x512xf32>
    %155 = vector.shape_cast %154 : vector<1x8x512xf32> to vector<8x512xf32>
    %cst_54 = arith.constant dense<0.000000e+00> : vector<8x512xf32>
    %156 = tpu.matmul %148, %12, %cst_54 {dimension_numbers = #tpu.dot_dimension_numbers<[1], [0], [0], [1], [0, 0, 1, 1], [], []>} : vector<8x128xf32>, vector<128x512xf32>, vector<8x512xf32> -> vector<8x512xf32>
    %157 = arith.addf %155, %156 : vector<8x512xf32>
    %158 = vector.extract_strided_slice %157 {offsets = [0, 0], sizes = [8, 128], strides = [1, 1]} : vector<8x512xf32> to vector<8x128xf32>
    %159 = arith.negf %158 : vector<8x128xf32>
    %160 = math.exp %159 : vector<8x128xf32>
    %cst_55 = arith.constant 1.000000e+00 : f32
    %161 = vector.broadcast %cst_55 : f32 to vector<8x128xf32>
    %162 = arith.addf %161, %160 : vector<8x128xf32>
    %163 = arith.divf %161, %162 : vector<8x128xf32>
    %164 = vector.extract_strided_slice %157 {offsets = [0, 128], sizes = [8, 128], strides = [1, 1]} : vector<8x512xf32> to vector<8x128xf32>
    %165 = arith.negf %164 : vector<8x128xf32>
    %166 = math.exp %165 : vector<8x128xf32>
    %cst_56 = arith.constant 1.000000e+00 : f32
    %167 = vector.broadcast %cst_56 : f32 to vector<8x128xf32>
    %168 = arith.addf %167, %166 : vector<8x128xf32>
    %169 = arith.divf %167, %168 : vector<8x128xf32>
    %170 = vector.extract_strided_slice %157 {offsets = [0, 256], sizes = [8, 128], strides = [1, 1]} : vector<8x512xf32> to vector<8x128xf32>
    %171 = math.tanh %170 : vector<8x128xf32>
    %172 = vector.extract_strided_slice %157 {offsets = [0, 384], sizes = [8, 128], strides = [1, 1]} : vector<8x512xf32> to vector<8x128xf32>
    %173 = arith.negf %172 : vector<8x128xf32>
    %174 = math.exp %173 : vector<8x128xf32>
    %cst_57 = arith.constant 1.000000e+00 : f32
    %175 = vector.broadcast %cst_57 : f32 to vector<8x128xf32>
    %176 = arith.addf %175, %174 : vector<8x128xf32>
    %177 = arith.divf %175, %176 : vector<8x128xf32>
    %178 = arith.mulf %169, %146 : vector<8x128xf32>
    %179 = arith.mulf %163, %171 : vector<8x128xf32>
    %180 = arith.addf %178, %179 : vector<8x128xf32>
    %181 = math.tanh %180 : vector<8x128xf32>
    %182 = arith.mulf %177, %181 : vector<8x128xf32>
    %183 = arith.index_cast %c4_i32 : i32 to index
    %c0_58 = arith.constant 0 : index
    %c0_59 = arith.constant 0 : index
    %184 = vector.load %arg11[%183, %c0_58, %c0_59] : memref<8x8x128xf32, #tpu.memory_space<vmem>>, vector<1x8x128xf32>
    %185 = vector.shape_cast %184 : vector<1x8x128xf32> to vector<8x128xf32>
    %186 = vector.shape_cast %182 : vector<8x128xf32> to vector<1x8x128xf32>
    tpu.vector_store %arg11[%183, %c0_58, %c0_59], %186 {strides = array<i32>} : memref<8x8x128xf32, #tpu.memory_space<vmem>>, vector<1x8x128xf32>,
    %c5_i32 = arith.constant 5 : i32
    %187 = arith.index_cast %c5_i32 : i32 to index
    %c0_60 = arith.constant 0 : index
    %c0_61 = arith.constant 0 : index
    %188 = vector.load %arg12[%187, %c0_60, %c0_61] : memref<8x8x512xf32, #tpu.memory_space<vmem>>, vector<1x8x512xf32>
    %189 = vector.shape_cast %188 : vector<1x8x512xf32> to vector<8x512xf32>
    %cst_62 = arith.constant dense<0.000000e+00> : vector<8x512xf32>
    %190 = tpu.matmul %182, %12, %cst_62 {dimension_numbers = #tpu.dot_dimension_numbers<[1], [0], [0], [1], [0, 0, 1, 1], [], []>} : vector<8x128xf32>, vector<128x512xf32>, vector<8x512xf32> -> vector<8x512xf32>
    %191 = arith.addf %189, %190 : vector<8x512xf32>
    %192 = vector.extract_strided_slice %191 {offsets = [0, 0], sizes = [8, 128], strides = [1, 1]} : vector<8x512xf32> to vector<8x128xf32>
    %193 = arith.negf %192 : vector<8x128xf32>
    %194 = math.exp %193 : vector<8x128xf32>
    %cst_63 = arith.constant 1.000000e+00 : f32
    %195 = vector.broadcast %cst_63 : f32 to vector<8x128xf32>
    %196 = arith.addf %195, %194 : vector<8x128xf32>
    %197 = arith.divf %195, %196 : vector<8x128xf32>
    %198 = vector.extract_strided_slice %191 {offsets = [0, 128], sizes = [8, 128], strides = [1, 1]} : vector<8x512xf32> to vector<8x128xf32>
    %199 = arith.negf %198 : vector<8x128xf32>
    %200 = math.exp %199 : vector<8x128xf32>
    %cst_64 = arith.constant 1.000000e+00 : f32
    %201 = vector.broadcast %cst_64 : f32 to vector<8x128xf32>
    %202 = arith.addf %201, %200 : vector<8x128xf32>
    %203 = arith.divf %201, %202 : vector<8x128xf32>
    %204 = vector.extract_strided_slice %191 {offsets = [0, 256], sizes = [8, 128], strides = [1, 1]} : vector<8x512xf32> to vector<8x128xf32>
    %205 = math.tanh %204 : vector<8x128xf32>
    %206 = vector.extract_strided_slice %191 {offsets = [0, 384], sizes = [8, 128], strides = [1, 1]} : vector<8x512xf32> to vector<8x128xf32>
    %207 = arith.negf %206 : vector<8x128xf32>
    %208 = math.exp %207 : vector<8x128xf32>
    %cst_65 = arith.constant 1.000000e+00 : f32
    %209 = vector.broadcast %cst_65 : f32 to vector<8x128xf32>
    %210 = arith.addf %209, %208 : vector<8x128xf32>
    %211 = arith.divf %209, %210 : vector<8x128xf32>
    %212 = arith.mulf %203, %180 : vector<8x128xf32>
    %213 = arith.mulf %197, %205 : vector<8x128xf32>
    %214 = arith.addf %212, %213 : vector<8x128xf32>
    %215 = math.tanh %214 : vector<8x128xf32>
    %216 = arith.mulf %211, %215 : vector<8x128xf32>
    %217 = arith.index_cast %c5_i32 : i32 to index
    %c0_66 = arith.constant 0 : index
    %c0_67 = arith.constant 0 : index
    %218 = vector.load %arg11[%217, %c0_66, %c0_67] : memref<8x8x128xf32, #tpu.memory_space<vmem>>, vector<1x8x128xf32>
    %219 = vector.shape_cast %218 : vector<1x8x128xf32> to vector<8x128xf32>
    %220 = vector.shape_cast %216 : vector<8x128xf32> to vector<1x8x128xf32>
    tpu.vector_store %arg11[%217, %c0_66, %c0_67], %220 {strides = array<i32>} : memref<8x8x128xf32, #tpu.memory_space<vmem>>, vector<1x8x128xf32>,
    %c6_i32 = arith.constant 6 : i32
    %221 = arith.index_cast %c6_i32 : i32 to index
    %c0_68 = arith.constant 0 : index
    %c0_69 = arith.constant 0 : index
    %222 = vector.load %arg12[%221, %c0_68, %c0_69] : memref<8x8x512xf32, #tpu.memory_space<vmem>>, vector<1x8x512xf32>
    %223 = vector.shape_cast %222 : vector<1x8x512xf32> to vector<8x512xf32>
    %cst_70 = arith.constant dense<0.000000e+00> : vector<8x512xf32>
    %224 = tpu.matmul %216, %12, %cst_70 {dimension_numbers = #tpu.dot_dimension_numbers<[1], [0], [0], [1], [0, 0, 1, 1], [], []>} : vector<8x128xf32>, vector<128x512xf32>, vector<8x512xf32> -> vector<8x512xf32>
    %225 = arith.addf %223, %224 : vector<8x512xf32>
    %226 = vector.extract_strided_slice %225 {offsets = [0, 0], sizes = [8, 128], strides = [1, 1]} : vector<8x512xf32> to vector<8x128xf32>
    %227 = arith.negf %226 : vector<8x128xf32>
    %228 = math.exp %227 : vector<8x128xf32>
    %cst_71 = arith.constant 1.000000e+00 : f32
    %229 = vector.broadcast %cst_71 : f32 to vector<8x128xf32>
    %230 = arith.addf %229, %228 : vector<8x128xf32>
    %231 = arith.divf %229, %230 : vector<8x128xf32>
    %232 = vector.extract_strided_slice %225 {offsets = [0, 128], sizes = [8, 128], strides = [1, 1]} : vector<8x512xf32> to vector<8x128xf32>
    %233 = arith.negf %232 : vector<8x128xf32>
    %234 = math.exp %233 : vector<8x128xf32>
    %cst_72 = arith.constant 1.000000e+00 : f32
    %235 = vector.broadcast %cst_72 : f32 to vector<8x128xf32>
    %236 = arith.addf %235, %234 : vector<8x128xf32>
    %237 = arith.divf %235, %236 : vector<8x128xf32>
    %238 = vector.extract_strided_slice %225 {offsets = [0, 256], sizes = [8, 128], strides = [1, 1]} : vector<8x512xf32> to vector<8x128xf32>
    %239 = math.tanh %238 : vector<8x128xf32>
    %240 = vector.extract_strided_slice %225 {offsets = [0, 384], sizes = [8, 128], strides = [1, 1]} : vector<8x512xf32> to vector<8x128xf32>
    %241 = arith.negf %240 : vector<8x128xf32>
    %242 = math.exp %241 : vector<8x128xf32>
    %cst_73 = arith.constant 1.000000e+00 : f32
    %243 = vector.broadcast %cst_73 : f32 to vector<8x128xf32>
    %244 = arith.addf %243, %242 : vector<8x128xf32>
    %245 = arith.divf %243, %244 : vector<8x128xf32>
    %246 = arith.mulf %237, %214 : vector<8x128xf32>
    %247 = arith.mulf %231, %239 : vector<8x128xf32>
    %248 = arith.addf %246, %247 : vector<8x128xf32>
    %249 = math.tanh %248 : vector<8x128xf32>
    %250 = arith.mulf %245, %249 : vector<8x128xf32>
    %251 = arith.index_cast %c6_i32 : i32 to index
    %c0_74 = arith.constant 0 : index
    %c0_75 = arith.constant 0 : index
    %252 = vector.load %arg11[%251, %c0_74, %c0_75] : memref<8x8x128xf32, #tpu.memory_space<vmem>>, vector<1x8x128xf32>
    %253 = vector.shape_cast %252 : vector<1x8x128xf32> to vector<8x128xf32>
    %254 = vector.shape_cast %250 : vector<8x128xf32> to vector<1x8x128xf32>
    tpu.vector_store %arg11[%251, %c0_74, %c0_75], %254 {strides = array<i32>} : memref<8x8x128xf32, #tpu.memory_space<vmem>>, vector<1x8x128xf32>,
    %c7_i32 = arith.constant 7 : i32
    %255 = arith.index_cast %c7_i32 : i32 to index
    %c0_76 = arith.constant 0 : index
    %c0_77 = arith.constant 0 : index
    %256 = vector.load %arg12[%255, %c0_76, %c0_77] : memref<8x8x512xf32, #tpu.memory_space<vmem>>, vector<1x8x512xf32>
    %257 = vector.shape_cast %256 : vector<1x8x512xf32> to vector<8x512xf32>
    %cst_78 = arith.constant dense<0.000000e+00> : vector<8x512xf32>
    %258 = tpu.matmul %250, %12, %cst_78 {dimension_numbers = #tpu.dot_dimension_numbers<[1], [0], [0], [1], [0, 0, 1, 1], [], []>} : vector<8x128xf32>, vector<128x512xf32>, vector<8x512xf32> -> vector<8x512xf32>
    %259 = arith.addf %257, %258 : vector<8x512xf32>
    %260 = vector.extract_strided_slice %259 {offsets = [0, 0], sizes = [8, 128], strides = [1, 1]} : vector<8x512xf32> to vector<8x128xf32>
    %261 = arith.negf %260 : vector<8x128xf32>
    %262 = math.exp %261 : vector<8x128xf32>
    %cst_79 = arith.constant 1.000000e+00 : f32
    %263 = vector.broadcast %cst_79 : f32 to vector<8x128xf32>
    %264 = arith.addf %263, %262 : vector<8x128xf32>
    %265 = arith.divf %263, %264 : vector<8x128xf32>
    %266 = vector.extract_strided_slice %259 {offsets = [0, 128], sizes = [8, 128], strides = [1, 1]} : vector<8x512xf32> to vector<8x128xf32>
    %267 = arith.negf %266 : vector<8x128xf32>
    %268 = math.exp %267 : vector<8x128xf32>
    %cst_80 = arith.constant 1.000000e+00 : f32
    %269 = vector.broadcast %cst_80 : f32 to vector<8x128xf32>
    %270 = arith.addf %269, %268 : vector<8x128xf32>
    %271 = arith.divf %269, %270 : vector<8x128xf32>
    %272 = vector.extract_strided_slice %259 {offsets = [0, 256], sizes = [8, 128], strides = [1, 1]} : vector<8x512xf32> to vector<8x128xf32>
    %273 = math.tanh %272 : vector<8x128xf32>
    %274 = vector.extract_strided_slice %259 {offsets = [0, 384], sizes = [8, 128], strides = [1, 1]} : vector<8x512xf32> to vector<8x128xf32>
    %275 = arith.negf %274 : vector<8x128xf32>
    %276 = math.exp %275 : vector<8x128xf32>
    %cst_81 = arith.constant 1.000000e+00 : f32
    %277 = vector.broadcast %cst_81 : f32 to vector<8x128xf32>
    %278 = arith.addf %277, %276 : vector<8x128xf32>
    %279 = arith.divf %277, %278 : vector<8x128xf32>
    %280 = arith.mulf %271, %248 : vector<8x128xf32>
    %281 = arith.mulf %265, %273 : vector<8x128xf32>
    %282 = arith.addf %280, %281 : vector<8x128xf32>
    %283 = math.tanh %282 : vector<8x128xf32>
    %284 = arith.mulf %279, %283 : vector<8x128xf32>
    %285 = arith.index_cast %c7_i32 : i32 to index
    %c0_82 = arith.constant 0 : index
    %c0_83 = arith.constant 0 : index
    %286 = vector.load %arg11[%285, %c0_82, %c0_83] : memref<8x8x128xf32, #tpu.memory_space<vmem>>, vector<1x8x128xf32>
    %287 = vector.shape_cast %286 : vector<1x8x128xf32> to vector<8x128xf32>
    %288 = vector.shape_cast %284 : vector<8x128xf32> to vector<1x8x128xf32>
    tpu.vector_store %arg11[%285, %c0_82, %c0_83], %288 {strides = array<i32>} : memref<8x8x128xf32, #tpu.memory_space<vmem>>, vector<1x8x128xf32>,
    %c8_i32 = arith.constant 8 : i32
    %c0_84 = arith.constant 0 : index
    %c0_85 = arith.constant 0 : index
    %c0_86 = arith.constant 0 : index
    %289 = vector.load %arg9[%c0_84, %c0_85, %c0_86] : memref<2x8x128xf32, #tpu.memory_space<vmem>>, vector<1x8x128xf32>
    %290 = vector.shape_cast %289 : vector<1x8x128xf32> to vector<8x128xf32>
    %291 = vector.shape_cast %284 : vector<8x128xf32> to vector<1x8x128xf32>
    tpu.vector_store %arg9[%c0_84, %c0_85, %c0_86], %291 {strides = array<i32>} : memref<2x8x128xf32, #tpu.memory_space<vmem>>, vector<1x8x128xf32>,
    %c0_87 = arith.constant 0 : index
    %c0_88 = arith.constant 0 : index
    %c0_89 = arith.constant 0 : index
    %292 = vector.load %arg10[%c0_87, %c0_88, %c0_89] : memref<2x8x128xf32, #tpu.memory_space<vmem>>, vector<1x8x128xf32>
    %293 = vector.shape_cast %292 : vector<1x8x128xf32> to vector<8x128xf32>
    %294 = vector.shape_cast %282 : vector<8x128xf32> to vector<1x8x128xf32>
    tpu.vector_store %arg10[%c0_87, %c0_88, %c0_89], %294 {strides = array<i32>} : memref<2x8x128xf32, #tpu.memory_space<vmem>>, vector<1x8x128xf32>,
    %c0_90 = arith.constant 0 : index
    %c0_91 = arith.constant 0 : index
    %c0_92 = arith.constant 0 : index
    %295 = vector.load %arg11[%c0_90, %c0_91, %c0_92] : memref<8x8x128xf32, #tpu.memory_space<vmem>>, vector<8x8x128xf32>
    %296 = vector.shape_cast %295 : vector<8x8x128xf32> to vector<64x128xf32>
    %c1 = arith.constant 1 : index
    %c0_93 = arith.constant 0 : index
    %c0_94 = arith.constant 0 : index
    %297 = vector.load %arg1[%c1, %c0_93, %c0_94] : memref<2x128x512xf32, #tpu.memory_space<vmem>>, vector<1x128x512xf32>
    %298 = vector.shape_cast %297 : vector<1x128x512xf32> to vector<128x512xf32>
    %cst_95 = arith.constant dense<0.000000e+00> : vector<64x512xf32>
    %299 = tpu.matmul %296, %298, %cst_95 {dimension_numbers = #tpu.dot_dimension_numbers<[1], [0], [0], [1], [0, 0, 1, 1], [], []>} : vector<64x128xf32>, vector<128x512xf32>, vector<64x512xf32> -> vector<64x512xf32>
    %c1_96 = arith.constant 1 : index
    %c0_97 = arith.constant 0 : index
    %c0_98 = arith.constant 0 : index
    %300 = vector.load %arg3[%c1_96, %c0_97, %c0_98] : memref<2x1x512xf32, #tpu.memory_space<vmem>>, vector<1x1x512xf32>
    %301 = vector.shape_cast %300 : vector<1x1x512xf32> to vector<1x512xf32>
    %302 = vector.broadcast %301 : vector<1x512xf32> to vector<64x512xf32>
    %303 = arith.addf %299, %302 : vector<64x512xf32>
    %304 = vector.shape_cast %303 : vector<64x512xf32> to vector<8x8x512xf32>
    %c0_99 = arith.constant 0 : index
    %c0_100 = arith.constant 0 : index
    %c0_101 = arith.constant 0 : index
    %305 = vector.load %arg12[%c0_99, %c0_100, %c0_101] : memref<8x8x512xf32, #tpu.memory_space<vmem>>, vector<8x8x512xf32>
    tpu.vector_store %arg12[%c0_99, %c0_100, %c0_101], %304 {strides = array<i32>} : memref<8x8x512xf32, #tpu.memory_space<vmem>>, vector<8x8x512xf32>,
    %c1_102 = arith.constant 1 : index
    %c0_103 = arith.constant 0 : index
    %c0_104 = arith.constant 0 : index
    %306 = vector.load %arg2[%c1_102, %c0_103, %c0_104] : memref<2x128x512xf32, #tpu.memory_space<vmem>>, vector<1x128x512xf32>
    %307 = vector.shape_cast %306 : vector<1x128x512xf32> to vector<128x512xf32>
    %c1_105 = arith.constant 1 : index
    %c0_106 = arith.constant 0 : index
    %c0_107 = arith.constant 0 : index
    %308 = vector.load %arg6[%c1_105, %c0_106, %c0_107] : memref<2x8x128xf32, #tpu.memory_space<vmem>>, vector<1x8x128xf32>
    %309 = vector.shape_cast %308 : vector<1x8x128xf32> to vector<8x128xf32>
    %c1_108 = arith.constant 1 : index
    %c0_109 = arith.constant 0 : index
    %c0_110 = arith.constant 0 : index
    %310 = vector.load %arg7[%c1_108, %c0_109, %c0_110] : memref<2x8x128xf32, #tpu.memory_space<vmem>>, vector<1x8x128xf32>
    %311 = vector.shape_cast %310 : vector<1x8x128xf32> to vector<8x128xf32>
    %c0_i32_111 = arith.constant 0 : i32
    %312 = arith.index_cast %c0_i32_111 : i32 to index
    %c0_112 = arith.constant 0 : index
    %c0_113 = arith.constant 0 : index
    %313 = vector.load %arg12[%312, %c0_112, %c0_113] : memref<8x8x512xf32, #tpu.memory_space<vmem>>, vector<1x8x512xf32>
    %314 = vector.shape_cast %313 : vector<1x8x512xf32> to vector<8x512xf32>
    %cst_114 = arith.constant dense<0.000000e+00> : vector<8x512xf32>
    %315 = tpu.matmul %309, %307, %cst_114 {dimension_numbers = #tpu.dot_dimension_numbers<[1], [0], [0], [1], [0, 0, 1, 1], [], []>} : vector<8x128xf32>, vector<128x512xf32>, vector<8x512xf32> -> vector<8x512xf32>
    %316 = arith.addf %314, %315 : vector<8x512xf32>
    %317 = vector.extract_strided_slice %316 {offsets = [0, 0], sizes = [8, 128], strides = [1, 1]} : vector<8x512xf32> to vector<8x128xf32>
    %318 = arith.negf %317 : vector<8x128xf32>
    %319 = math.exp %318 : vector<8x128xf32>
    %cst_115 = arith.constant 1.000000e+00 : f32
    %320 = vector.broadcast %cst_115 : f32 to vector<8x128xf32>
    %321 = arith.addf %320, %319 : vector<8x128xf32>
    %322 = arith.divf %320, %321 : vector<8x128xf32>
    %323 = vector.extract_strided_slice %316 {offsets = [0, 128], sizes = [8, 128], strides = [1, 1]} : vector<8x512xf32> to vector<8x128xf32>
    %324 = arith.negf %323 : vector<8x128xf32>
    %325 = math.exp %324 : vector<8x128xf32>
    %cst_116 = arith.constant 1.000000e+00 : f32
    %326 = vector.broadcast %cst_116 : f32 to vector<8x128xf32>
    %327 = arith.addf %326, %325 : vector<8x128xf32>
    %328 = arith.divf %326, %327 : vector<8x128xf32>
    %329 = vector.extract_strided_slice %316 {offsets = [0, 256], sizes = [8, 128], strides = [1, 1]} : vector<8x512xf32> to vector<8x128xf32>
    %330 = math.tanh %329 : vector<8x128xf32>
    %331 = vector.extract_strided_slice %316 {offsets = [0, 384], sizes = [8, 128], strides = [1, 1]} : vector<8x512xf32> to vector<8x128xf32>
    %332 = arith.negf %331 : vector<8x128xf32>
    %333 = math.exp %332 : vector<8x128xf32>
    %cst_117 = arith.constant 1.000000e+00 : f32
    %334 = vector.broadcast %cst_117 : f32 to vector<8x128xf32>
    %335 = arith.addf %334, %333 : vector<8x128xf32>
    %336 = arith.divf %334, %335 : vector<8x128xf32>
    %337 = arith.mulf %328, %311 : vector<8x128xf32>
    %338 = arith.mulf %322, %330 : vector<8x128xf32>
    %339 = arith.addf %337, %338 : vector<8x128xf32>
    %340 = math.tanh %339 : vector<8x128xf32>
    %341 = arith.mulf %336, %340 : vector<8x128xf32>
    %342 = arith.index_cast %c0_i32_111 : i32 to index
    %c0_118 = arith.constant 0 : index
    %c0_119 = arith.constant 0 : index
    %343 = vector.load %arg11[%342, %c0_118, %c0_119] : memref<8x8x128xf32, #tpu.memory_space<vmem>>, vector<1x8x128xf32>
    %344 = vector.shape_cast %343 : vector<1x8x128xf32> to vector<8x128xf32>
    %345 = vector.shape_cast %341 : vector<8x128xf32> to vector<1x8x128xf32>
    tpu.vector_store %arg11[%342, %c0_118, %c0_119], %345 {strides = array<i32>} : memref<8x8x128xf32, #tpu.memory_space<vmem>>, vector<1x8x128xf32>,
    %c1_i32_120 = arith.constant 1 : i32
    %346 = arith.index_cast %c1_i32_120 : i32 to index
    %c0_121 = arith.constant 0 : index
    %c0_122 = arith.constant 0 : index
    %347 = vector.load %arg12[%346, %c0_121, %c0_122] : memref<8x8x512xf32, #tpu.memory_space<vmem>>, vector<1x8x512xf32>
    %348 = vector.shape_cast %347 : vector<1x8x512xf32> to vector<8x512xf32>
    %cst_123 = arith.constant dense<0.000000e+00> : vector<8x512xf32>
    %349 = tpu.matmul %341, %307, %cst_123 {dimension_numbers = #tpu.dot_dimension_numbers<[1], [0], [0], [1], [0, 0, 1, 1], [], []>} : vector<8x128xf32>, vector<128x512xf32>, vector<8x512xf32> -> vector<8x512xf32>
    %350 = arith.addf %348, %349 : vector<8x512xf32>
    %351 = vector.extract_strided_slice %350 {offsets = [0, 0], sizes = [8, 128], strides = [1, 1]} : vector<8x512xf32> to vector<8x128xf32>
    %352 = arith.negf %351 : vector<8x128xf32>
    %353 = math.exp %352 : vector<8x128xf32>
    %cst_124 = arith.constant 1.000000e+00 : f32
    %354 = vector.broadcast %cst_124 : f32 to vector<8x128xf32>
    %355 = arith.addf %354, %353 : vector<8x128xf32>
    %356 = arith.divf %354, %355 : vector<8x128xf32>
    %357 = vector.extract_strided_slice %350 {offsets = [0, 128], sizes = [8, 128], strides = [1, 1]} : vector<8x512xf32> to vector<8x128xf32>
    %358 = arith.negf %357 : vector<8x128xf32>
    %359 = math.exp %358 : vector<8x128xf32>
    %cst_125 = arith.constant 1.000000e+00 : f32
    %360 = vector.broadcast %cst_125 : f32 to vector<8x128xf32>
    %361 = arith.addf %360, %359 : vector<8x128xf32>
    %362 = arith.divf %360, %361 : vector<8x128xf32>
    %363 = vector.extract_strided_slice %350 {offsets = [0, 256], sizes = [8, 128], strides = [1, 1]} : vector<8x512xf32> to vector<8x128xf32>
    %364 = math.tanh %363 : vector<8x128xf32>
    %365 = vector.extract_strided_slice %350 {offsets = [0, 384], sizes = [8, 128], strides = [1, 1]} : vector<8x512xf32> to vector<8x128xf32>
    %366 = arith.negf %365 : vector<8x128xf32>
    %367 = math.exp %366 : vector<8x128xf32>
    %cst_126 = arith.constant 1.000000e+00 : f32
    %368 = vector.broadcast %cst_126 : f32 to vector<8x128xf32>
    %369 = arith.addf %368, %367 : vector<8x128xf32>
    %370 = arith.divf %368, %369 : vector<8x128xf32>
    %371 = arith.mulf %362, %339 : vector<8x128xf32>
    %372 = arith.mulf %356, %364 : vector<8x128xf32>
    %373 = arith.addf %371, %372 : vector<8x128xf32>
    %374 = math.tanh %373 : vector<8x128xf32>
    %375 = arith.mulf %370, %374 : vector<8x128xf32>
    %376 = arith.index_cast %c1_i32_120 : i32 to index
    %c0_127 = arith.constant 0 : index
    %c0_128 = arith.constant 0 : index
    %377 = vector.load %arg11[%376, %c0_127, %c0_128] : memref<8x8x128xf32, #tpu.memory_space<vmem>>, vector<1x8x128xf32>
    %378 = vector.shape_cast %377 : vector<1x8x128xf32> to vector<8x128xf32>
    %379 = vector.shape_cast %375 : vector<8x128xf32> to vector<1x8x128xf32>
    tpu.vector_store %arg11[%376, %c0_127, %c0_128], %379 {strides = array<i32>} : memref<8x8x128xf32, #tpu.memory_space<vmem>>, vector<1x8x128xf32>,
    %c2_i32_129 = arith.constant 2 : i32
    %380 = arith.index_cast %c2_i32_129 : i32 to index
    %c0_130 = arith.constant 0 : index
    %c0_131 = arith.constant 0 : index
    %381 = vector.load %arg12[%380, %c0_130, %c0_131] : memref<8x8x512xf32, #tpu.memory_space<vmem>>, vector<1x8x512xf32>
    %382 = vector.shape_cast %381 : vector<1x8x512xf32> to vector<8x512xf32>
    %cst_132 = arith.constant dense<0.000000e+00> : vector<8x512xf32>
    %383 = tpu.matmul %375, %307, %cst_132 {dimension_numbers = #tpu.dot_dimension_numbers<[1], [0], [0], [1], [0, 0, 1, 1], [], []>} : vector<8x128xf32>, vector<128x512xf32>, vector<8x512xf32> -> vector<8x512xf32>
    %384 = arith.addf %382, %383 : vector<8x512xf32>
    %385 = vector.extract_strided_slice %384 {offsets = [0, 0], sizes = [8, 128], strides = [1, 1]} : vector<8x512xf32> to vector<8x128xf32>
    %386 = arith.negf %385 : vector<8x128xf32>
    %387 = math.exp %386 : vector<8x128xf32>
    %cst_133 = arith.constant 1.000000e+00 : f32
    %388 = vector.broadcast %cst_133 : f32 to vector<8x128xf32>
    %389 = arith.addf %388, %387 : vector<8x128xf32>
    %390 = arith.divf %388, %389 : vector<8x128xf32>
    %391 = vector.extract_strided_slice %384 {offsets = [0, 128], sizes = [8, 128], strides = [1, 1]} : vector<8x512xf32> to vector<8x128xf32>
    %392 = arith.negf %391 : vector<8x128xf32>
    %393 = math.exp %392 : vector<8x128xf32>
    %cst_134 = arith.constant 1.000000e+00 : f32
    %394 = vector.broadcast %cst_134 : f32 to vector<8x128xf32>
    %395 = arith.addf %394, %393 : vector<8x128xf32>
    %396 = arith.divf %394, %395 : vector<8x128xf32>
    %397 = vector.extract_strided_slice %384 {offsets = [0, 256], sizes = [8, 128], strides = [1, 1]} : vector<8x512xf32> to vector<8x128xf32>
    %398 = math.tanh %397 : vector<8x128xf32>
    %399 = vector.extract_strided_slice %384 {offsets = [0, 384], sizes = [8, 128], strides = [1, 1]} : vector<8x512xf32> to vector<8x128xf32>
    %400 = arith.negf %399 : vector<8x128xf32>
    %401 = math.exp %400 : vector<8x128xf32>
    %cst_135 = arith.constant 1.000000e+00 : f32
    %402 = vector.broadcast %cst_135 : f32 to vector<8x128xf32>
    %403 = arith.addf %402, %401 : vector<8x128xf32>
    %404 = arith.divf %402, %403 : vector<8x128xf32>
    %405 = arith.mulf %396, %373 : vector<8x128xf32>
    %406 = arith.mulf %390, %398 : vector<8x128xf32>
    %407 = arith.addf %405, %406 : vector<8x128xf32>
    %408 = math.tanh %407 : vector<8x128xf32>
    %409 = arith.mulf %404, %408 : vector<8x128xf32>
    %410 = arith.index_cast %c2_i32_129 : i32 to index
    %c0_136 = arith.constant 0 : index
    %c0_137 = arith.constant 0 : index
    %411 = vector.load %arg11[%410, %c0_136, %c0_137] : memref<8x8x128xf32, #tpu.memory_space<vmem>>, vector<1x8x128xf32>
    %412 = vector.shape_cast %411 : vector<1x8x128xf32> to vector<8x128xf32>
    %413 = vector.shape_cast %409 : vector<8x128xf32> to vector<1x8x128xf32>
    tpu.vector_store %arg11[%410, %c0_136, %c0_137], %413 {strides = array<i32>} : memref<8x8x128xf32, #tpu.memory_space<vmem>>, vector<1x8x128xf32>,
    %c3_i32_138 = arith.constant 3 : i32
    %414 = arith.index_cast %c3_i32_138 : i32 to index
    %c0_139 = arith.constant 0 : index
    %c0_140 = arith.constant 0 : index
    %415 = vector.load %arg12[%414, %c0_139, %c0_140] : memref<8x8x512xf32, #tpu.memory_space<vmem>>, vector<1x8x512xf32>
    %416 = vector.shape_cast %415 : vector<1x8x512xf32> to vector<8x512xf32>
    %cst_141 = arith.constant dense<0.000000e+00> : vector<8x512xf32>
    %417 = tpu.matmul %409, %307, %cst_141 {dimension_numbers = #tpu.dot_dimension_numbers<[1], [0], [0], [1], [0, 0, 1, 1], [], []>} : vector<8x128xf32>, vector<128x512xf32>, vector<8x512xf32> -> vector<8x512xf32>
    %418 = arith.addf %416, %417 : vector<8x512xf32>
    %419 = vector.extract_strided_slice %418 {offsets = [0, 0], sizes = [8, 128], strides = [1, 1]} : vector<8x512xf32> to vector<8x128xf32>
    %420 = arith.negf %419 : vector<8x128xf32>
    %421 = math.exp %420 : vector<8x128xf32>
    %cst_142 = arith.constant 1.000000e+00 : f32
    %422 = vector.broadcast %cst_142 : f32 to vector<8x128xf32>
    %423 = arith.addf %422, %421 : vector<8x128xf32>
    %424 = arith.divf %422, %423 : vector<8x128xf32>
    %425 = vector.extract_strided_slice %418 {offsets = [0, 128], sizes = [8, 128], strides = [1, 1]} : vector<8x512xf32> to vector<8x128xf32>
    %426 = arith.negf %425 : vector<8x128xf32>
    %427 = math.exp %426 : vector<8x128xf32>
    %cst_143 = arith.constant 1.000000e+00 : f32
    %428 = vector.broadcast %cst_143 : f32 to vector<8x128xf32>
    %429 = arith.addf %428, %427 : vector<8x128xf32>
    %430 = arith.divf %428, %429 : vector<8x128xf32>
    %431 = vector.extract_strided_slice %418 {offsets = [0, 256], sizes = [8, 128], strides = [1, 1]} : vector<8x512xf32> to vector<8x128xf32>
    %432 = math.tanh %431 : vector<8x128xf32>
    %433 = vector.extract_strided_slice %418 {offsets = [0, 384], sizes = [8, 128], strides = [1, 1]} : vector<8x512xf32> to vector<8x128xf32>
    %434 = arith.negf %433 : vector<8x128xf32>
    %435 = math.exp %434 : vector<8x128xf32>
    %cst_144 = arith.constant 1.000000e+00 : f32
    %436 = vector.broadcast %cst_144 : f32 to vector<8x128xf32>
    %437 = arith.addf %436, %435 : vector<8x128xf32>
    %438 = arith.divf %436, %437 : vector<8x128xf32>
    %439 = arith.mulf %430, %407 : vector<8x128xf32>
    %440 = arith.mulf %424, %432 : vector<8x128xf32>
    %441 = arith.addf %439, %440 : vector<8x128xf32>
    %442 = math.tanh %441 : vector<8x128xf32>
    %443 = arith.mulf %438, %442 : vector<8x128xf32>
    %444 = arith.index_cast %c3_i32_138 : i32 to index
    %c0_145 = arith.constant 0 : index
    %c0_146 = arith.constant 0 : index
    %445 = vector.load %arg11[%444, %c0_145, %c0_146] : memref<8x8x128xf32, #tpu.memory_space<vmem>>, vector<1x8x128xf32>
    %446 = vector.shape_cast %445 : vector<1x8x128xf32> to vector<8x128xf32>
    %447 = vector.shape_cast %443 : vector<8x128xf32> to vector<1x8x128xf32>
    tpu.vector_store %arg11[%444, %c0_145, %c0_146], %447 {strides = array<i32>} : memref<8x8x128xf32, #tpu.memory_space<vmem>>, vector<1x8x128xf32>,
    %c4_i32_147 = arith.constant 4 : i32
    %448 = arith.index_cast %c4_i32_147 : i32 to index
    %c0_148 = arith.constant 0 : index
    %c0_149 = arith.constant 0 : index
    %449 = vector.load %arg12[%448, %c0_148, %c0_149] : memref<8x8x512xf32, #tpu.memory_space<vmem>>, vector<1x8x512xf32>
    %450 = vector.shape_cast %449 : vector<1x8x512xf32> to vector<8x512xf32>
    %cst_150 = arith.constant dense<0.000000e+00> : vector<8x512xf32>
    %451 = tpu.matmul %443, %307, %cst_150 {dimension_numbers = #tpu.dot_dimension_numbers<[1], [0], [0], [1], [0, 0, 1, 1], [], []>} : vector<8x128xf32>, vector<128x512xf32>, vector<8x512xf32> -> vector<8x512xf32>
    %452 = arith.addf %450, %451 : vector<8x512xf32>
    %453 = vector.extract_strided_slice %452 {offsets = [0, 0], sizes = [8, 128], strides = [1, 1]} : vector<8x512xf32> to vector<8x128xf32>
    %454 = arith.negf %453 : vector<8x128xf32>
    %455 = math.exp %454 : vector<8x128xf32>
    %cst_151 = arith.constant 1.000000e+00 : f32
    %456 = vector.broadcast %cst_151 : f32 to vector<8x128xf32>
    %457 = arith.addf %456, %455 : vector<8x128xf32>
    %458 = arith.divf %456, %457 : vector<8x128xf32>
    %459 = vector.extract_strided_slice %452 {offsets = [0, 128], sizes = [8, 128], strides = [1, 1]} : vector<8x512xf32> to vector<8x128xf32>
    %460 = arith.negf %459 : vector<8x128xf32>
    %461 = math.exp %460 : vector<8x128xf32>
    %cst_152 = arith.constant 1.000000e+00 : f32
    %462 = vector.broadcast %cst_152 : f32 to vector<8x128xf32>
    %463 = arith.addf %462, %461 : vector<8x128xf32>
    %464 = arith.divf %462, %463 : vector<8x128xf32>
    %465 = vector.extract_strided_slice %452 {offsets = [0, 256], sizes = [8, 128], strides = [1, 1]} : vector<8x512xf32> to vector<8x128xf32>
    %466 = math.tanh %465 : vector<8x128xf32>
    %467 = vector.extract_strided_slice %452 {offsets = [0, 384], sizes = [8, 128], strides = [1, 1]} : vector<8x512xf32> to vector<8x128xf32>
    %468 = arith.negf %467 : vector<8x128xf32>
    %469 = math.exp %468 : vector<8x128xf32>
    %cst_153 = arith.constant 1.000000e+00 : f32
    %470 = vector.broadcast %cst_153 : f32 to vector<8x128xf32>
    %471 = arith.addf %470, %469 : vector<8x128xf32>
    %472 = arith.divf %470, %471 : vector<8x128xf32>
    %473 = arith.mulf %464, %441 : vector<8x128xf32>
    %474 = arith.mulf %458, %466 : vector<8x128xf32>
    %475 = arith.addf %473, %474 : vector<8x128xf32>
    %476 = math.tanh %475 : vector<8x128xf32>
    %477 = arith.mulf %472, %476 : vector<8x128xf32>
    %478 = arith.index_cast %c4_i32_147 : i32 to index
    %c0_154 = arith.constant 0 : index
    %c0_155 = arith.constant 0 : index
    %479 = vector.load %arg11[%478, %c0_154, %c0_155] : memref<8x8x128xf32, #tpu.memory_space<vmem>>, vector<1x8x128xf32>
    %480 = vector.shape_cast %479 : vector<1x8x128xf32> to vector<8x128xf32>
    %481 = vector.shape_cast %477 : vector<8x128xf32> to vector<1x8x128xf32>
    tpu.vector_store %arg11[%478, %c0_154, %c0_155], %481 {strides = array<i32>} : memref<8x8x128xf32, #tpu.memory_space<vmem>>, vector<1x8x128xf32>,
    %c5_i32_156 = arith.constant 5 : i32
    %482 = arith.index_cast %c5_i32_156 : i32 to index
    %c0_157 = arith.constant 0 : index
    %c0_158 = arith.constant 0 : index
    %483 = vector.load %arg12[%482, %c0_157, %c0_158] : memref<8x8x512xf32, #tpu.memory_space<vmem>>, vector<1x8x512xf32>
    %484 = vector.shape_cast %483 : vector<1x8x512xf32> to vector<8x512xf32>
    %cst_159 = arith.constant dense<0.000000e+00> : vector<8x512xf32>
    %485 = tpu.matmul %477, %307, %cst_159 {dimension_numbers = #tpu.dot_dimension_numbers<[1], [0], [0], [1], [0, 0, 1, 1], [], []>} : vector<8x128xf32>, vector<128x512xf32>, vector<8x512xf32> -> vector<8x512xf32>
    %486 = arith.addf %484, %485 : vector<8x512xf32>
    %487 = vector.extract_strided_slice %486 {offsets = [0, 0], sizes = [8, 128], strides = [1, 1]} : vector<8x512xf32> to vector<8x128xf32>
    %488 = arith.negf %487 : vector<8x128xf32>
    %489 = math.exp %488 : vector<8x128xf32>
    %cst_160 = arith.constant 1.000000e+00 : f32
    %490 = vector.broadcast %cst_160 : f32 to vector<8x128xf32>
    %491 = arith.addf %490, %489 : vector<8x128xf32>
    %492 = arith.divf %490, %491 : vector<8x128xf32>
    %493 = vector.extract_strided_slice %486 {offsets = [0, 128], sizes = [8, 128], strides = [1, 1]} : vector<8x512xf32> to vector<8x128xf32>
    %494 = arith.negf %493 : vector<8x128xf32>
    %495 = math.exp %494 : vector<8x128xf32>
    %cst_161 = arith.constant 1.000000e+00 : f32
    %496 = vector.broadcast %cst_161 : f32 to vector<8x128xf32>
    %497 = arith.addf %496, %495 : vector<8x128xf32>
    %498 = arith.divf %496, %497 : vector<8x128xf32>
    %499 = vector.extract_strided_slice %486 {offsets = [0, 256], sizes = [8, 128], strides = [1, 1]} : vector<8x512xf32> to vector<8x128xf32>
    %500 = math.tanh %499 : vector<8x128xf32>
    %501 = vector.extract_strided_slice %486 {offsets = [0, 384], sizes = [8, 128], strides = [1, 1]} : vector<8x512xf32> to vector<8x128xf32>
    %502 = arith.negf %501 : vector<8x128xf32>
    %503 = math.exp %502 : vector<8x128xf32>
    %cst_162 = arith.constant 1.000000e+00 : f32
    %504 = vector.broadcast %cst_162 : f32 to vector<8x128xf32>
    %505 = arith.addf %504, %503 : vector<8x128xf32>
    %506 = arith.divf %504, %505 : vector<8x128xf32>
    %507 = arith.mulf %498, %475 : vector<8x128xf32>
    %508 = arith.mulf %492, %500 : vector<8x128xf32>
    %509 = arith.addf %507, %508 : vector<8x128xf32>
    %510 = math.tanh %509 : vector<8x128xf32>
    %511 = arith.mulf %506, %510 : vector<8x128xf32>
    %512 = arith.index_cast %c5_i32_156 : i32 to index
    %c0_163 = arith.constant 0 : index
    %c0_164 = arith.constant 0 : index
    %513 = vector.load %arg11[%512, %c0_163, %c0_164] : memref<8x8x128xf32, #tpu.memory_space<vmem>>, vector<1x8x128xf32>
    %514 = vector.shape_cast %513 : vector<1x8x128xf32> to vector<8x128xf32>
    %515 = vector.shape_cast %511 : vector<8x128xf32> to vector<1x8x128xf32>
    tpu.vector_store %arg11[%512, %c0_163, %c0_164], %515 {strides = array<i32>} : memref<8x8x128xf32, #tpu.memory_space<vmem>>, vector<1x8x128xf32>,
    %c6_i32_165 = arith.constant 6 : i32
    %516 = arith.index_cast %c6_i32_165 : i32 to index
    %c0_166 = arith.constant 0 : index
    %c0_167 = arith.constant 0 : index
    %517 = vector.load %arg12[%516, %c0_166, %c0_167] : memref<8x8x512xf32, #tpu.memory_space<vmem>>, vector<1x8x512xf32>
    %518 = vector.shape_cast %517 : vector<1x8x512xf32> to vector<8x512xf32>
    %cst_168 = arith.constant dense<0.000000e+00> : vector<8x512xf32>
    %519 = tpu.matmul %511, %307, %cst_168 {dimension_numbers = #tpu.dot_dimension_numbers<[1], [0], [0], [1], [0, 0, 1, 1], [], []>} : vector<8x128xf32>, vector<128x512xf32>, vector<8x512xf32> -> vector<8x512xf32>
    %520 = arith.addf %518, %519 : vector<8x512xf32>
    %521 = vector.extract_strided_slice %520 {offsets = [0, 0], sizes = [8, 128], strides = [1, 1]} : vector<8x512xf32> to vector<8x128xf32>
    %522 = arith.negf %521 : vector<8x128xf32>
    %523 = math.exp %522 : vector<8x128xf32>
    %cst_169 = arith.constant 1.000000e+00 : f32
    %524 = vector.broadcast %cst_169 : f32 to vector<8x128xf32>
    %525 = arith.addf %524, %523 : vector<8x128xf32>
    %526 = arith.divf %524, %525 : vector<8x128xf32>
    %527 = vector.extract_strided_slice %520 {offsets = [0, 128], sizes = [8, 128], strides = [1, 1]} : vector<8x512xf32> to vector<8x128xf32>
    %528 = arith.negf %527 : vector<8x128xf32>
    %529 = math.exp %528 : vector<8x128xf32>
    %cst_170 = arith.constant 1.000000e+00 : f32
    %530 = vector.broadcast %cst_170 : f32 to vector<8x128xf32>
    %531 = arith.addf %530, %529 : vector<8x128xf32>
    %532 = arith.divf %530, %531 : vector<8x128xf32>
    %533 = vector.extract_strided_slice %520 {offsets = [0, 256], sizes = [8, 128], strides = [1, 1]} : vector<8x512xf32> to vector<8x128xf32>
    %534 = math.tanh %533 : vector<8x128xf32>
    %535 = vector.extract_strided_slice %520 {offsets = [0, 384], sizes = [8, 128], strides = [1, 1]} : vector<8x512xf32> to vector<8x128xf32>
    %536 = arith.negf %535 : vector<8x128xf32>
    %537 = math.exp %536 : vector<8x128xf32>
    %cst_171 = arith.constant 1.000000e+00 : f32
    %538 = vector.broadcast %cst_171 : f32 to vector<8x128xf32>
    %539 = arith.addf %538, %537 : vector<8x128xf32>
    %540 = arith.divf %538, %539 : vector<8x128xf32>
    %541 = arith.mulf %532, %509 : vector<8x128xf32>
    %542 = arith.mulf %526, %534 : vector<8x128xf32>
    %543 = arith.addf %541, %542 : vector<8x128xf32>
    %544 = math.tanh %543 : vector<8x128xf32>
    %545 = arith.mulf %540, %544 : vector<8x128xf32>
    %546 = arith.index_cast %c6_i32_165 : i32 to index
    %c0_172 = arith.constant 0 : index
    %c0_173 = arith.constant 0 : index
    %547 = vector.load %arg11[%546, %c0_172, %c0_173] : memref<8x8x128xf32, #tpu.memory_space<vmem>>, vector<1x8x128xf32>
    %548 = vector.shape_cast %547 : vector<1x8x128xf32> to vector<8x128xf32>
    %549 = vector.shape_cast %545 : vector<8x128xf32> to vector<1x8x128xf32>
    tpu.vector_store %arg11[%546, %c0_172, %c0_173], %549 {strides = array<i32>} : memref<8x8x128xf32, #tpu.memory_space<vmem>>, vector<1x8x128xf32>,
    %c7_i32_174 = arith.constant 7 : i32
    %550 = arith.index_cast %c7_i32_174 : i32 to index
    %c0_175 = arith.constant 0 : index
    %c0_176 = arith.constant 0 : index
    %551 = vector.load %arg12[%550, %c0_175, %c0_176] : memref<8x8x512xf32, #tpu.memory_space<vmem>>, vector<1x8x512xf32>
    %552 = vector.shape_cast %551 : vector<1x8x512xf32> to vector<8x512xf32>
    %cst_177 = arith.constant dense<0.000000e+00> : vector<8x512xf32>
    %553 = tpu.matmul %545, %307, %cst_177 {dimension_numbers = #tpu.dot_dimension_numbers<[1], [0], [0], [1], [0, 0, 1, 1], [], []>} : vector<8x128xf32>, vector<128x512xf32>, vector<8x512xf32> -> vector<8x512xf32>
    %554 = arith.addf %552, %553 : vector<8x512xf32>
    %555 = vector.extract_strided_slice %554 {offsets = [0, 0], sizes = [8, 128], strides = [1, 1]} : vector<8x512xf32> to vector<8x128xf32>
    %556 = arith.negf %555 : vector<8x128xf32>
    %557 = math.exp %556 : vector<8x128xf32>
    %cst_178 = arith.constant 1.000000e+00 : f32
    %558 = vector.broadcast %cst_178 : f32 to vector<8x128xf32>
    %559 = arith.addf %558, %557 : vector<8x128xf32>
    %560 = arith.divf %558, %559 : vector<8x128xf32>
    %561 = vector.extract_strided_slice %554 {offsets = [0, 128], sizes = [8, 128], strides = [1, 1]} : vector<8x512xf32> to vector<8x128xf32>
    %562 = arith.negf %561 : vector<8x128xf32>
    %563 = math.exp %562 : vector<8x128xf32>
    %cst_179 = arith.constant 1.000000e+00 : f32
    %564 = vector.broadcast %cst_179 : f32 to vector<8x128xf32>
    %565 = arith.addf %564, %563 : vector<8x128xf32>
    %566 = arith.divf %564, %565 : vector<8x128xf32>
    %567 = vector.extract_strided_slice %554 {offsets = [0, 256], sizes = [8, 128], strides = [1, 1]} : vector<8x512xf32> to vector<8x128xf32>
    %568 = math.tanh %567 : vector<8x128xf32>
    %569 = vector.extract_strided_slice %554 {offsets = [0, 384], sizes = [8, 128], strides = [1, 1]} : vector<8x512xf32> to vector<8x128xf32>
    %570 = arith.negf %569 : vector<8x128xf32>
    %571 = math.exp %570 : vector<8x128xf32>
    %cst_180 = arith.constant 1.000000e+00 : f32
    %572 = vector.broadcast %cst_180 : f32 to vector<8x128xf32>
    %573 = arith.addf %572, %571 : vector<8x128xf32>
    %574 = arith.divf %572, %573 : vector<8x128xf32>
    %575 = arith.mulf %566, %543 : vector<8x128xf32>
    %576 = arith.mulf %560, %568 : vector<8x128xf32>
    %577 = arith.addf %575, %576 : vector<8x128xf32>
    %578 = math.tanh %577 : vector<8x128xf32>
    %579 = arith.mulf %574, %578 : vector<8x128xf32>
    %580 = arith.index_cast %c7_i32_174 : i32 to index
    %c0_181 = arith.constant 0 : index
    %c0_182 = arith.constant 0 : index
    %581 = vector.load %arg11[%580, %c0_181, %c0_182] : memref<8x8x128xf32, #tpu.memory_space<vmem>>, vector<1x8x128xf32>
    %582 = vector.shape_cast %581 : vector<1x8x128xf32> to vector<8x128xf32>
    %583 = vector.shape_cast %579 : vector<8x128xf32> to vector<1x8x128xf32>
    tpu.vector_store %arg11[%580, %c0_181, %c0_182], %583 {strides = array<i32>} : memref<8x8x128xf32, #tpu.memory_space<vmem>>, vector<1x8x128xf32>,
    %c8_i32_183 = arith.constant 8 : i32
    %c1_184 = arith.constant 1 : index
    %c0_185 = arith.constant 0 : index
    %c0_186 = arith.constant 0 : index
    %584 = vector.load %arg9[%c1_184, %c0_185, %c0_186] : memref<2x8x128xf32, #tpu.memory_space<vmem>>, vector<1x8x128xf32>
    %585 = vector.shape_cast %584 : vector<1x8x128xf32> to vector<8x128xf32>
    %586 = vector.shape_cast %579 : vector<8x128xf32> to vector<1x8x128xf32>
    tpu.vector_store %arg9[%c1_184, %c0_185, %c0_186], %586 {strides = array<i32>} : memref<2x8x128xf32, #tpu.memory_space<vmem>>, vector<1x8x128xf32>,
    %c1_187 = arith.constant 1 : index
    %c0_188 = arith.constant 0 : index
    %c0_189 = arith.constant 0 : index
    %587 = vector.load %arg10[%c1_187, %c0_188, %c0_189] : memref<2x8x128xf32, #tpu.memory_space<vmem>>, vector<1x8x128xf32>
    %588 = vector.shape_cast %587 : vector<1x8x128xf32> to vector<8x128xf32>
    %589 = vector.shape_cast %577 : vector<8x128xf32> to vector<1x8x128xf32>
    tpu.vector_store %arg10[%c1_187, %c0_188, %c0_189], %589 {strides = array<i32>} : memref<2x8x128xf32, #tpu.memory_space<vmem>>, vector<1x8x128xf32>,
    %c0_190 = arith.constant 0 : index
    %c0_191 = arith.constant 0 : index
    %c0_192 = arith.constant 0 : index
    %590 = vector.load %arg11[%c0_190, %c0_191, %c0_192] : memref<8x8x128xf32, #tpu.memory_space<vmem>>, vector<8x8x128xf32>
    %591 = vector.shape_cast %590 : vector<8x8x128xf32> to vector<64x128xf32>
    %c0_193 = arith.constant 0 : index
    %c0_194 = arith.constant 0 : index
    %592 = vector.load %arg4[%c0_193, %c0_194] : memref<128x128xf32, #tpu.memory_space<vmem>>, vector<128x128xf32>
    %cst_195 = arith.constant dense<0.000000e+00> : vector<64x128xf32>
    %593 = tpu.matmul %591, %592, %cst_195 {dimension_numbers = #tpu.dot_dimension_numbers<[1], [0], [0], [1], [0, 0, 1, 1], [], []>} : vector<64x128xf32>, vector<128x128xf32>, vector<64x128xf32> -> vector<64x128xf32>
    %c0_196 = arith.constant 0 : index
    %c0_197 = arith.constant 0 : index
    %594 = vector.load %arg5[%c0_196, %c0_197] : memref<1x128xf32, #tpu.memory_space<vmem>>, vector<1x128xf32>
    %595 = vector.broadcast %594 : vector<1x128xf32> to vector<64x128xf32>
    %596 = arith.addf %593, %595 : vector<64x128xf32>
    %597 = vector.shape_cast %596 : vector<64x128xf32> to vector<8x8x128xf32>
    %c0_198 = arith.constant 0 : index
    %c0_199 = arith.constant 0 : index
    %c0_200 = arith.constant 0 : index
    %598 = vector.load %arg8[%c0_198, %c0_199, %c0_200] : memref<8x8x128xf32, #tpu.memory_space<vmem>>, vector<8x8x128xf32>
    tpu.vector_store %arg8[%c0_198, %c0_199, %c0_200], %597 {strides = array<i32>} : memref<8x8x128xf32, #tpu.memory_space<vmem>>, vector<8x8x128xf32>,
    return
  }
}

</mosaic_0001>

<llo_original>
// kernel: tpu_custom_call.1
$region0: #{tpu_custom_call.1}
  #allocation0 [shape = 'u32[]', space=smem, size = 0x4, offset = 0x4, fixed_abs, tag = 'smem constant byte address 0x4 - core index']
  #allocation1 [shape = 'u32[72,128]{1,0:T(1,128)}', space=vmem, size = 0x9000, scoped, tag = 'internal scratch']
  #allocation2 [shape = 'f32[8,8,128]{2,1,0:T(8,128)}', space=vmem, size = 0x8000, scoped, tag = 'scratch operand']
  #allocation3 [shape = 'f32[8,8,512]{2,1,0:T(8,128)}', space=vmem, size = 0x20000, scoped, tag = 'scratch operand']
  %s0 = inlined_call_operand.hbm [shape: f32[8,8,128], index: 0, kind: input, shape index: {}]
  %s1 = inlined_call_operand.hbm [shape: f32[2,128,512], index: 1, kind: input, shape index: {}]
  %s2 = inlined_call_operand.hbm [shape: f32[2,128,512], index: 2, kind: input, shape index: {}]
  %s3 = inlined_call_operand.hbm [shape: f32[2,1,512], index: 3, kind: input, shape index: {}]
  %s4 = inlined_call_operand.hbm [shape: f32[128,128], index: 4, kind: input, shape index: {}]
  %s5 = inlined_call_operand.vmem [shape: f32[1,128], index: 5, kind: input, shape index: {}]
  %s6 = inlined_call_operand.hbm [shape: f32[2,8,128], index: 6, kind: input, shape index: {}]
  %s7 = inlined_call_operand.hbm [shape: f32[2,8,128], index: 7, kind: input, shape index: {}]
  %s8 = inlined_call_operand.hbm [shape: f32[8,8,128], index: 8, kind: output, shape index: {0}]
  %s9 = inlined_call_operand.hbm [shape: f32[2,8,128], index: 9, kind: output, shape index: {1}]
  %s10 = inlined_call_operand.hbm [shape: f32[2,8,128], index: 10, kind: output, shape index: {2}]
  %11 = xla_tuple %s8, %s9, %s10
  %s12 = sld [smem:[#allocation0]]
  $region86: #{tpu_custom_call.1} parent=0
    _
  %s14 = ssub.s32 1, %s12
  %s15 = scalar_select 0, %s14, %s12
  $region1: #{tpu_custom_call.1} parent=0
    #allocation4 [shape = 'u8[32768]{0}', space=vmem, size = 0x8000, scoped, tag = 'input window, operand 0, single buffered']
    #allocation5 [shape = 's32[1]{0}', space=sflag, size = 0x4, scoped, tag = 'scoped memory for tpu_custom_call.1']
    #allocation6 [shape = 's32[1]{0}', space=sflag, size = 0x4, scoped, tag = 'scoped memory for tpu_custom_call.1']
    #allocation7 [shape = 'u8[524288]{0}', space=vmem, size = 0x80000, scoped, tag = 'input window, operand 1, single buffered']
    #allocation8 [shape = 's32[1]{0}', space=sflag, size = 0x4, scoped, tag = 'scoped memory for tpu_custom_call.1']
    #allocation9 [shape = 'u8[524288]{0}', space=vmem, size = 0x80000, scoped, tag = 'input window, operand 2, single buffered']
    #allocation10 [shape = 'u8[4096]{0}', space=vmem, size = 0x1000, scoped, tag = 'input window, operand 3, single buffered']
    #allocation11 [shape = 's32[1]{0}', space=sflag, size = 0x4, scoped, tag = 'scoped memory for tpu_custom_call.1']
    #allocation12 [shape = 'u8[65536]{0}', space=vmem, size = 0x10000, scoped, tag = 'input window, operand 4, single buffered']
    #allocation13 [shape = 'u8[8192]{0}', space=vmem, size = 0x2000, scoped, tag = 'input window, operand 6, single buffered']
    #allocation14 [shape = 's32[1]{0}', space=sflag, size = 0x4, scoped, tag = 'scoped memory for tpu_custom_call.1']
    #allocation15 [shape = 'u8[8192]{0}', space=vmem, size = 0x2000, scoped, tag = 'input window, operand 7, single buffered']
    #allocation16 [shape = 'u8[32768]{0}', space=vmem, size = 0x8000, scoped, tag = 'output window, operand 0, single buffered']
    #allocation17 [shape = 'u8[8192]{0}', space=vmem, size = 0x2000, scoped, tag = 'output window, operand 1, single buffered']
    #allocation18 [shape = 's32[1]{0}', space=sflag, size = 0x4, scoped, tag = 'scoped memory for tpu_custom_call.1']
    #allocation19 [shape = 'u8[8192]{0}', space=vmem, size = 0x2000, scoped, tag = 'output window, operand 2, single buffered']
    %16 = vsyncpa [#allocation5], 0
    %17 = vsyncpa [#allocation8], 0
    %18 = vsyncpa [#allocation11], 0
    %19 = vsyncpa [#allocation14], 0
    %20 = vsyncpa [#allocation6], 0
    %21 = vsyncpa [#allocation18], 0
    // Predicated region
    $region2: #{tpu_custom_call.1} parent=1 // pred_check
      _
    $region3: #{tpu_custom_call.1} parent=1 // pred_check_branch
      %23 = sbr.rel (0) target = $region5
    $region4: #{tpu_custom_call.1} parent=1 // pred_region
      %25 = vsyncadd [#allocation5], 0
      %s26 = sshll.u32 %s0, 4
      %s27 = int_to_ptr.hbm [resolvable:$true] %s26
      %s28 = sshll.u32 [#allocation4], 4
      %s29 = int_to_ptr.vmem [resolvable:$true] %s28
      %34 = dma.hbm_to_vmem [thread:$0]  %s27, 1024, %s29, [#allocation5], 128, 128, 8
    $region5: #{tpu_custom_call.1} parent=1 // pred_fallthru
      _
    // Predicated region
    $region6: #{tpu_custom_call.1} parent=1 // pred_check
      _
    $region7: #{tpu_custom_call.1} parent=1 // pred_check_branch
      %36 = sbr.rel (0) target = $region9
    $region8: #{tpu_custom_call.1} parent=1 // pred_region
      %38 = vsyncadd [#allocation8], 0
      %s39 = sshll.u32 %s1, 4
      %s40 = int_to_ptr.hbm [resolvable:$true] %s39
      %s41 = sshll.u32 [#allocation7], 4
      %s42 = int_to_ptr.vmem [resolvable:$true] %s41
      %47 = dma.hbm_to_vmem [thread:$0]  %s40, 16384, %s42, [#allocation8], 512, 512, 32
    $region9: #{tpu_custom_call.1} parent=1 // pred_fallthru
      _
    // Predicated region
    $region10: #{tpu_custom_call.1} parent=1 // pred_check
      _
    $region11: #{tpu_custom_call.1} parent=1 // pred_check_branch
      %49 = sbr.rel (0) target = $region13
    $region12: #{tpu_custom_call.1} parent=1 // pred_region
      %51 = vsyncadd [#allocation8], 0
      %s52 = sshll.u32 %s2, 4
      %s53 = int_to_ptr.hbm [resolvable:$true] %s52
      %s54 = sshll.u32 [#allocation9], 4
      %s55 = int_to_ptr.vmem [resolvable:$true] %s54
      %60 = dma.hbm_to_vmem [thread:$0]  %s53, 16384, %s55, [#allocation8], 512, 512, 32
    $region13: #{tpu_custom_call.1} parent=1 // pred_fallthru
      _
    // Predicated region
    $region14: #{tpu_custom_call.1} parent=1 // pred_check
      _
    $region15: #{tpu_custom_call.1} parent=1 // pred_check_branch
      %62 = sbr.rel (0) target = $region17
    $region16: #{tpu_custom_call.1} parent=1 // pred_region
      %64 = vsyncadd [#allocation11], 0
      %s65 = sshll.u32 %s3, 4
      %s66 = int_to_ptr.hbm [resolvable:$true] %s65
      %s67 = sshll.u32 [#allocation10], 4
      %s68 = int_to_ptr.vmem [resolvable:$true] %s67
      %73 = dma.hbm_to_vmem [thread:$0]  %s66, 128, %s68, [#allocation11], 64, 64, 4
    $region17: #{tpu_custom_call.1} parent=1 // pred_fallthru
      _
    // Predicated region
    $region18: #{tpu_custom_call.1} parent=1 // pred_check
      _
    $region19: #{tpu_custom_call.1} parent=1 // pred_check_branch
      %75 = sbr.rel (0) target = $region21
    $region20: #{tpu_custom_call.1} parent=1 // pred_region
      %77 = vsyncadd [#allocation11], 0
      %s78 = sshll.u32 %s4, 4
      %s79 = int_to_ptr.hbm [resolvable:$true] %s78
      %s80 = sshll.u32 [#allocation12], 4
      %s81 = int_to_ptr.vmem [resolvable:$true] %s80
      %86 = dma.hbm_to_vmem [thread:$0]  %s79, 2048, %s81, [#allocation11], 128, 128, 8
    $region21: #{tpu_custom_call.1} parent=1 // pred_fallthru
      _
    // Predicated region
    $region22: #{tpu_custom_call.1} parent=1 // pred_check
      _
    $region23: #{tpu_custom_call.1} parent=1 // pred_check_branch
      %88 = sbr.rel (0) target = $region25
    $region24: #{tpu_custom_call.1} parent=1 // pred_region
      _
    $region25: #{tpu_custom_call.1} parent=1 // pred_fallthru
      _
    // Predicated region
    $region26: #{tpu_custom_call.1} parent=1 // pred_check
      _
    $region27: #{tpu_custom_call.1} parent=1 // pred_check_branch
      %90 = sbr.rel (0) target = $region29
    $region28: #{tpu_custom_call.1} parent=1 // pred_region
      %92 = vsyncadd [#allocation14], 0
      %s93 = sshll.u32 %s6, 4
      %s94 = int_to_ptr.hbm [resolvable:$true] %s93
      %s95 = sshll.u32 [#allocation13], 4
      %s96 = int_to_ptr.vmem [resolvable:$true] %s95
      %101 = dma.hbm_to_vmem [thread:$0]  %s94, 256, %s96, [#allocation14], 128, 128, 8
    $region29: #{tpu_custom_call.1} parent=1 // pred_fallthru
      _
    // Predicated region
    $region30: #{tpu_custom_call.1} parent=1 // pred_check
      _
    $region31: #{tpu_custom_call.1} parent=1 // pred_check_branch
      %103 = sbr.rel (0) target = $region33
    $region32: #{tpu_custom_call.1} parent=1 // pred_region
      %105 = vsyncadd [#allocation14], 0
      %s106 = sshll.u32 %s7, 4
      %s107 = int_to_ptr.hbm [resolvable:$true] %s106
      %s108 = sshll.u32 [#allocation15], 4
      %s109 = int_to_ptr.vmem [resolvable:$true] %s108
      %114 = dma.hbm_to_vmem [thread:$0]  %s107, 256, %s109, [#allocation14], 128, 128, 8
    $region33: #{tpu_custom_call.1} parent=1 // pred_fallthru
      _
    // Predicated region
    $region34: #{tpu_custom_call.1} parent=1 // pred_check
      _
    $region35: #{tpu_custom_call.1} parent=1 // pred_check_branch
      %116 = sbr.rel (0) target = $region37
    $region36: #{tpu_custom_call.1} parent=1 // pred_region
      %118 = dma.done [#allocation5], 1024
    $region37: #{tpu_custom_call.1} parent=1 // pred_fallthru
      _
    // Predicated region
    $region38: #{tpu_custom_call.1} parent=1 // pred_check
      _
    $region39: #{tpu_custom_call.1} parent=1 // pred_check_branch
      %120 = sbr.rel (0) target = $region41
    $region40: #{tpu_custom_call.1} parent=1 // pred_region
      %122 = dma.done [#allocation8], 16384
    $region41: #{tpu_custom_call.1} parent=1 // pred_fallthru
      _
    // Predicated region
    $region42: #{tpu_custom_call.1} parent=1 // pred_check
      _
    $region43: #{tpu_custom_call.1} parent=1 // pred_check_branch
      %124 = sbr.rel (0) target = $region45
    $region44: #{tpu_custom_call.1} parent=1 // pred_region
      %126 = dma.done [#allocation8], 16384
    $region45: #{tpu_custom_call.1} parent=1 // pred_fallthru
      _
    // Predicated region
    $region46: #{tpu_custom_call.1} parent=1 // pred_check
      _
    $region47: #{tpu_custom_call.1} parent=1 // pred_check_branch
      %128 = sbr.rel (0) target = $region49
    $region48: #{tpu_custom_call.1} parent=1 // pred_region
      %130 = dma.done [#allocation11], 128
    $region49: #{tpu_custom_call.1} parent=1 // pred_fallthru
      _
    // Predicated region
    $region50: #{tpu_custom_call.1} parent=1 // pred_check
      _
    $region51: #{tpu_custom_call.1} parent=1 // pred_check_branch
      %132 = sbr.rel (0) target = $region53
    $region52: #{tpu_custom_call.1} parent=1 // pred_region
      %134 = dma.done [#allocation11], 2048
    $region53: #{tpu_custom_call.1} parent=1 // pred_fallthru
      _
    // Predicated region
    $region54: #{tpu_custom_call.1} parent=1 // pred_check
      _
    $region55: #{tpu_custom_call.1} parent=1 // pred_check_branch
      %136 = sbr.rel (0) target = $region57
    $region56: #{tpu_custom_call.1} parent=1 // pred_region
      %138 = dma.done [#allocation14], 256
    $region57: #{tpu_custom_call.1} parent=1 // pred_fallthru
      _
    // Predicated region
    $region58: #{tpu_custom_call.1} parent=1 // pred_check
      _
    $region59: #{tpu_custom_call.1} parent=1 // pred_check_branch
      %140 = sbr.rel (0) target = $region61
    $region60: #{tpu_custom_call.1} parent=1 // pred_region
      %142 = dma.done [#allocation14], 256
    $region61: #{tpu_custom_call.1} parent=1 // pred_fallthru
      _
    %v143 = vld [vmem:[#allocation4] sm:$0xff]
    %v144 = vld [vmem:[#allocation4 + $0x8] sm:$0xff]
    %v145 = vld [vmem:[#allocation4 + $0x10] sm:$0xff]
    %v146 = vld [vmem:[#allocation4 + $0x18] sm:$0xff]
    %v147 = vld [vmem:[#allocation4 + $0x20] sm:$0xff]
    %v148 = vld [vmem:[#allocation4 + $0x28] sm:$0xff]
    %v149 = vld [vmem:[#allocation4 + $0x30] sm:$0xff]
    %v150 = vld [vmem:[#allocation4 + $0x38] sm:$0xff]
    %v151 = vld [vmem:[#allocation7] sm:$0xff]
    %v152 = vld [vmem:[#allocation7 + $0x8] sm:$0xff]
    %v153 = vld [vmem:[#allocation7 + $0x10] sm:$0xff]
    %v154 = vld [vmem:[#allocation7 + $0x18] sm:$0xff]
    %v155 = vld [vmem:[#allocation7 + $0x20] sm:$0xff]
    %v156 = vld [vmem:[#allocation7 + $0x28] sm:$0xff]
    %v157 = vld [vmem:[#allocation7 + $0x30] sm:$0xff]
    %v158 = vld [vmem:[#allocation7 + $0x38] sm:$0xff]
    %v159 = vld [vmem:[#allocation7 + $0x40] sm:$0xff]
    %v160 = vld [vmem:[#allocation7 + $0x48] sm:$0xff]
    %v161 = vld [vmem:[#allocation7 + $0x50] sm:$0xff]
    %v162 = vld [vmem:[#allocation7 + $0x58] sm:$0xff]
    %v163 = vld [vmem:[#allocation7 + $0x60] sm:$0xff]
    %v164 = vld [vmem:[#allocation7 + $0x68] sm:$0xff]
    %v165 = vld [vmem:[#allocation7 + $0x70] sm:$0xff]
    %v166 = vld [vmem:[#allocation7 + $0x78] sm:$0xff]
    %v167 = vld [vmem:[#allocation7 + $0x80] sm:$0xff]
    %v168 = vld [vmem:[#allocation7 + $0x88] sm:$0xff]
    %v169 = vld [vmem:[#allocation7 + $0x90] sm:$0xff]
    %v170 = vld [vmem:[#allocation7 + $0x98] sm:$0xff]
    %v171 = vld [vmem:[#allocation7 + $0xa0] sm:$0xff]
    %v172 = vld [vmem:[#allocation7 + $0xa8] sm:$0xff]
    %v173 = vld [vmem:[#allocation7 + $0xb0] sm:$0xff]
    %v174 = vld [vmem:[#allocation7 + $0xb8] sm:$0xff]
    %v175 = vld [vmem:[#allocation7 + $0xc0] sm:$0xff]
    %v176 = vld [vmem:[#allocation7 + $0xc8] sm:$0xff]
    %v177 = vld [vmem:[#allocation7 + $0xd0] sm:$0xff]
    %v178 = vld [vmem:[#allocation7 + $0xd8] sm:$0xff]
    %v179 = vld [vmem:[#allocation7 + $0xe0] sm:$0xff]
    %v180 = vld [vmem:[#allocation7 + $0xe8] sm:$0xff]
    %v181 = vld [vmem:[#allocation7 + $0xf0] sm:$0xff]
    %v182 = vld [vmem:[#allocation7 + $0xf8] sm:$0xff]
    %v183 = vld [vmem:[#allocation7 + $0x100] sm:$0xff]
    %v184 = vld [vmem:[#allocation7 + $0x108] sm:$0xff]
    %v185 = vld [vmem:[#allocation7 + $0x110] sm:$0xff]
    %v186 = vld [vmem:[#allocation7 + $0x118] sm:$0xff]
    %v187 = vld [vmem:[#allocation7 + $0x120] sm:$0xff]
    %v188 = vld [vmem:[#allocation7 + $0x128] sm:$0xff]
    %v189 = vld [vmem:[#allocation7 + $0x130] sm:$0xff]
    %v190 = vld [vmem:[#allocation7 + $0x138] sm:$0xff]
    %v191 = vld [vmem:[#allocation7 + $0x140] sm:$0xff]
    %v192 = vld [vmem:[#allocation7 + $0x148] sm:$0xff]
    %v193 = vld [vmem:[#allocation7 + $0x150] sm:$0xff]
    %v194 = vld [vmem:[#allocation7 + $0x158] sm:$0xff]
    %v195 = vld [vmem:[#allocation7 + $0x160] sm:$0xff]
    %v196 = vld [vmem:[#allocation7 + $0x168] sm:$0xff]
    %v197 = vld [vmem:[#allocation7 + $0x170] sm:$0xff]
    %v198 = vld [vmem:[#allocation7 + $0x178] sm:$0xff]
    %v199 = vld [vmem:[#allocation7 + $0x180] sm:$0xff]
    %v200 = vld [vmem:[#allocation7 + $0x188] sm:$0xff]
    %v201 = vld [vmem:[#allocation7 + $0x190] sm:$0xff]
    %v202 = vld [vmem:[#allocation7 + $0x198] sm:$0xff]
    %v203 = vld [vmem:[#allocation7 + $0x1a0] sm:$0xff]
    %v204 = vld [vmem:[#allocation7 + $0x1a8] sm:$0xff]
    %v205 = vld [vmem:[#allocation7 + $0x1b0] sm:$0xff]
    %v206 = vld [vmem:[#allocation7 + $0x1b8] sm:$0xff]
    %v207 = vld [vmem:[#allocation7 + $0x1c0] sm:$0xff]
    %v208 = vld [vmem:[#allocation7 + $0x1c8] sm:$0xff]
    %v209 = vld [vmem:[#allocation7 + $0x1d0] sm:$0xff]
    %v210 = vld [vmem:[#allocation7 + $0x1d8] sm:$0xff]
    %v211 = vld [vmem:[#allocation7 + $0x1e0] sm:$0xff]
    %v212 = vld [vmem:[#allocation7 + $0x1e8] sm:$0xff]
    %v213 = vld [vmem:[#allocation7 + $0x1f0] sm:$0xff]
    %v214 = vld [vmem:[#allocation7 + $0x1f8] sm:$0xff]
    %v215 = vld [vmem:[#allocation10] sm:$0xf]
    %v217 = vperm.slane %v215, 0
    %v218 = vperm.slane %v215, 1
    %v219 = vperm.slane %v215, 2
    %v220 = vperm.slane %v215, 3
    %225 = vmatpush.msra.mxu0 %v211
    %226 = vmatpush.msra.mxu0 %v207
    %227 = vmatpush.msra.mxu0 %v203
    %228 = vmatpush.msra.mxu0 %v199
    %229 = vmatpush.msra.mxu0 %v195
    %230 = vmatpush.msra.mxu0 %v191
    %231 = vmatpush.msra.mxu0 %v187
    %232 = vmatpush.msra.mxu0 %v183
    %233 = vmatpush.msra.mxu0 %v179
    %234 = vmatpush.msra.mxu0 %v175
    %235 = vmatpush.msra.mxu0 %v171
    %236 = vmatpush.msra.mxu0 %v167
    %237 = vmatpush.msra.mxu0 %v163
    %238 = vmatpush.msra.mxu0 %v159
    %239 = vmatpush.msra.mxu0 %v155
    %240 = vmatpush.msra.mxu0 %v151
    %241 = vmatmul.f32.gmra.mxu0 %v143
    %v242 = vpop.f32.mrf.mxu0
    %v243 = vadd.f32 %v217, %v242
    %244 = vmatmul.f32.gmra.mxu0 %v144
    %v245 = vpop.f32.mrf.mxu0
    %v246 = vadd.f32 %v217, %v245
    %247 = vmatmul.f32.gmra.mxu0 %v145
    %v248 = vpop.f32.mrf.mxu0
    %v249 = vadd.f32 %v217, %v248
    %250 = vmatmul.f32.gmra.mxu0 %v146
    %v251 = vpop.f32.mrf.mxu0
    %v252 = vadd.f32 %v217, %v251
    %253 = vmatmul.f32.gmra.mxu0 %v147
    %v254 = vpop.f32.mrf.mxu0
    %v255 = vadd.f32 %v217, %v254
    %256 = vmatmul.f32.gmra.mxu0 %v148
    %v257 = vpop.f32.mrf.mxu0
    %v258 = vadd.f32 %v217, %v257
    %259 = vmatmul.f32.gmra.mxu0 %v149
    %v260 = vpop.f32.mrf.mxu0
    %v261 = vadd.f32 %v217, %v260
    %262 = vmatmul.f32.gmra.mxu0 %v150
    %v263 = vpop.f32.mrf.mxu0
    %v264 = vadd.f32 %v217, %v263
    %265 = vdwg.mxu0
    %266 = vmatpush.msra.mxu0 %v212
    %267 = vmatpush.msra.mxu0 %v208
    %268 = vmatpush.msra.mxu0 %v204
    %269 = vmatpush.msra.mxu0 %v200
    %270 = vmatpush.msra.mxu0 %v196
    %271 = vmatpush.msra.mxu0 %v192
    %272 = vmatpush.msra.mxu0 %v188
    %273 = vmatpush.msra.mxu0 %v184
    %274 = vmatpush.msra.mxu0 %v180
    %275 = vmatpush.msra.mxu0 %v176
    %276 = vmatpush.msra.mxu0 %v172
    %277 = vmatpush.msra.mxu0 %v168
    %278 = vmatpush.msra.mxu0 %v164
    %279 = vmatpush.msra.mxu0 %v160
    %280 = vmatpush.msra.mxu0 %v156
    %281 = vmatpush.msra.mxu0 %v152
    %282 = vmatmul.f32.gmra.mxu0 %v143
    %v283 = vpop.f32.mrf.mxu0
    %v284 = vadd.f32 %v218, %v283
    %285 = vmatmul.f32.gmra.mxu0 %v144
    %v286 = vpop.f32.mrf.mxu0
    %v287 = vadd.f32 %v218, %v286
    %288 = vmatmul.f32.gmra.mxu0 %v145
    %v289 = vpop.f32.mrf.mxu0
    %v290 = vadd.f32 %v218, %v289
    %291 = vmatmul.f32.gmra.mxu0 %v146
    %v292 = vpop.f32.mrf.mxu0
    %v293 = vadd.f32 %v218, %v292
    %294 = vmatmul.f32.gmra.mxu0 %v147
    %v295 = vpop.f32.mrf.mxu0
    %v296 = vadd.f32 %v218, %v295
    %297 = vmatmul.f32.gmra.mxu0 %v148
    %v298 = vpop.f32.mrf.mxu0
    %v299 = vadd.f32 %v218, %v298
    %300 = vmatmul.f32.gmra.mxu0 %v149
    %v301 = vpop.f32.mrf.mxu0
    %v302 = vadd.f32 %v218, %v301
    %303 = vmatmul.f32.gmra.mxu0 %v150
    %v304 = vpop.f32.mrf.mxu0
    %v305 = vadd.f32 %v218, %v304
    %306 = vdwg.mxu0
    %307 = vmatpush.msra.mxu0 %v213
    %308 = vmatpush.msra.mxu0 %v209
    %309 = vmatpush.msra.mxu0 %v205
    %310 = vmatpush.msra.mxu0 %v201
    %311 = vmatpush.msra.mxu0 %v197
    %312 = vmatpush.msra.mxu0 %v193
    %313 = vmatpush.msra.mxu0 %v189
    %314 = vmatpush.msra.mxu0 %v185
    %315 = vmatpush.msra.mxu0 %v181
    %316 = vmatpush.msra.mxu0 %v177
    %317 = vmatpush.msra.mxu0 %v173
    %318 = vmatpush.msra.mxu0 %v169
    %319 = vmatpush.msra.mxu0 %v165
    %320 = vmatpush.msra.mxu0 %v161
    %321 = vmatpush.msra.mxu0 %v157
    %322 = vmatpush.msra.mxu0 %v153
    %323 = vmatmul.f32.gmra.mxu0 %v143
    %v324 = vpop.f32.mrf.mxu0
    %v325 = vadd.f32 %v219, %v324
    %326 = vmatmul.f32.gmra.mxu0 %v144
    %v327 = vpop.f32.mrf.mxu0
    %v328 = vadd.f32 %v219, %v327
    %329 = vmatmul.f32.gmra.mxu0 %v145
    %v330 = vpop.f32.mrf.mxu0
    %v331 = vadd.f32 %v219, %v330
    %332 = vmatmul.f32.gmra.mxu0 %v146
    %v333 = vpop.f32.mrf.mxu0
    %v334 = vadd.f32 %v219, %v333
    %335 = vmatmul.f32.gmra.mxu0 %v147
    %v336 = vpop.f32.mrf.mxu0
    %v337 = vadd.f32 %v219, %v336
    %338 = vmatmul.f32.gmra.mxu0 %v148
    %v339 = vpop.f32.mrf.mxu0
    %v340 = vadd.f32 %v219, %v339
    %341 = vmatmul.f32.gmra.mxu0 %v149
    %v342 = vpop.f32.mrf.mxu0
    %v343 = vadd.f32 %v219, %v342
    %344 = vmatmul.f32.gmra.mxu0 %v150
    %v345 = vpop.f32.mrf.mxu0
    %v346 = vadd.f32 %v219, %v345
    %347 = vdwg.mxu0
    %348 = vmatpush.msra.mxu0 %v214
    %349 = vmatpush.msra.mxu0 %v210
    %350 = vmatpush.msra.mxu0 %v206
    %351 = vmatpush.msra.mxu0 %v202
    %352 = vmatpush.msra.mxu0 %v198
    %353 = vmatpush.msra.mxu0 %v194
    %354 = vmatpush.msra.mxu0 %v190
    %355 = vmatpush.msra.mxu0 %v186
    %356 = vmatpush.msra.mxu0 %v182
    %357 = vmatpush.msra.mxu0 %v178
    %358 = vmatpush.msra.mxu0 %v174
    %359 = vmatpush.msra.mxu0 %v170
    %360 = vmatpush.msra.mxu0 %v166
    %361 = vmatpush.msra.mxu0 %v162
    %362 = vmatpush.msra.mxu0 %v158
    %363 = vmatpush.msra.mxu0 %v154
    %364 = vmatmul.f32.gmra.mxu0 %v143
    %v365 = vpop.f32.mrf.mxu0
    %v366 = vadd.f32 %v220, %v365
    %367 = vmatmul.f32.gmra.mxu0 %v144
    %v368 = vpop.f32.mrf.mxu0
    %v369 = vadd.f32 %v220, %v368
    %370 = vmatmul.f32.gmra.mxu0 %v145
    %v371 = vpop.f32.mrf.mxu0
    %v372 = vadd.f32 %v220, %v371
    %373 = vmatmul.f32.gmra.mxu0 %v146
    %v374 = vpop.f32.mrf.mxu0
    %v375 = vadd.f32 %v220, %v374
    %376 = vmatmul.f32.gmra.mxu0 %v147
    %v377 = vpop.f32.mrf.mxu0
    %v378 = vadd.f32 %v220, %v377
    %379 = vmatmul.f32.gmra.mxu0 %v148
    %v380 = vpop.f32.mrf.mxu0
    %v381 = vadd.f32 %v220, %v380
    %382 = vmatmul.f32.gmra.mxu0 %v149
    %v383 = vpop.f32.mrf.mxu0
    %v384 = vadd.f32 %v220, %v383
    %385 = vmatmul.f32.gmra.mxu0 %v150
    %v386 = vpop.f32.mrf.mxu0
    %v387 = vadd.f32 %v220, %v386
    %388 = vdwg.mxu0
    %389 = vst [vmem:[#allocation3] sm:$0xff] %v243
    %390 = vst [vmem:[#allocation3 + $0x8] sm:$0xff] %v284
    %391 = vst [vmem:[#allocation3 + $0x10] sm:$0xff] %v325
    %392 = vst [vmem:[#allocation3 + $0x18] sm:$0xff] %v366
    %393 = vst [vmem:[#allocation3 + $0x20] sm:$0xff] %v246
    %394 = vst [vmem:[#allocation3 + $0x28] sm:$0xff] %v287
    %395 = vst [vmem:[#allocation3 + $0x30] sm:$0xff] %v328
    %396 = vst [vmem:[#allocation3 + $0x38] sm:$0xff] %v369
    %397 = vst [vmem:[#allocation3 + $0x40] sm:$0xff] %v249
    %398 = vst [vmem:[#allocation3 + $0x48] sm:$0xff] %v290
    %399 = vst [vmem:[#allocation3 + $0x50] sm:$0xff] %v331
    %400 = vst [vmem:[#allocation3 + $0x58] sm:$0xff] %v372
    %401 = vst [vmem:[#allocation3 + $0x60] sm:$0xff] %v252
    %402 = vst [vmem:[#allocation3 + $0x68] sm:$0xff] %v293
    %403 = vst [vmem:[#allocation3 + $0x70] sm:$0xff] %v334
    %404 = vst [vmem:[#allocation3 + $0x78] sm:$0xff] %v375
    %405 = vst [vmem:[#allocation3 + $0x80] sm:$0xff] %v255
    %406 = vst [vmem:[#allocation3 + $0x88] sm:$0xff] %v296
    %407 = vst [vmem:[#allocation3 + $0x90] sm:$0xff] %v337
    %408 = vst [vmem:[#allocation3 + $0x98] sm:$0xff] %v378
    %409 = vst [vmem:[#allocation3 + $0xa0] sm:$0xff] %v258
    %410 = vst [vmem:[#allocation3 + $0xa8] sm:$0xff] %v299
    %411 = vst [vmem:[#allocation3 + $0xb0] sm:$0xff] %v340
    %412 = vst [vmem:[#allocation3 + $0xb8] sm:$0xff] %v381
    %413 = vst [vmem:[#allocation3 + $0xc0] sm:$0xff] %v261
    %414 = vst [vmem:[#allocation3 + $0xc8] sm:$0xff] %v302
    %415 = vst [vmem:[#allocation3 + $0xd0] sm:$0xff] %v343
    %416 = vst [vmem:[#allocation3 + $0xd8] sm:$0xff] %v384
    %417 = vst [vmem:[#allocation3 + $0xe0] sm:$0xff] %v264
    %418 = vst [vmem:[#allocation3 + $0xe8] sm:$0xff] %v305
    %419 = vst [vmem:[#allocation3 + $0xf0] sm:$0xff] %v346
    %420 = vst [vmem:[#allocation3 + $0xf8] sm:$0xff] %v387
    %v421 = vld [vmem:[#allocation9] sm:$0xff]
    %v422 = vld [vmem:[#allocation9 + $0x8] sm:$0xff]
    %v423 = vld [vmem:[#allocation9 + $0x10] sm:$0xff]
    %v424 = vld [vmem:[#allocation9 + $0x18] sm:$0xff]
    %v425 = vld [vmem:[#allocation9 + $0x20] sm:$0xff]
    %v426 = vld [vmem:[#allocation9 + $0x28] sm:$0xff]
    %v427 = vld [vmem:[#allocation9 + $0x30] sm:$0xff]
    %v428 = vld [vmem:[#allocation9 + $0x38] sm:$0xff]
    %v429 = vld [vmem:[#allocation9 + $0x40] sm:$0xff]
    %v430 = vld [vmem:[#allocation9 + $0x48] sm:$0xff]
    %v431 = vld [vmem:[#allocation9 + $0x50] sm:$0xff]
    %v432 = vld [vmem:[#allocation9 + $0x58] sm:$0xff]
    %v433 = vld [vmem:[#allocation9 + $0x60] sm:$0xff]
    %v434 = vld [vmem:[#allocation9 + $0x68] sm:$0xff]
    %v435 = vld [vmem:[#allocation9 + $0x70] sm:$0xff]
    %v436 = vld [vmem:[#allocation9 + $0x78] sm:$0xff]
    %v437 = vld [vmem:[#allocation9 + $0x80] sm:$0xff]
    %v438 = vld [vmem:[#allocation9 + $0x88] sm:$0xff]
    %v439 = vld [vmem:[#allocation9 + $0x90] sm:$0xff]
    %v440 = vld [vmem:[#allocation9 + $0x98] sm:$0xff]
    %v441 = vld [vmem:[#allocation9 + $0xa0] sm:$0xff]
    %v442 = vld [vmem:[#allocation9 + $0xa8] sm:$0xff]
    %v443 = vld [vmem:[#allocation9 + $0xb0] sm:$0xff]
    %v444 = vld [vmem:[#allocation9 + $0xb8] sm:$0xff]
    %v445 = vld [vmem:[#allocation9 + $0xc0] sm:$0xff]
    %v446 = vld [vmem:[#allocation9 + $0xc8] sm:$0xff]
    %v447 = vld [vmem:[#allocation9 + $0xd0] sm:$0xff]
    %v448 = vld [vmem:[#allocation9 + $0xd8] sm:$0xff]
    %v449 = vld [vmem:[#allocation9 + $0xe0] sm:$0xff]
    %v450 = vld [vmem:[#allocation9 + $0xe8] sm:$0xff]
    %v451 = vld [vmem:[#allocation9 + $0xf0] sm:$0xff]
    %v452 = vld [vmem:[#allocation9 + $0xf8] sm:$0xff]
    %v453 = vld [vmem:[#allocation9 + $0x100] sm:$0xff]
    %v454 = vld [vmem:[#allocation9 + $0x108] sm:$0xff]
    %v455 = vld [vmem:[#allocation9 + $0x110] sm:$0xff]
    %v456 = vld [vmem:[#allocation9 + $0x118] sm:$0xff]
    %v457 = vld [vmem:[#allocation9 + $0x120] sm:$0xff]
    %v458 = vld [vmem:[#allocation9 + $0x128] sm:$0xff]
    %v459 = vld [vmem:[#allocation9 + $0x130] sm:$0xff]
    %v460 = vld [vmem:[#allocation9 + $0x138] sm:$0xff]
    %v461 = vld [vmem:[#allocation9 + $0x140] sm:$0xff]
    %v462 = vld [vmem:[#allocation9 + $0x148] sm:$0xff]
    %v463 = vld [vmem:[#allocation9 + $0x150] sm:$0xff]
    %v464 = vld [vmem:[#allocation9 + $0x158] sm:$0xff]
    %v465 = vld [vmem:[#allocation9 + $0x160] sm:$0xff]
    %v466 = vld [vmem:[#allocation9 + $0x168] sm:$0xff]
    %v467 = vld [vmem:[#allocation9 + $0x170] sm:$0xff]
    %v468 = vld [vmem:[#allocation9 + $0x178] sm:$0xff]
    %v469 = vld [vmem:[#allocation9 + $0x180] sm:$0xff]
    %v470 = vld [vmem:[#allocation9 + $0x188] sm:$0xff]
    %v471 = vld [vmem:[#allocation9 + $0x190] sm:$0xff]
    %v472 = vld [vmem:[#allocation9 + $0x198] sm:$0xff]
    %v473 = vld [vmem:[#allocation9 + $0x1a0] sm:$0xff]
    %v474 = vld [vmem:[#allocation9 + $0x1a8] sm:$0xff]
    %v475 = vld [vmem:[#allocation9 + $0x1b0] sm:$0xff]
    %v476 = vld [vmem:[#allocation9 + $0x1b8] sm:$0xff]
    %v477 = vld [vmem:[#allocation9 + $0x1c0] sm:$0xff]
    %v478 = vld [vmem:[#allocation9 + $0x1c8] sm:$0xff]
    %v479 = vld [vmem:[#allocation9 + $0x1d0] sm:$0xff]
    %v480 = vld [vmem:[#allocation9 + $0x1d8] sm:$0xff]
    %v481 = vld [vmem:[#allocation9 + $0x1e0] sm:$0xff]
    %v482 = vld [vmem:[#allocation9 + $0x1e8] sm:$0xff]
    %v483 = vld [vmem:[#allocation9 + $0x1f0] sm:$0xff]
    %v484 = vld [vmem:[#allocation9 + $0x1f8] sm:$0xff]
    %v485 = vld [vmem:[#allocation13] sm:$0xff]
    %v486 = vld [vmem:[#allocation15] sm:$0xff]
    %v487 = vld [vmem:[#allocation3] sm:$0xff]
    %v488 = vld [vmem:[#allocation3 + $0x8] sm:$0xff]
    %v489 = vld [vmem:[#allocation3 + $0x10] sm:$0xff]
    %v490 = vld [vmem:[#allocation3 + $0x18] sm:$0xff]
    %491 = vmatpush.msra.mxu0 %v481
    %492 = vmatpush.msra.mxu0 %v477
    %493 = vmatpush.msra.mxu0 %v473
    %494 = vmatpush.msra.mxu0 %v469
    %495 = vmatpush.msra.mxu0 %v465
    %496 = vmatpush.msra.mxu0 %v461
    %497 = vmatpush.msra.mxu0 %v457
    %498 = vmatpush.msra.mxu0 %v453
    %499 = vmatpush.msra.mxu0 %v449
    %500 = vmatpush.msra.mxu0 %v445
    %501 = vmatpush.msra.mxu0 %v441
    %502 = vmatpush.msra.mxu0 %v437
    %503 = vmatpush.msra.mxu0 %v433
    %504 = vmatpush.msra.mxu0 %v429
    %505 = vmatpush.msra.mxu0 %v425
    %506 = vmatpush.msra.mxu0 %v421
    %507 = vmatmul.f32.gmra.mxu0 %v485
    %v508 = vpop.f32.mrf.mxu0
    %v509 = vadd.f32 0.0, %v508
    %510 = vdwg.mxu0
    %511 = vmatpush.msra.mxu0 %v482
    %512 = vmatpush.msra.mxu0 %v478
    %513 = vmatpush.msra.mxu0 %v474
    %514 = vmatpush.msra.mxu0 %v470
    %515 = vmatpush.msra.mxu0 %v466
    %516 = vmatpush.msra.mxu0 %v462
    %517 = vmatpush.msra.mxu0 %v458
    %518 = vmatpush.msra.mxu0 %v454
    %519 = vmatpush.msra.mxu0 %v450
    %520 = vmatpush.msra.mxu0 %v446
    %521 = vmatpush.msra.mxu0 %v442
    %522 = vmatpush.msra.mxu0 %v438
    %523 = vmatpush.msra.mxu0 %v434
    %524 = vmatpush.msra.mxu0 %v430
    %525 = vmatpush.msra.mxu0 %v426
    %526 = vmatpush.msra.mxu0 %v422
    %527 = vmatmul.f32.gmra.mxu0 %v485
    %v528 = vpop.f32.mrf.mxu0
    %v529 = vadd.f32 0.0, %v528
    %530 = vdwg.mxu0
    %531 = vmatpush.msra.mxu0 %v483
    %532 = vmatpush.msra.mxu0 %v479
    %533 = vmatpush.msra.mxu0 %v475
    %534 = vmatpush.msra.mxu0 %v471
    %535 = vmatpush.msra.mxu0 %v467
    %536 = vmatpush.msra.mxu0 %v463
    %537 = vmatpush.msra.mxu0 %v459
    %538 = vmatpush.msra.mxu0 %v455
    %539 = vmatpush.msra.mxu0 %v451
    %540 = vmatpush.msra.mxu0 %v447
    %541 = vmatpush.msra.mxu0 %v443
    %542 = vmatpush.msra.mxu0 %v439
    %543 = vmatpush.msra.mxu0 %v435
    %544 = vmatpush.msra.mxu0 %v431
    %545 = vmatpush.msra.mxu0 %v427
    %546 = vmatpush.msra.mxu0 %v423
    %547 = vmatmul.f32.gmra.mxu0 %v485
    %v548 = vpop.f32.mrf.mxu0
    %v549 = vadd.f32 0.0, %v548
    %550 = vdwg.mxu0
    %551 = vmatpush.msra.mxu0 %v484
    %552 = vmatpush.msra.mxu0 %v480
    %553 = vmatpush.msra.mxu0 %v476
    %554 = vmatpush.msra.mxu0 %v472
    %555 = vmatpush.msra.mxu0 %v468
    %556 = vmatpush.msra.mxu0 %v464
    %557 = vmatpush.msra.mxu0 %v460
    %558 = vmatpush.msra.mxu0 %v456
    %559 = vmatpush.msra.mxu0 %v452
    %560 = vmatpush.msra.mxu0 %v448
    %561 = vmatpush.msra.mxu0 %v444
    %562 = vmatpush.msra.mxu0 %v440
    %563 = vmatpush.msra.mxu0 %v436
    %564 = vmatpush.msra.mxu0 %v432
    %565 = vmatpush.msra.mxu0 %v428
    %566 = vmatpush.msra.mxu0 %v424
    %567 = vmatmul.f32.gmra.mxu0 %v485
    %v568 = vpop.f32.mrf.mxu0
    %v569 = vadd.f32 0.0, %v568
    %570 = vdwg.mxu0
    %v571 = vadd.f32 %v487, %v509
    %v572 = vadd.f32 %v488, %v529
    %v573 = vadd.f32 %v489, %v549
    %v574 = vadd.f32 %v490, %v569
    %v575 = vxor.u32 %v571, 2147483648
    %v576 = vmul.f32 %v575, 1.442695
    %v577 = vpow.pop %v576
    %v578 = vadd.f32 %v577, 1.0
    %v579 = vrcp.pop %v578
    %v580 = vmul.f32 %v578, %v579
    %v581 = vsub.f32 1.0, %v580
    %v582 = vmul.f32 %v579, %v581
    %v583 = vadd.f32 %v579, %v582
    %vm584 = vweird.f32 %v578
    %vm585 = vweird.f32 %v579
    %vm586 = vmor %vm584, %vm585
    %v587 = vsel %vm586, %v579, %v583
    %v588 = vand.u32 2147483647, %v578
    %vm589 = vcmp.eq.f32.partialorder %v588, 8.507059e+37
    %v590 = vand.u32 %v578, 2147483648
    %v591 = vor.u32 1.1754944e-38, %v590
    %v592 = vsel %vm589, %v591, %v587
    %v593 = vmul.f32 1.0, %v592
    %v594 = vxor.u32 %v572, 2147483648
    %v595 = vmul.f32 %v594, 1.442695
    %v596 = vpow.pop %v595
    %v597 = vadd.f32 %v596, 1.0
    %v598 = vrcp.pop %v597
    %v599 = vmul.f32 %v597, %v598
    %v600 = vsub.f32 1.0, %v599
    %v601 = vmul.f32 %v598, %v600
    %v602 = vadd.f32 %v598, %v601
    %vm603 = vweird.f32 %v597
    %vm604 = vweird.f32 %v598
    %vm605 = vmor %vm603, %vm604
    %v606 = vsel %vm605, %v598, %v602
    %v607 = vand.u32 2147483647, %v597
    %vm608 = vcmp.eq.f32.partialorder %v607, 8.507059e+37
    %v609 = vand.u32 %v597, 2147483648
    %v610 = vor.u32 1.1754944e-38, %v609
    %v611 = vsel %vm608, %v610, %v606
    %v612 = vmul.f32 1.0, %v611
    %v613 = vtanh.pop %v573
    %v614 = vxor.u32 %v574, 2147483648
    %v615 = vmul.f32 %v614, 1.442695
    %v616 = vpow.pop %v615
    %v617 = vadd.f32 %v616, 1.0
    %v618 = vrcp.pop %v617
    %v619 = vmul.f32 %v617, %v618
    %v620 = vsub.f32 1.0, %v619
    %v621 = vmul.f32 %v618, %v620
    %v622 = vadd.f32 %v618, %v621
    %vm623 = vweird.f32 %v617
    %vm624 = vweird.f32 %v618
    %vm625 = vmor %vm623, %vm624
    %v626 = vsel %vm625, %v618, %v622
    %v627 = vand.u32 2147483647, %v617
    %vm628 = vcmp.eq.f32.partialorder %v627, 8.507059e+37
    %v629 = vand.u32 %v617, 2147483648
    %v630 = vor.u32 1.1754944e-38, %v629
    %v631 = vsel %vm628, %v630, %v626
    %v632 = vmul.f32 1.0, %v631
    %v633 = vmul.f32 %v612, %v486
    %v634 = vmul.f32 %v593, %v613
    %v635 = vadd.f32 %v633, %v634
    %v636 = vtanh.pop %v635
    %v637 = vmul.f32 %v632, %v636
    %638 = vst [vmem:[#allocation2] sm:$0xff] %v637
    %s639 = scalar_lea.vmem [#allocation3], 32
    %v640 = vld [vmem:[%s639] sm:$0xff]
    %v641 = vld [vmem:[%s639 + $0x8] sm:$0xff]
    %v642 = vld [vmem:[%s639 + $0x10] sm:$0xff]
    %v643 = vld [vmem:[%s639 + $0x18] sm:$0xff]
    %644 = vmatpush.msra.mxu0 %v481
    %645 = vmatpush.msra.mxu0 %v477
    %646 = vmatpush.msra.mxu0 %v473
    %647 = vmatpush.msra.mxu0 %v469
    %648 = vmatpush.msra.mxu0 %v465
    %649 = vmatpush.msra.mxu0 %v461
    %650 = vmatpush.msra.mxu0 %v457
    %651 = vmatpush.msra.mxu0 %v453
    %652 = vmatpush.msra.mxu0 %v449
    %653 = vmatpush.msra.mxu0 %v445
    %654 = vmatpush.msra.mxu0 %v441
    %655 = vmatpush.msra.mxu0 %v437
    %656 = vmatpush.msra.mxu0 %v433
    %657 = vmatpush.msra.mxu0 %v429
    %658 = vmatpush.msra.mxu0 %v425
    %659 = vmatpush.msra.mxu0 %v421
    %660 = vmatmul.f32.gmra.mxu0 %v637
    %v661 = vpop.f32.mrf.mxu0
    %v662 = vadd.f32 0.0, %v661
    %663 = vdwg.mxu0
    %664 = vmatpush.msra.mxu0 %v482
    %665 = vmatpush.msra.mxu0 %v478
    %666 = vmatpush.msra.mxu0 %v474
    %667 = vmatpush.msra.mxu0 %v470
    %668 = vmatpush.msra.mxu0 %v466
    %669 = vmatpush.msra.mxu0 %v462
    %670 = vmatpush.msra.mxu0 %v458
    %671 = vmatpush.msra.mxu0 %v454
    %672 = vmatpush.msra.mxu0 %v450
    %673 = vmatpush.msra.mxu0 %v446
    %674 = vmatpush.msra.mxu0 %v442
    %675 = vmatpush.msra.mxu0 %v438
    %676 = vmatpush.msra.mxu0 %v434
    %677 = vmatpush.msra.mxu0 %v430
    %678 = vmatpush.msra.mxu0 %v426
    %679 = vmatpush.msra.mxu0 %v422
    %680 = vmatmul.f32.gmra.mxu0 %v637
    %v681 = vpop.f32.mrf.mxu0
    %v682 = vadd.f32 0.0, %v681
    %683 = vdwg.mxu0
    %684 = vmatpush.msra.mxu0 %v483
    %685 = vmatpush.msra.mxu0 %v479
    %686 = vmatpush.msra.mxu0 %v475
    %687 = vmatpush.msra.mxu0 %v471
    %688 = vmatpush.msra.mxu0 %v467
    %689 = vmatpush.msra.mxu0 %v463
    %690 = vmatpush.msra.mxu0 %v459
    %691 = vmatpush.msra.mxu0 %v455
    %692 = vmatpush.msra.mxu0 %v451
    %693 = vmatpush.msra.mxu0 %v447
    %694 = vmatpush.msra.mxu0 %v443
    %695 = vmatpush.msra.mxu0 %v439
    %696 = vmatpush.msra.mxu0 %v435
    %697 = vmatpush.msra.mxu0 %v431
    %698 = vmatpush.msra.mxu0 %v427
    %699 = vmatpush.msra.mxu0 %v423
    %700 = vmatmul.f32.gmra.mxu0 %v637
    %v701 = vpop.f32.mrf.mxu0
    %v702 = vadd.f32 0.0, %v701
    %703 = vdwg.mxu0
    %704 = vmatpush.msra.mxu0 %v484
    %705 = vmatpush.msra.mxu0 %v480
    %706 = vmatpush.msra.mxu0 %v476
    %707 = vmatpush.msra.mxu0 %v472
    %708 = vmatpush.msra.mxu0 %v468
    %709 = vmatpush.msra.mxu0 %v464
    %710 = vmatpush.msra.mxu0 %v460
    %711 = vmatpush.msra.mxu0 %v456
    %712 = vmatpush.msra.mxu0 %v452
    %713 = vmatpush.msra.mxu0 %v448
    %714 = vmatpush.msra.mxu0 %v444
    %715 = vmatpush.msra.mxu0 %v440
    %716 = vmatpush.msra.mxu0 %v436
    %717 = vmatpush.msra.mxu0 %v432
    %718 = vmatpush.msra.mxu0 %v428
    %719 = vmatpush.msra.mxu0 %v424
    %720 = vmatmul.f32.gmra.mxu0 %v637
    %v721 = vpop.f32.mrf.mxu0
    %v722 = vadd.f32 0.0, %v721
    %723 = vdwg.mxu0
    %v724 = vadd.f32 %v640, %v662
    %v725 = vadd.f32 %v641, %v682
    %v726 = vadd.f32 %v642, %v702
    %v727 = vadd.f32 %v643, %v722
    %v728 = vxor.u32 %v724, 2147483648
    %v729 = vmul.f32 %v728, 1.442695
    %v730 = vpow.pop %v729
    %v731 = vadd.f32 %v730, 1.0
    %v732 = vrcp.pop %v731
    %v733 = vmul.f32 %v731, %v732
    %v734 = vsub.f32 1.0, %v733
    %v735 = vmul.f32 %v732, %v734
    %v736 = vadd.f32 %v732, %v735
    %vm737 = vweird.f32 %v731
    %vm738 = vweird.f32 %v732
    %vm739 = vmor %vm737, %vm738
    %v740 = vsel %vm739, %v732, %v736
    %v741 = vand.u32 2147483647, %v731
    %vm742 = vcmp.eq.f32.partialorder %v741, 8.507059e+37
    %v743 = vand.u32 %v731, 2147483648
    %v744 = vor.u32 1.1754944e-38, %v743
    %v745 = vsel %vm742, %v744, %v740
    %v746 = vmul.f32 1.0, %v745
    %v747 = vxor.u32 %v725, 2147483648
    %v748 = vmul.f32 %v747, 1.442695
    %v749 = vpow.pop %v748
    %v750 = vadd.f32 %v749, 1.0
    %v751 = vrcp.pop %v750
    %v752 = vmul.f32 %v750, %v751
    %v753 = vsub.f32 1.0, %v752
    %v754 = vmul.f32 %v751, %v753
    %v755 = vadd.f32 %v751, %v754
    %vm756 = vweird.f32 %v750
    %vm757 = vweird.f32 %v751
    %vm758 = vmor %vm756, %vm757
    %v759 = vsel %vm758, %v751, %v755
    %v760 = vand.u32 2147483647, %v750
    %vm761 = vcmp.eq.f32.partialorder %v760, 8.507059e+37
    %v762 = vand.u32 %v750, 2147483648
    %v763 = vor.u32 1.1754944e-38, %v762
    %v764 = vsel %vm761, %v763, %v759
    %v765 = vmul.f32 1.0, %v764
    %v766 = vtanh.pop %v726
    %v767 = vxor.u32 %v727, 2147483648
    %v768 = vmul.f32 %v767, 1.442695
    %v769 = vpow.pop %v768
    %v770 = vadd.f32 %v769, 1.0
    %v771 = vrcp.pop %v770
    %v772 = vmul.f32 %v770, %v771
    %v773 = vsub.f32 1.0, %v772
    %v774 = vmul.f32 %v771, %v773
    %v775 = vadd.f32 %v771, %v774
    %vm776 = vweird.f32 %v770
    %vm777 = vweird.f32 %v771
    %vm778 = vmor %vm776, %vm777
    %v779 = vsel %vm778, %v771, %v775
    %v780 = vand.u32 2147483647, %v770
    %vm781 = vcmp.eq.f32.partialorder %v780, 8.507059e+37
    %v782 = vand.u32 %v770, 2147483648
    %v783 = vor.u32 1.1754944e-38, %v782
    %v784 = vsel %vm781, %v783, %v779
    %v785 = vmul.f32 1.0, %v784
    %v786 = vmul.f32 %v765, %v635
    %v787 = vmul.f32 %v746, %v766
    %v788 = vadd.f32 %v786, %v787
    %v789 = vtanh.pop %v788
    %v790 = vmul.f32 %v785, %v789
    %s791 = scalar_lea.vmem [#allocation2], 8
    %792 = vst [vmem:[%s791] sm:$0xff] %v790
    %s793 = scalar_lea.vmem [#allocation3], 64
    %v794 = vld [vmem:[%s793] sm:$0xff]
    %v795 = vld [vmem:[%s793 + $0x8] sm:$0xff]
    %v796 = vld [vmem:[%s793 + $0x10] sm:$0xff]
    %v797 = vld [vmem:[%s793 + $0x18] sm:$0xff]
    %798 = vmatpush.msra.mxu0 %v481
    %799 = vmatpush.msra.mxu0 %v477
    %800 = vmatpush.msra.mxu0 %v473
    %801 = vmatpush.msra.mxu0 %v469
    %802 = vmatpush.msra.mxu0 %v465
    %803 = vmatpush.msra.mxu0 %v461
    %804 = vmatpush.msra.mxu0 %v457
    %805 = vmatpush.msra.mxu0 %v453
    %806 = vmatpush.msra.mxu0 %v449
    %807 = vmatpush.msra.mxu0 %v445
    %808 = vmatpush.msra.mxu0 %v441
    %809 = vmatpush.msra.mxu0 %v437
    %810 = vmatpush.msra.mxu0 %v433
    %811 = vmatpush.msra.mxu0 %v429
    %812 = vmatpush.msra.mxu0 %v425
    %813 = vmatpush.msra.mxu0 %v421
    %814 = vmatmul.f32.gmra.mxu0 %v790
    %v815 = vpop.f32.mrf.mxu0
    %v816 = vadd.f32 0.0, %v815
    %817 = vdwg.mxu0
    %818 = vmatpush.msra.mxu0 %v482
    %819 = vmatpush.msra.mxu0 %v478
    %820 = vmatpush.msra.mxu0 %v474
    %821 = vmatpush.msra.mxu0 %v470
    %822 = vmatpush.msra.mxu0 %v466
    %823 = vmatpush.msra.mxu0 %v462
    %824 = vmatpush.msra.mxu0 %v458
    %825 = vmatpush.msra.mxu0 %v454
    %826 = vmatpush.msra.mxu0 %v450
    %827 = vmatpush.msra.mxu0 %v446
    %828 = vmatpush.msra.mxu0 %v442
    %829 = vmatpush.msra.mxu0 %v438
    %830 = vmatpush.msra.mxu0 %v434
    %831 = vmatpush.msra.mxu0 %v430
    %832 = vmatpush.msra.mxu0 %v426
    %833 = vmatpush.msra.mxu0 %v422
    %834 = vmatmul.f32.gmra.mxu0 %v790
    %v835 = vpop.f32.mrf.mxu0
    %v836 = vadd.f32 0.0, %v835
    %837 = vdwg.mxu0
    %838 = vmatpush.msra.mxu0 %v483
    %839 = vmatpush.msra.mxu0 %v479
    %840 = vmatpush.msra.mxu0 %v475
    %841 = vmatpush.msra.mxu0 %v471
    %842 = vmatpush.msra.mxu0 %v467
    %843 = vmatpush.msra.mxu0 %v463
    %844 = vmatpush.msra.mxu0 %v459
    %845 = vmatpush.msra.mxu0 %v455
    %846 = vmatpush.msra.mxu0 %v451
    %847 = vmatpush.msra.mxu0 %v447
    %848 = vmatpush.msra.mxu0 %v443
    %849 = vmatpush.msra.mxu0 %v439
    %850 = vmatpush.msra.mxu0 %v435
    %851 = vmatpush.msra.mxu0 %v431
    %852 = vmatpush.msra.mxu0 %v427
    %853 = vmatpush.msra.mxu0 %v423
    %854 = vmatmul.f32.gmra.mxu0 %v790
    %v855 = vpop.f32.mrf.mxu0
    %v856 = vadd.f32 0.0, %v855
    %857 = vdwg.mxu0
    %858 = vmatpush.msra.mxu0 %v484
    %859 = vmatpush.msra.mxu0 %v480
    %860 = vmatpush.msra.mxu0 %v476
    %861 = vmatpush.msra.mxu0 %v472
    %862 = vmatpush.msra.mxu0 %v468
    %863 = vmatpush.msra.mxu0 %v464
    %864 = vmatpush.msra.mxu0 %v460
    %865 = vmatpush.msra.mxu0 %v456
    %866 = vmatpush.msra.mxu0 %v452
    %867 = vmatpush.msra.mxu0 %v448
    %868 = vmatpush.msra.mxu0 %v444
    %869 = vmatpush.msra.mxu0 %v440
    %870 = vmatpush.msra.mxu0 %v436
    %871 = vmatpush.msra.mxu0 %v432
    %872 = vmatpush.msra.mxu0 %v428
    %873 = vmatpush.msra.mxu0 %v424
    %874 = vmatmul.f32.gmra.mxu0 %v790
    %v875 = vpop.f32.mrf.mxu0
    %v876 = vadd.f32 0.0, %v875
    %877 = vdwg.mxu0
    %v878 = vadd.f32 %v794, %v816
    %v879 = vadd.f32 %v795, %v836
    %v880 = vadd.f32 %v796, %v856
    %v881 = vadd.f32 %v797, %v876
    %v882 = vxor.u32 %v878, 2147483648
    %v883 = vmul.f32 %v882, 1.442695
    %v884 = vpow.pop %v883
    %v885 = vadd.f32 %v884, 1.0
    %v886 = vrcp.pop %v885
    %v887 = vmul.f32 %v885, %v886
    %v888 = vsub.f32 1.0, %v887
    %v889 = vmul.f32 %v886, %v888
    %v890 = vadd.f32 %v886, %v889
    %vm891 = vweird.f32 %v885
    %vm892 = vweird.f32 %v886
    %vm893 = vmor %vm891, %vm892
    %v894 = vsel %vm893, %v886, %v890
    %v895 = vand.u32 2147483647, %v885
    %vm896 = vcmp.eq.f32.partialorder %v895, 8.507059e+37
    %v897 = vand.u32 %v885, 2147483648
    %v898 = vor.u32 1.1754944e-38, %v897
    %v899 = vsel %vm896, %v898, %v894
    %v900 = vmul.f32 1.0, %v899
    %v901 = vxor.u32 %v879, 2147483648
    %v902 = vmul.f32 %v901, 1.442695
    %v903 = vpow.pop %v902
    %v904 = vadd.f32 %v903, 1.0
    %v905 = vrcp.pop %v904
    %v906 = vmul.f32 %v904, %v905
    %v907 = vsub.f32 1.0, %v906
    %v908 = vmul.f32 %v905, %v907
    %v909 = vadd.f32 %v905, %v908
    %vm910 = vweird.f32 %v904
    %vm911 = vweird.f32 %v905
    %vm912 = vmor %vm910, %vm911
    %v913 = vsel %vm912, %v905, %v909
    %v914 = vand.u32 2147483647, %v904
    %vm915 = vcmp.eq.f32.partialorder %v914, 8.507059e+37
    %v916 = vand.u32 %v904, 2147483648
    %v917 = vor.u32 1.1754944e-38, %v916
    %v918 = vsel %vm915, %v917, %v913
    %v919 = vmul.f32 1.0, %v918
    %v920 = vtanh.pop %v880
    %v921 = vxor.u32 %v881, 2147483648
    %v922 = vmul.f32 %v921, 1.442695
    %v923 = vpow.pop %v922
    %v924 = vadd.f32 %v923, 1.0
    %v925 = vrcp.pop %v924
    %v926 = vmul.f32 %v924, %v925
    %v927 = vsub.f32 1.0, %v926
    %v928 = vmul.f32 %v925, %v927
    %v929 = vadd.f32 %v925, %v928
    %vm930 = vweird.f32 %v924
    %vm931 = vweird.f32 %v925
    %vm932 = vmor %vm930, %vm931
    %v933 = vsel %vm932, %v925, %v929
    %v934 = vand.u32 2147483647, %v924
    %vm935 = vcmp.eq.f32.partialorder %v934, 8.507059e+37
    %v936 = vand.u32 %v924, 2147483648
    %v937 = vor.u32 1.1754944e-38, %v936
    %v938 = vsel %vm935, %v937, %v933
    %v939 = vmul.f32 1.0, %v938
    %v940 = vmul.f32 %v919, %v788
    %v941 = vmul.f32 %v900, %v920
    %v942 = vadd.f32 %v940, %v941
    %v943 = vtanh.pop %v942
    %v944 = vmul.f32 %v939, %v943
    %s945 = scalar_lea.vmem [#allocation2], 16
    %946 = vst [vmem:[%s945] sm:$0xff] %v944
    %s947 = scalar_lea.vmem [#allocation3], 96
    %v948 = vld [vmem:[%s947] sm:$0xff]
    %v949 = vld [vmem:[%s947 + $0x8] sm:$0xff]
    %v950 = vld [vmem:[%s947 + $0x10] sm:$0xff]
    %v951 = vld [vmem:[%s947 + $0x18] sm:$0xff]
    %952 = vmatpush.msra.mxu0 %v481
    %953 = vmatpush.msra.mxu0 %v477
    %954 = vmatpush.msra.mxu0 %v473
    %955 = vmatpush.msra.mxu0 %v469
    %956 = vmatpush.msra.mxu0 %v465
    %957 = vmatpush.msra.mxu0 %v461
    %958 = vmatpush.msra.mxu0 %v457
    %959 = vmatpush.msra.mxu0 %v453
    %960 = vmatpush.msra.mxu0 %v449
    %961 = vmatpush.msra.mxu0 %v445
    %962 = vmatpush.msra.mxu0 %v441
    %963 = vmatpush.msra.mxu0 %v437
    %964 = vmatpush.msra.mxu0 %v433
    %965 = vmatpush.msra.mxu0 %v429
    %966 = vmatpush.msra.mxu0 %v425
    %967 = vmatpush.msra.mxu0 %v421
    %968 = vmatmul.f32.gmra.mxu0 %v944
    %v969 = vpop.f32.mrf.mxu0
    %v970 = vadd.f32 0.0, %v969
    %971 = vdwg.mxu0
    %972 = vmatpush.msra.mxu0 %v482
    %973 = vmatpush.msra.mxu0 %v478
    %974 = vmatpush.msra.mxu0 %v474
    %975 = vmatpush.msra.mxu0 %v470
    %976 = vmatpush.msra.mxu0 %v466
    %977 = vmatpush.msra.mxu0 %v462
    %978 = vmatpush.msra.mxu0 %v458
    %979 = vmatpush.msra.mxu0 %v454
    %980 = vmatpush.msra.mxu0 %v450
    %981 = vmatpush.msra.mxu0 %v446
    %982 = vmatpush.msra.mxu0 %v442
    %983 = vmatpush.msra.mxu0 %v438
    %984 = vmatpush.msra.mxu0 %v434
    %985 = vmatpush.msra.mxu0 %v430
    %986 = vmatpush.msra.mxu0 %v426
    %987 = vmatpush.msra.mxu0 %v422
    %988 = vmatmul.f32.gmra.mxu0 %v944
    %v989 = vpop.f32.mrf.mxu0
    %v990 = vadd.f32 0.0, %v989
    %991 = vdwg.mxu0
    %992 = vmatpush.msra.mxu0 %v483
    %993 = vmatpush.msra.mxu0 %v479
    %994 = vmatpush.msra.mxu0 %v475
    %995 = vmatpush.msra.mxu0 %v471
    %996 = vmatpush.msra.mxu0 %v467
    %997 = vmatpush.msra.mxu0 %v463
    %998 = vmatpush.msra.mxu0 %v459
    %999 = vmatpush.msra.mxu0 %v455
    %1000 = vmatpush.msra.mxu0 %v451
    %1001 = vmatpush.msra.mxu0 %v447
    %1002 = vmatpush.msra.mxu0 %v443
    %1003 = vmatpush.msra.mxu0 %v439
    %1004 = vmatpush.msra.mxu0 %v435
    %1005 = vmatpush.msra.mxu0 %v431
    %1006 = vmatpush.msra.mxu0 %v427
    %1007 = vmatpush.msra.mxu0 %v423
    %1008 = vmatmul.f32.gmra.mxu0 %v944
    %v1009 = vpop.f32.mrf.mxu0
    %v1010 = vadd.f32 0.0, %v1009
    %1011 = vdwg.mxu0
    %1012 = vmatpush.msra.mxu0 %v484
    %1013 = vmatpush.msra.mxu0 %v480
    %1014 = vmatpush.msra.mxu0 %v476
    %1015 = vmatpush.msra.mxu0 %v472
    %1016 = vmatpush.msra.mxu0 %v468
    %1017 = vmatpush.msra.mxu0 %v464
    %1018 = vmatpush.msra.mxu0 %v460
    %1019 = vmatpush.msra.mxu0 %v456
    %1020 = vmatpush.msra.mxu0 %v452
    %1021 = vmatpush.msra.mxu0 %v448
    %1022 = vmatpush.msra.mxu0 %v444
    %1023 = vmatpush.msra.mxu0 %v440
    %1024 = vmatpush.msra.mxu0 %v436
    %1025 = vmatpush.msra.mxu0 %v432
    %1026 = vmatpush.msra.mxu0 %v428
    %1027 = vmatpush.msra.mxu0 %v424
    %1028 = vmatmul.f32.gmra.mxu0 %v944
    %v1029 = vpop.f32.mrf.mxu0
    %v1030 = vadd.f32 0.0, %v1029
    %1031 = vdwg.mxu0
    %v1032 = vadd.f32 %v948, %v970
    %v1033 = vadd.f32 %v949, %v990
    %v1034 = vadd.f32 %v950, %v1010
    %v1035 = vadd.f32 %v951, %v1030
    %v1036 = vxor.u32 %v1032, 2147483648
    %v1037 = vmul.f32 %v1036, 1.442695
    %v1038 = vpow.pop %v1037
    %v1039 = vadd.f32 %v1038, 1.0
    %v1040 = vrcp.pop %v1039
    %v1041 = vmul.f32 %v1039, %v1040
    %v1042 = vsub.f32 1.0, %v1041
    %v1043 = vmul.f32 %v1040, %v1042
    %v1044 = vadd.f32 %v1040, %v1043
    %vm1045 = vweird.f32 %v1039
    %vm1046 = vweird.f32 %v1040
    %vm1047 = vmor %vm1045, %vm1046
    %v1048 = vsel %vm1047, %v1040, %v1044
    %v1049 = vand.u32 2147483647, %v1039
    %vm1050 = vcmp.eq.f32.partialorder %v1049, 8.507059e+37
    %v1051 = vand.u32 %v1039, 2147483648
    %v1052 = vor.u32 1.1754944e-38, %v1051
    %v1053 = vsel %vm1050, %v1052, %v1048
    %v1054 = vmul.f32 1.0, %v1053
    %v1055 = vxor.u32 %v1033, 2147483648
    %v1056 = vmul.f32 %v1055, 1.442695
    %v1057 = vpow.pop %v1056
    %v1058 = vadd.f32 %v1057, 1.0
    %v1059 = vrcp.pop %v1058
    %v1060 = vmul.f32 %v1058, %v1059
    %v1061 = vsub.f32 1.0, %v1060
    %v1062 = vmul.f32 %v1059, %v1061
    %v1063 = vadd.f32 %v1059, %v1062
    %vm1064 = vweird.f32 %v1058
    %vm1065 = vweird.f32 %v1059
    %vm1066 = vmor %vm1064, %vm1065
    %v1067 = vsel %vm1066, %v1059, %v1063
    %v1068 = vand.u32 2147483647, %v1058
    %vm1069 = vcmp.eq.f32.partialorder %v1068, 8.507059e+37
    %v1070 = vand.u32 %v1058, 2147483648
    %v1071 = vor.u32 1.1754944e-38, %v1070
    %v1072 = vsel %vm1069, %v1071, %v1067
    %v1073 = vmul.f32 1.0, %v1072
    %v1074 = vtanh.pop %v1034
    %v1075 = vxor.u32 %v1035, 2147483648
    %v1076 = vmul.f32 %v1075, 1.442695
    %v1077 = vpow.pop %v1076
    %v1078 = vadd.f32 %v1077, 1.0
    %v1079 = vrcp.pop %v1078
    %v1080 = vmul.f32 %v1078, %v1079
    %v1081 = vsub.f32 1.0, %v1080
    %v1082 = vmul.f32 %v1079, %v1081
    %v1083 = vadd.f32 %v1079, %v1082
    %vm1084 = vweird.f32 %v1078
    %vm1085 = vweird.f32 %v1079
    %vm1086 = vmor %vm1084, %vm1085
    %v1087 = vsel %vm1086, %v1079, %v1083
    %v1088 = vand.u32 2147483647, %v1078
    %vm1089 = vcmp.eq.f32.partialorder %v1088, 8.507059e+37
    %v1090 = vand.u32 %v1078, 2147483648
    %v1091 = vor.u32 1.1754944e-38, %v1090
    %v1092 = vsel %vm1089, %v1091, %v1087
    %v1093 = vmul.f32 1.0, %v1092
    %v1094 = vmul.f32 %v1073, %v942
    %v1095 = vmul.f32 %v1054, %v1074
    %v1096 = vadd.f32 %v1094, %v1095
    %v1097 = vtanh.pop %v1096
    %v1098 = vmul.f32 %v1093, %v1097
    %s1099 = scalar_lea.vmem [#allocation2], 24
    %1100 = vst [vmem:[%s1099] sm:$0xff] %v1098
    %s1101 = scalar_lea.vmem [#allocation3], 128
    %v1102 = vld [vmem:[%s1101] sm:$0xff]
    %v1103 = vld [vmem:[%s1101 + $0x8] sm:$0xff]
    %v1104 = vld [vmem:[%s1101 + $0x10] sm:$0xff]
    %v1105 = vld [vmem:[%s1101 + $0x18] sm:$0xff]
    %1106 = vmatpush.msra.mxu0 %v481
    %1107 = vmatpush.msra.mxu0 %v477
    %1108 = vmatpush.msra.mxu0 %v473
    %1109 = vmatpush.msra.mxu0 %v469
    %1110 = vmatpush.msra.mxu0 %v465
    %1111 = vmatpush.msra.mxu0 %v461
    %1112 = vmatpush.msra.mxu0 %v457
    %1113 = vmatpush.msra.mxu0 %v453
    %1114 = vmatpush.msra.mxu0 %v449
    %1115 = vmatpush.msra.mxu0 %v445
    %1116 = vmatpush.msra.mxu0 %v441
    %1117 = vmatpush.msra.mxu0 %v437
    %1118 = vmatpush.msra.mxu0 %v433
    %1119 = vmatpush.msra.mxu0 %v429
    %1120 = vmatpush.msra.mxu0 %v425
    %1121 = vmatpush.msra.mxu0 %v421
    %1122 = vmatmul.f32.gmra.mxu0 %v1098
    %v1123 = vpop.f32.mrf.mxu0
    %v1124 = vadd.f32 0.0, %v1123
    %1125 = vdwg.mxu0
    %1126 = vmatpush.msra.mxu0 %v482
    %1127 = vmatpush.msra.mxu0 %v478
    %1128 = vmatpush.msra.mxu0 %v474
    %1129 = vmatpush.msra.mxu0 %v470
    %1130 = vmatpush.msra.mxu0 %v466
    %1131 = vmatpush.msra.mxu0 %v462
    %1132 = vmatpush.msra.mxu0 %v458
    %1133 = vmatpush.msra.mxu0 %v454
    %1134 = vmatpush.msra.mxu0 %v450
    %1135 = vmatpush.msra.mxu0 %v446
    %1136 = vmatpush.msra.mxu0 %v442
    %1137 = vmatpush.msra.mxu0 %v438
    %1138 = vmatpush.msra.mxu0 %v434
    %1139 = vmatpush.msra.mxu0 %v430
    %1140 = vmatpush.msra.mxu0 %v426
    %1141 = vmatpush.msra.mxu0 %v422
    %1142 = vmatmul.f32.gmra.mxu0 %v1098
    %v1143 = vpop.f32.mrf.mxu0
    %v1144 = vadd.f32 0.0, %v1143
    %1145 = vdwg.mxu0
    %1146 = vmatpush.msra.mxu0 %v483
    %1147 = vmatpush.msra.mxu0 %v479
    %1148 = vmatpush.msra.mxu0 %v475
    %1149 = vmatpush.msra.mxu0 %v471
    %1150 = vmatpush.msra.mxu0 %v467
    %1151 = vmatpush.msra.mxu0 %v463
    %1152 = vmatpush.msra.mxu0 %v459
    %1153 = vmatpush.msra.mxu0 %v455
    %1154 = vmatpush.msra.mxu0 %v451
    %1155 = vmatpush.msra.mxu0 %v447
    %1156 = vmatpush.msra.mxu0 %v443
    %1157 = vmatpush.msra.mxu0 %v439
    %1158 = vmatpush.msra.mxu0 %v435
    %1159 = vmatpush.msra.mxu0 %v431
    %1160 = vmatpush.msra.mxu0 %v427
    %1161 = vmatpush.msra.mxu0 %v423
    %1162 = vmatmul.f32.gmra.mxu0 %v1098
    %v1163 = vpop.f32.mrf.mxu0
    %v1164 = vadd.f32 0.0, %v1163
    %1165 = vdwg.mxu0
    %1166 = vmatpush.msra.mxu0 %v484
    %1167 = vmatpush.msra.mxu0 %v480
    %1168 = vmatpush.msra.mxu0 %v476
    %1169 = vmatpush.msra.mxu0 %v472
    %1170 = vmatpush.msra.mxu0 %v468
    %1171 = vmatpush.msra.mxu0 %v464
    %1172 = vmatpush.msra.mxu0 %v460
    %1173 = vmatpush.msra.mxu0 %v456
    %1174 = vmatpush.msra.mxu0 %v452
    %1175 = vmatpush.msra.mxu0 %v448
    %1176 = vmatpush.msra.mxu0 %v444
    %1177 = vmatpush.msra.mxu0 %v440
    %1178 = vmatpush.msra.mxu0 %v436
    %1179 = vmatpush.msra.mxu0 %v432
    %1180 = vmatpush.msra.mxu0 %v428
    %1181 = vmatpush.msra.mxu0 %v424
    %1182 = vmatmul.f32.gmra.mxu0 %v1098
    %v1183 = vpop.f32.mrf.mxu0
    %v1184 = vadd.f32 0.0, %v1183
    %1185 = vdwg.mxu0
    %v1186 = vadd.f32 %v1102, %v1124
    %v1187 = vadd.f32 %v1103, %v1144
    %v1188 = vadd.f32 %v1104, %v1164
    %v1189 = vadd.f32 %v1105, %v1184
    %v1190 = vxor.u32 %v1186, 2147483648
    %v1191 = vmul.f32 %v1190, 1.442695
    %v1192 = vpow.pop %v1191
    %v1193 = vadd.f32 %v1192, 1.0
    %v1194 = vrcp.pop %v1193
    %v1195 = vmul.f32 %v1193, %v1194
    %v1196 = vsub.f32 1.0, %v1195
    %v1197 = vmul.f32 %v1194, %v1196
    %v1198 = vadd.f32 %v1194, %v1197
    %vm1199 = vweird.f32 %v1193
    %vm1200 = vweird.f32 %v1194
    %vm1201 = vmor %vm1199, %vm1200
    %v1202 = vsel %vm1201, %v1194, %v1198
    %v1203 = vand.u32 2147483647, %v1193
    %vm1204 = vcmp.eq.f32.partialorder %v1203, 8.507059e+37
    %v1205 = vand.u32 %v1193, 2147483648
    %v1206 = vor.u32 1.1754944e-38, %v1205
    %v1207 = vsel %vm1204, %v1206, %v1202
    %v1208 = vmul.f32 1.0, %v1207
    %v1209 = vxor.u32 %v1187, 2147483648
    %v1210 = vmul.f32 %v1209, 1.442695
    %v1211 = vpow.pop %v1210
    %v1212 = vadd.f32 %v1211, 1.0
    %v1213 = vrcp.pop %v1212
    %v1214 = vmul.f32 %v1212, %v1213
    %v1215 = vsub.f32 1.0, %v1214
    %v1216 = vmul.f32 %v1213, %v1215
    %v1217 = vadd.f32 %v1213, %v1216
    %vm1218 = vweird.f32 %v1212
    %vm1219 = vweird.f32 %v1213
    %vm1220 = vmor %vm1218, %vm1219
    %v1221 = vsel %vm1220, %v1213, %v1217
    %v1222 = vand.u32 2147483647, %v1212
    %vm1223 = vcmp.eq.f32.partialorder %v1222, 8.507059e+37
    %v1224 = vand.u32 %v1212, 2147483648
    %v1225 = vor.u32 1.1754944e-38, %v1224
    %v1226 = vsel %vm1223, %v1225, %v1221
    %v1227 = vmul.f32 1.0, %v1226
    %v1228 = vtanh.pop %v1188
    %v1229 = vxor.u32 %v1189, 2147483648
    %v1230 = vmul.f32 %v1229, 1.442695
    %v1231 = vpow.pop %v1230
    %v1232 = vadd.f32 %v1231, 1.0
    %v1233 = vrcp.pop %v1232
    %v1234 = vmul.f32 %v1232, %v1233
    %v1235 = vsub.f32 1.0, %v1234
    %v1236 = vmul.f32 %v1233, %v1235
    %v1237 = vadd.f32 %v1233, %v1236
    %vm1238 = vweird.f32 %v1232
    %vm1239 = vweird.f32 %v1233
    %vm1240 = vmor %vm1238, %vm1239
    %v1241 = vsel %vm1240, %v1233, %v1237
    %v1242 = vand.u32 2147483647, %v1232
    %vm1243 = vcmp.eq.f32.partialorder %v1242, 8.507059e+37
    %v1244 = vand.u32 %v1232, 2147483648
    %v1245 = vor.u32 1.1754944e-38, %v1244
    %v1246 = vsel %vm1243, %v1245, %v1241
    %v1247 = vmul.f32 1.0, %v1246
    %v1248 = vmul.f32 %v1227, %v1096
    %v1249 = vmul.f32 %v1208, %v1228
    %v1250 = vadd.f32 %v1248, %v1249
    %v1251 = vtanh.pop %v1250
    %v1252 = vmul.f32 %v1247, %v1251
    %s1253 = scalar_lea.vmem [#allocation2], 32
    %1254 = vst [vmem:[%s1253] sm:$0xff] %v1252
    %s1255 = scalar_lea.vmem [#allocation3], 160
    %v1256 = vld [vmem:[%s1255] sm:$0xff]
    %v1257 = vld [vmem:[%s1255 + $0x8] sm:$0xff]
    %v1258 = vld [vmem:[%s1255 + $0x10] sm:$0xff]
    %v1259 = vld [vmem:[%s1255 + $0x18] sm:$0xff]
    %1260 = vmatpush.msra.mxu0 %v481
    %1261 = vmatpush.msra.mxu0 %v477
    %1262 = vmatpush.msra.mxu0 %v473
    %1263 = vmatpush.msra.mxu0 %v469
    %1264 = vmatpush.msra.mxu0 %v465
    %1265 = vmatpush.msra.mxu0 %v461
    %1266 = vmatpush.msra.mxu0 %v457
    %1267 = vmatpush.msra.mxu0 %v453
    %1268 = vmatpush.msra.mxu0 %v449
    %1269 = vmatpush.msra.mxu0 %v445
    %1270 = vmatpush.msra.mxu0 %v441
    %1271 = vmatpush.msra.mxu0 %v437
    %1272 = vmatpush.msra.mxu0 %v433
    %1273 = vmatpush.msra.mxu0 %v429
    %1274 = vmatpush.msra.mxu0 %v425
    %1275 = vmatpush.msra.mxu0 %v421
    %1276 = vmatmul.f32.gmra.mxu0 %v1252
    %v1277 = vpop.f32.mrf.mxu0
    %v1278 = vadd.f32 0.0, %v1277
    %1279 = vdwg.mxu0
    %1280 = vmatpush.msra.mxu0 %v482
    %1281 = vmatpush.msra.mxu0 %v478
    %1282 = vmatpush.msra.mxu0 %v474
    %1283 = vmatpush.msra.mxu0 %v470
    %1284 = vmatpush.msra.mxu0 %v466
    %1285 = vmatpush.msra.mxu0 %v462
    %1286 = vmatpush.msra.mxu0 %v458
    %1287 = vmatpush.msra.mxu0 %v454
    %1288 = vmatpush.msra.mxu0 %v450
    %1289 = vmatpush.msra.mxu0 %v446
    %1290 = vmatpush.msra.mxu0 %v442
    %1291 = vmatpush.msra.mxu0 %v438
    %1292 = vmatpush.msra.mxu0 %v434
    %1293 = vmatpush.msra.mxu0 %v430
    %1294 = vmatpush.msra.mxu0 %v426
    %1295 = vmatpush.msra.mxu0 %v422
    %1296 = vmatmul.f32.gmra.mxu0 %v1252
    %v1297 = vpop.f32.mrf.mxu0
    %v1298 = vadd.f32 0.0, %v1297
    %1299 = vdwg.mxu0
    %1300 = vmatpush.msra.mxu0 %v483
    %1301 = vmatpush.msra.mxu0 %v479
    %1302 = vmatpush.msra.mxu0 %v475
    %1303 = vmatpush.msra.mxu0 %v471
    %1304 = vmatpush.msra.mxu0 %v467
    %1305 = vmatpush.msra.mxu0 %v463
    %1306 = vmatpush.msra.mxu0 %v459
    %1307 = vmatpush.msra.mxu0 %v455
    %1308 = vmatpush.msra.mxu0 %v451
    %1309 = vmatpush.msra.mxu0 %v447
    %1310 = vmatpush.msra.mxu0 %v443
    %1311 = vmatpush.msra.mxu0 %v439
    %1312 = vmatpush.msra.mxu0 %v435
    %1313 = vmatpush.msra.mxu0 %v431
    %1314 = vmatpush.msra.mxu0 %v427
    %1315 = vmatpush.msra.mxu0 %v423
    %1316 = vmatmul.f32.gmra.mxu0 %v1252
    %v1317 = vpop.f32.mrf.mxu0
    %v1318 = vadd.f32 0.0, %v1317
    %1319 = vdwg.mxu0
    %1320 = vmatpush.msra.mxu0 %v484
    %1321 = vmatpush.msra.mxu0 %v480
    %1322 = vmatpush.msra.mxu0 %v476
    %1323 = vmatpush.msra.mxu0 %v472
    %1324 = vmatpush.msra.mxu0 %v468
    %1325 = vmatpush.msra.mxu0 %v464
    %1326 = vmatpush.msra.mxu0 %v460
    %1327 = vmatpush.msra.mxu0 %v456
    %1328 = vmatpush.msra.mxu0 %v452
    %1329 = vmatpush.msra.mxu0 %v448
    %1330 = vmatpush.msra.mxu0 %v444
    %1331 = vmatpush.msra.mxu0 %v440
    %1332 = vmatpush.msra.mxu0 %v436
    %1333 = vmatpush.msra.mxu0 %v432
    %1334 = vmatpush.msra.mxu0 %v428
    %1335 = vmatpush.msra.mxu0 %v424
    %1336 = vmatmul.f32.gmra.mxu0 %v1252
    %v1337 = vpop.f32.mrf.mxu0
    %v1338 = vadd.f32 0.0, %v1337
    %1339 = vdwg.mxu0
    %v1340 = vadd.f32 %v1256, %v1278
    %v1341 = vadd.f32 %v1257, %v1298
    %v1342 = vadd.f32 %v1258, %v1318
    %v1343 = vadd.f32 %v1259, %v1338
    %v1344 = vxor.u32 %v1340, 2147483648
    %v1345 = vmul.f32 %v1344, 1.442695
    %v1346 = vpow.pop %v1345
    %v1347 = vadd.f32 %v1346, 1.0
    %v1348 = vrcp.pop %v1347
    %v1349 = vmul.f32 %v1347, %v1348
    %v1350 = vsub.f32 1.0, %v1349
    %v1351 = vmul.f32 %v1348, %v1350
    %v1352 = vadd.f32 %v1348, %v1351
    %vm1353 = vweird.f32 %v1347
    %vm1354 = vweird.f32 %v1348
    %vm1355 = vmor %vm1353, %vm1354
    %v1356 = vsel %vm1355, %v1348, %v1352
    %v1357 = vand.u32 2147483647, %v1347
    %vm1358 = vcmp.eq.f32.partialorder %v1357, 8.507059e+37
    %v1359 = vand.u32 %v1347, 2147483648
    %v1360 = vor.u32 1.1754944e-38, %v1359
    %v1361 = vsel %vm1358, %v1360, %v1356
    %v1362 = vmul.f32 1.0, %v1361
    %v1363 = vxor.u32 %v1341, 2147483648
    %v1364 = vmul.f32 %v1363, 1.442695
    %v1365 = vpow.pop %v1364
    %v1366 = vadd.f32 %v1365, 1.0
    %v1367 = vrcp.pop %v1366
    %v1368 = vmul.f32 %v1366, %v1367
    %v1369 = vsub.f32 1.0, %v1368
    %v1370 = vmul.f32 %v1367, %v1369
    %v1371 = vadd.f32 %v1367, %v1370
    %vm1372 = vweird.f32 %v1366
    %vm1373 = vweird.f32 %v1367
    %vm1374 = vmor %vm1372, %vm1373
    %v1375 = vsel %vm1374, %v1367, %v1371
    %v1376 = vand.u32 2147483647, %v1366
    %vm1377 = vcmp.eq.f32.partialorder %v1376, 8.507059e+37
    %v1378 = vand.u32 %v1366, 2147483648
    %v1379 = vor.u32 1.1754944e-38, %v1378
    %v1380 = vsel %vm1377, %v1379, %v1375
    %v1381 = vmul.f32 1.0, %v1380
    %v1382 = vtanh.pop %v1342
    %v1383 = vxor.u32 %v1343, 2147483648
    %v1384 = vmul.f32 %v1383, 1.442695
    %v1385 = vpow.pop %v1384
    %v1386 = vadd.f32 %v1385, 1.0
    %v1387 = vrcp.pop %v1386
    %v1388 = vmul.f32 %v1386, %v1387
    %v1389 = vsub.f32 1.0, %v1388
    %v1390 = vmul.f32 %v1387, %v1389
    %v1391 = vadd.f32 %v1387, %v1390
    %vm1392 = vweird.f32 %v1386
    %vm1393 = vweird.f32 %v1387
    %vm1394 = vmor %vm1392, %vm1393
    %v1395 = vsel %vm1394, %v1387, %v1391
    %v1396 = vand.u32 2147483647, %v1386
    %vm1397 = vcmp.eq.f32.partialorder %v1396, 8.507059e+37
    %v1398 = vand.u32 %v1386, 2147483648
    %v1399 = vor.u32 1.1754944e-38, %v1398
    %v1400 = vsel %vm1397, %v1399, %v1395
    %v1401 = vmul.f32 1.0, %v1400
    %v1402 = vmul.f32 %v1381, %v1250
    %v1403 = vmul.f32 %v1362, %v1382
    %v1404 = vadd.f32 %v1402, %v1403
    %v1405 = vtanh.pop %v1404
    %v1406 = vmul.f32 %v1401, %v1405
    %s1407 = scalar_lea.vmem [#allocation2], 40
    %1408 = vst [vmem:[%s1407] sm:$0xff] %v1406
    %s1409 = scalar_lea.vmem [#allocation3], 192
    %v1410 = vld [vmem:[%s1409] sm:$0xff]
    %v1411 = vld [vmem:[%s1409 + $0x8] sm:$0xff]
    %v1412 = vld [vmem:[%s1409 + $0x10] sm:$0xff]
    %v1413 = vld [vmem:[%s1409 + $0x18] sm:$0xff]
    %1414 = vmatpush.msra.mxu0 %v481
    %1415 = vmatpush.msra.mxu0 %v477
    %1416 = vmatpush.msra.mxu0 %v473
    %1417 = vmatpush.msra.mxu0 %v469
    %1418 = vmatpush.msra.mxu0 %v465
    %1419 = vmatpush.msra.mxu0 %v461
    %1420 = vmatpush.msra.mxu0 %v457
    %1421 = vmatpush.msra.mxu0 %v453
    %1422 = vmatpush.msra.mxu0 %v449
    %1423 = vmatpush.msra.mxu0 %v445
    %1424 = vmatpush.msra.mxu0 %v441
    %1425 = vmatpush.msra.mxu0 %v437
    %1426 = vmatpush.msra.mxu0 %v433
    %1427 = vmatpush.msra.mxu0 %v429
    %1428 = vmatpush.msra.mxu0 %v425
    %1429 = vmatpush.msra.mxu0 %v421
    %1430 = vmatmul.f32.gmra.mxu0 %v1406
    %v1431 = vpop.f32.mrf.mxu0
    %v1432 = vadd.f32 0.0, %v1431
    %1433 = vdwg.mxu0
    %1434 = vmatpush.msra.mxu0 %v482
    %1435 = vmatpush.msra.mxu0 %v478
    %1436 = vmatpush.msra.mxu0 %v474
    %1437 = vmatpush.msra.mxu0 %v470
    %1438 = vmatpush.msra.mxu0 %v466
    %1439 = vmatpush.msra.mxu0 %v462
    %1440 = vmatpush.msra.mxu0 %v458
    %1441 = vmatpush.msra.mxu0 %v454
    %1442 = vmatpush.msra.mxu0 %v450
    %1443 = vmatpush.msra.mxu0 %v446
    %1444 = vmatpush.msra.mxu0 %v442
    %1445 = vmatpush.msra.mxu0 %v438
    %1446 = vmatpush.msra.mxu0 %v434
    %1447 = vmatpush.msra.mxu0 %v430
    %1448 = vmatpush.msra.mxu0 %v426
    %1449 = vmatpush.msra.mxu0 %v422
    %1450 = vmatmul.f32.gmra.mxu0 %v1406
    %v1451 = vpop.f32.mrf.mxu0
    %v1452 = vadd.f32 0.0, %v1451
    %1453 = vdwg.mxu0
    %1454 = vmatpush.msra.mxu0 %v483
    %1455 = vmatpush.msra.mxu0 %v479
    %1456 = vmatpush.msra.mxu0 %v475
    %1457 = vmatpush.msra.mxu0 %v471
    %1458 = vmatpush.msra.mxu0 %v467
    %1459 = vmatpush.msra.mxu0 %v463
    %1460 = vmatpush.msra.mxu0 %v459
    %1461 = vmatpush.msra.mxu0 %v455
    %1462 = vmatpush.msra.mxu0 %v451
    %1463 = vmatpush.msra.mxu0 %v447
    %1464 = vmatpush.msra.mxu0 %v443
    %1465 = vmatpush.msra.mxu0 %v439
    %1466 = vmatpush.msra.mxu0 %v435
    %1467 = vmatpush.msra.mxu0 %v431
    %1468 = vmatpush.msra.mxu0 %v427
    %1469 = vmatpush.msra.mxu0 %v423
    %1470 = vmatmul.f32.gmra.mxu0 %v1406
    %v1471 = vpop.f32.mrf.mxu0
    %v1472 = vadd.f32 0.0, %v1471
    %1473 = vdwg.mxu0
    %1474 = vmatpush.msra.mxu0 %v484
    %1475 = vmatpush.msra.mxu0 %v480
    %1476 = vmatpush.msra.mxu0 %v476
    %1477 = vmatpush.msra.mxu0 %v472
    %1478 = vmatpush.msra.mxu0 %v468
    %1479 = vmatpush.msra.mxu0 %v464
    %1480 = vmatpush.msra.mxu0 %v460
    %1481 = vmatpush.msra.mxu0 %v456
    %1482 = vmatpush.msra.mxu0 %v452
    %1483 = vmatpush.msra.mxu0 %v448
    %1484 = vmatpush.msra.mxu0 %v444
    %1485 = vmatpush.msra.mxu0 %v440
    %1486 = vmatpush.msra.mxu0 %v436
    %1487 = vmatpush.msra.mxu0 %v432
    %1488 = vmatpush.msra.mxu0 %v428
    %1489 = vmatpush.msra.mxu0 %v424
    %1490 = vmatmul.f32.gmra.mxu0 %v1406
    %v1491 = vpop.f32.mrf.mxu0
    %v1492 = vadd.f32 0.0, %v1491
    %1493 = vdwg.mxu0
    %v1494 = vadd.f32 %v1410, %v1432
    %v1495 = vadd.f32 %v1411, %v1452
    %v1496 = vadd.f32 %v1412, %v1472
    %v1497 = vadd.f32 %v1413, %v1492
    %v1498 = vxor.u32 %v1494, 2147483648
    %v1499 = vmul.f32 %v1498, 1.442695
    %v1500 = vpow.pop %v1499
    %v1501 = vadd.f32 %v1500, 1.0
    %v1502 = vrcp.pop %v1501
    %v1503 = vmul.f32 %v1501, %v1502
    %v1504 = vsub.f32 1.0, %v1503
    %v1505 = vmul.f32 %v1502, %v1504
    %v1506 = vadd.f32 %v1502, %v1505
    %vm1507 = vweird.f32 %v1501
    %vm1508 = vweird.f32 %v1502
    %vm1509 = vmor %vm1507, %vm1508
    %v1510 = vsel %vm1509, %v1502, %v1506
    %v1511 = vand.u32 2147483647, %v1501
    %vm1512 = vcmp.eq.f32.partialorder %v1511, 8.507059e+37
    %v1513 = vand.u32 %v1501, 2147483648
    %v1514 = vor.u32 1.1754944e-38, %v1513
    %v1515 = vsel %vm1512, %v1514, %v1510
    %v1516 = vmul.f32 1.0, %v1515
    %v1517 = vxor.u32 %v1495, 2147483648
    %v1518 = vmul.f32 %v1517, 1.442695
    %v1519 = vpow.pop %v1518
    %v1520 = vadd.f32 %v1519, 1.0
    %v1521 = vrcp.pop %v1520
    %v1522 = vmul.f32 %v1520, %v1521
    %v1523 = vsub.f32 1.0, %v1522
    %v1524 = vmul.f32 %v1521, %v1523
    %v1525 = vadd.f32 %v1521, %v1524
    %vm1526 = vweird.f32 %v1520
    %vm1527 = vweird.f32 %v1521
    %vm1528 = vmor %vm1526, %vm1527
    %v1529 = vsel %vm1528, %v1521, %v1525
    %v1530 = vand.u32 2147483647, %v1520
    %vm1531 = vcmp.eq.f32.partialorder %v1530, 8.507059e+37
    %v1532 = vand.u32 %v1520, 2147483648
    %v1533 = vor.u32 1.1754944e-38, %v1532
    %v1534 = vsel %vm1531, %v1533, %v1529
    %v1535 = vmul.f32 1.0, %v1534
    %v1536 = vtanh.pop %v1496
    %v1537 = vxor.u32 %v1497, 2147483648
    %v1538 = vmul.f32 %v1537, 1.442695
    %v1539 = vpow.pop %v1538
    %v1540 = vadd.f32 %v1539, 1.0
    %v1541 = vrcp.pop %v1540
    %v1542 = vmul.f32 %v1540, %v1541
    %v1543 = vsub.f32 1.0, %v1542
    %v1544 = vmul.f32 %v1541, %v1543
    %v1545 = vadd.f32 %v1541, %v1544
    %vm1546 = vweird.f32 %v1540
    %vm1547 = vweird.f32 %v1541
    %vm1548 = vmor %vm1546, %vm1547
    %v1549 = vsel %vm1548, %v1541, %v1545
    %v1550 = vand.u32 2147483647, %v1540
    %vm1551 = vcmp.eq.f32.partialorder %v1550, 8.507059e+37
    %v1552 = vand.u32 %v1540, 2147483648
    %v1553 = vor.u32 1.1754944e-38, %v1552
    %v1554 = vsel %vm1551, %v1553, %v1549
    %v1555 = vmul.f32 1.0, %v1554
    %v1556 = vmul.f32 %v1535, %v1404
    %v1557 = vmul.f32 %v1516, %v1536
    %v1558 = vadd.f32 %v1556, %v1557
    %v1559 = vtanh.pop %v1558
    %v1560 = vmul.f32 %v1555, %v1559
    %s1561 = scalar_lea.vmem [#allocation2], 48
    %1562 = vst [vmem:[%s1561] sm:$0xff] %v1560
    %s1563 = scalar_lea.vmem [#allocation3], 224
    %v1564 = vld [vmem:[%s1563] sm:$0xff]
    %v1565 = vld [vmem:[%s1563 + $0x8] sm:$0xff]
    %v1566 = vld [vmem:[%s1563 + $0x10] sm:$0xff]
    %v1567 = vld [vmem:[%s1563 + $0x18] sm:$0xff]
    %1568 = vmatpush.msra.mxu0 %v481
    %1569 = vmatpush.msra.mxu0 %v477
    %1570 = vmatpush.msra.mxu0 %v473
    %1571 = vmatpush.msra.mxu0 %v469
    %1572 = vmatpush.msra.mxu0 %v465
    %1573 = vmatpush.msra.mxu0 %v461
    %1574 = vmatpush.msra.mxu0 %v457
    %1575 = vmatpush.msra.mxu0 %v453
    %1576 = vmatpush.msra.mxu0 %v449
    %1577 = vmatpush.msra.mxu0 %v445
    %1578 = vmatpush.msra.mxu0 %v441
    %1579 = vmatpush.msra.mxu0 %v437
    %1580 = vmatpush.msra.mxu0 %v433
    %1581 = vmatpush.msra.mxu0 %v429
    %1582 = vmatpush.msra.mxu0 %v425
    %1583 = vmatpush.msra.mxu0 %v421
    %1584 = vmatmul.f32.gmra.mxu0 %v1560
    %v1585 = vpop.f32.mrf.mxu0
    %v1586 = vadd.f32 0.0, %v1585
    %1587 = vdwg.mxu0
    %1588 = vmatpush.msra.mxu0 %v482
    %1589 = vmatpush.msra.mxu0 %v478
    %1590 = vmatpush.msra.mxu0 %v474
    %1591 = vmatpush.msra.mxu0 %v470
    %1592 = vmatpush.msra.mxu0 %v466
    %1593 = vmatpush.msra.mxu0 %v462
    %1594 = vmatpush.msra.mxu0 %v458
    %1595 = vmatpush.msra.mxu0 %v454
    %1596 = vmatpush.msra.mxu0 %v450
    %1597 = vmatpush.msra.mxu0 %v446
    %1598 = vmatpush.msra.mxu0 %v442
    %1599 = vmatpush.msra.mxu0 %v438
    %1600 = vmatpush.msra.mxu0 %v434
    %1601 = vmatpush.msra.mxu0 %v430
    %1602 = vmatpush.msra.mxu0 %v426
    %1603 = vmatpush.msra.mxu0 %v422
    %1604 = vmatmul.f32.gmra.mxu0 %v1560
    %v1605 = vpop.f32.mrf.mxu0
    %v1606 = vadd.f32 0.0, %v1605
    %1607 = vdwg.mxu0
    %1608 = vmatpush.msra.mxu0 %v483
    %1609 = vmatpush.msra.mxu0 %v479
    %1610 = vmatpush.msra.mxu0 %v475
    %1611 = vmatpush.msra.mxu0 %v471
    %1612 = vmatpush.msra.mxu0 %v467
    %1613 = vmatpush.msra.mxu0 %v463
    %1614 = vmatpush.msra.mxu0 %v459
    %1615 = vmatpush.msra.mxu0 %v455
    %1616 = vmatpush.msra.mxu0 %v451
    %1617 = vmatpush.msra.mxu0 %v447
    %1618 = vmatpush.msra.mxu0 %v443
    %1619 = vmatpush.msra.mxu0 %v439
    %1620 = vmatpush.msra.mxu0 %v435
    %1621 = vmatpush.msra.mxu0 %v431
    %1622 = vmatpush.msra.mxu0 %v427
    %1623 = vmatpush.msra.mxu0 %v423
    %1624 = vmatmul.f32.gmra.mxu0 %v1560
    %v1625 = vpop.f32.mrf.mxu0
    %v1626 = vadd.f32 0.0, %v1625
    %1627 = vdwg.mxu0
    %1628 = vmatpush.msra.mxu0 %v484
    %1629 = vmatpush.msra.mxu0 %v480
    %1630 = vmatpush.msra.mxu0 %v476
    %1631 = vmatpush.msra.mxu0 %v472
    %1632 = vmatpush.msra.mxu0 %v468
    %1633 = vmatpush.msra.mxu0 %v464
    %1634 = vmatpush.msra.mxu0 %v460
    %1635 = vmatpush.msra.mxu0 %v456
    %1636 = vmatpush.msra.mxu0 %v452
    %1637 = vmatpush.msra.mxu0 %v448
    %1638 = vmatpush.msra.mxu0 %v444
    %1639 = vmatpush.msra.mxu0 %v440
    %1640 = vmatpush.msra.mxu0 %v436
    %1641 = vmatpush.msra.mxu0 %v432
    %1642 = vmatpush.msra.mxu0 %v428
    %1643 = vmatpush.msra.mxu0 %v424
    %1644 = vmatmul.f32.gmra.mxu0 %v1560
    %v1645 = vpop.f32.mrf.mxu0
    %v1646 = vadd.f32 0.0, %v1645
    %1647 = vdwg.mxu0
    %v1648 = vadd.f32 %v1564, %v1586
    %v1649 = vadd.f32 %v1565, %v1606
    %v1650 = vadd.f32 %v1566, %v1626
    %v1651 = vadd.f32 %v1567, %v1646
    %v1652 = vxor.u32 %v1648, 2147483648
    %v1653 = vmul.f32 %v1652, 1.442695
    %v1654 = vpow.pop %v1653
    %v1655 = vadd.f32 %v1654, 1.0
    %v1656 = vrcp.pop %v1655
    %v1657 = vmul.f32 %v1655, %v1656
    %v1658 = vsub.f32 1.0, %v1657
    %v1659 = vmul.f32 %v1656, %v1658
    %v1660 = vadd.f32 %v1656, %v1659
    %vm1661 = vweird.f32 %v1655
    %vm1662 = vweird.f32 %v1656
    %vm1663 = vmor %vm1661, %vm1662
    %v1664 = vsel %vm1663, %v1656, %v1660
    %v1665 = vand.u32 2147483647, %v1655
    %vm1666 = vcmp.eq.f32.partialorder %v1665, 8.507059e+37
    %v1667 = vand.u32 %v1655, 2147483648
    %v1668 = vor.u32 1.1754944e-38, %v1667
    %v1669 = vsel %vm1666, %v1668, %v1664
    %v1670 = vmul.f32 1.0, %v1669
    %v1671 = vxor.u32 %v1649, 2147483648
    %v1672 = vmul.f32 %v1671, 1.442695
    %v1673 = vpow.pop %v1672
    %v1674 = vadd.f32 %v1673, 1.0
    %v1675 = vrcp.pop %v1674
    %v1676 = vmul.f32 %v1674, %v1675
    %v1677 = vsub.f32 1.0, %v1676
    %v1678 = vmul.f32 %v1675, %v1677
    %v1679 = vadd.f32 %v1675, %v1678
    %vm1680 = vweird.f32 %v1674
    %vm1681 = vweird.f32 %v1675
    %vm1682 = vmor %vm1680, %vm1681
    %v1683 = vsel %vm1682, %v1675, %v1679
    %v1684 = vand.u32 2147483647, %v1674
    %vm1685 = vcmp.eq.f32.partialorder %v1684, 8.507059e+37
    %v1686 = vand.u32 %v1674, 2147483648
    %v1687 = vor.u32 1.1754944e-38, %v1686
    %v1688 = vsel %vm1685, %v1687, %v1683
    %v1689 = vmul.f32 1.0, %v1688
    %v1690 = vtanh.pop %v1650
    %v1691 = vxor.u32 %v1651, 2147483648
    %v1692 = vmul.f32 %v1691, 1.442695
    %v1693 = vpow.pop %v1692
    %v1694 = vadd.f32 %v1693, 1.0
    %v1695 = vrcp.pop %v1694
    %v1696 = vmul.f32 %v1694, %v1695
    %v1697 = vsub.f32 1.0, %v1696
    %v1698 = vmul.f32 %v1695, %v1697
    %v1699 = vadd.f32 %v1695, %v1698
    %vm1700 = vweird.f32 %v1694
    %vm1701 = vweird.f32 %v1695
    %vm1702 = vmor %vm1700, %vm1701
    %v1703 = vsel %vm1702, %v1695, %v1699
    %v1704 = vand.u32 2147483647, %v1694
    %vm1705 = vcmp.eq.f32.partialorder %v1704, 8.507059e+37
    %v1706 = vand.u32 %v1694, 2147483648
    %v1707 = vor.u32 1.1754944e-38, %v1706
    %v1708 = vsel %vm1705, %v1707, %v1703
    %v1709 = vmul.f32 1.0, %v1708
    %v1710 = vmul.f32 %v1689, %v1558
    %v1711 = vmul.f32 %v1670, %v1690
    %v1712 = vadd.f32 %v1710, %v1711
    %v1713 = vtanh.pop %v1712
    %v1714 = vmul.f32 %v1709, %v1713
    %s1715 = scalar_lea.vmem [#allocation2], 56
    %1716 = vst [vmem:[%s1715] sm:$0xff] %v1714
    %1717 = vst [vmem:[#allocation17] sm:$0xff] %v1714
    %1718 = vst [vmem:[#allocation19] sm:$0xff] %v1712
    %v1719 = vld [vmem:[#allocation2] sm:$0xff]
    %v1720 = vld [vmem:[#allocation2 + $0x8] sm:$0xff]
    %v1721 = vld [vmem:[#allocation2 + $0x10] sm:$0xff]
    %v1722 = vld [vmem:[#allocation2 + $0x18] sm:$0xff]
    %v1723 = vld [vmem:[#allocation2 + $0x20] sm:$0xff]
    %v1724 = vld [vmem:[#allocation2 + $0x28] sm:$0xff]
    %v1725 = vld [vmem:[#allocation2 + $0x30] sm:$0xff]
    %v1726 = vld [vmem:[#allocation2 + $0x38] sm:$0xff]
    %s1727 = scalar_lea.vmem [#allocation7], 512
    %v1728 = vld [vmem:[%s1727] sm:$0xff]
    %v1729 = vld [vmem:[%s1727 + $0x8] sm:$0xff]
    %v1730 = vld [vmem:[%s1727 + $0x10] sm:$0xff]
    %v1731 = vld [vmem:[%s1727 + $0x18] sm:$0xff]
    %v1732 = vld [vmem:[%s1727 + $0x20] sm:$0xff]
    %v1733 = vld [vmem:[%s1727 + $0x28] sm:$0xff]
    %v1734 = vld [vmem:[%s1727 + $0x30] sm:$0xff]
    %v1735 = vld [vmem:[%s1727 + $0x38] sm:$0xff]
    %v1736 = vld [vmem:[%s1727 + $0x40] sm:$0xff]
    %v1737 = vld [vmem:[%s1727 + $0x48] sm:$0xff]
    %v1738 = vld [vmem:[%s1727 + $0x50] sm:$0xff]
    %v1739 = vld [vmem:[%s1727 + $0x58] sm:$0xff]
    %v1740 = vld [vmem:[%s1727 + $0x60] sm:$0xff]
    %v1741 = vld [vmem:[%s1727 + $0x68] sm:$0xff]
    %v1742 = vld [vmem:[%s1727 + $0x70] sm:$0xff]
    %v1743 = vld [vmem:[%s1727 + $0x78] sm:$0xff]
    %v1744 = vld [vmem:[%s1727 + $0x80] sm:$0xff]
    %v1745 = vld [vmem:[%s1727 + $0x88] sm:$0xff]
    %v1746 = vld [vmem:[%s1727 + $0x90] sm:$0xff]
    %v1747 = vld [vmem:[%s1727 + $0x98] sm:$0xff]
    %v1748 = vld [vmem:[%s1727 + $0xa0] sm:$0xff]
    %v1749 = vld [vmem:[%s1727 + $0xa8] sm:$0xff]
    %v1750 = vld [vmem:[%s1727 + $0xb0] sm:$0xff]
    %v1751 = vld [vmem:[%s1727 + $0xb8] sm:$0xff]
    %v1752 = vld [vmem:[%s1727 + $0xc0] sm:$0xff]
    %v1753 = vld [vmem:[%s1727 + $0xc8] sm:$0xff]
    %v1754 = vld [vmem:[%s1727 + $0xd0] sm:$0xff]
    %v1755 = vld [vmem:[%s1727 + $0xd8] sm:$0xff]
    %v1756 = vld [vmem:[%s1727 + $0xe0] sm:$0xff]
    %v1757 = vld [vmem:[%s1727 + $0xe8] sm:$0xff]
    %v1758 = vld [vmem:[%s1727 + $0xf0] sm:$0xff]
    %v1759 = vld [vmem:[%s1727 + $0xf8] sm:$0xff]
    %v1760 = vld [vmem:[%s1727 + $0x100] sm:$0xff]
    %v1761 = vld [vmem:[%s1727 + $0x108] sm:$0xff]
    %v1762 = vld [vmem:[%s1727 + $0x110] sm:$0xff]
    %v1763 = vld [vmem:[%s1727 + $0x118] sm:$0xff]
    %v1764 = vld [vmem:[%s1727 + $0x120] sm:$0xff]
    %v1765 = vld [vmem:[%s1727 + $0x128] sm:$0xff]
    %v1766 = vld [vmem:[%s1727 + $0x130] sm:$0xff]
    %v1767 = vld [vmem:[%s1727 + $0x138] sm:$0xff]
    %v1768 = vld [vmem:[%s1727 + $0x140] sm:$0xff]
    %v1769 = vld [vmem:[%s1727 + $0x148] sm:$0xff]
    %v1770 = vld [vmem:[%s1727 + $0x150] sm:$0xff]
    %v1771 = vld [vmem:[%s1727 + $0x158] sm:$0xff]
    %v1772 = vld [vmem:[%s1727 + $0x160] sm:$0xff]
    %v1773 = vld [vmem:[%s1727 + $0x168] sm:$0xff]
    %v1774 = vld [vmem:[%s1727 + $0x170] sm:$0xff]
    %v1775 = vld [vmem:[%s1727 + $0x178] sm:$0xff]
    %v1776 = vld [vmem:[%s1727 + $0x180] sm:$0xff]
    %v1777 = vld [vmem:[%s1727 + $0x188] sm:$0xff]
    %v1778 = vld [vmem:[%s1727 + $0x190] sm:$0xff]
    %v1779 = vld [vmem:[%s1727 + $0x198] sm:$0xff]
    %v1780 = vld [vmem:[%s1727 + $0x1a0] sm:$0xff]
    %v1781 = vld [vmem:[%s1727 + $0x1a8] sm:$0xff]
    %v1782 = vld [vmem:[%s1727 + $0x1b0] sm:$0xff]
    %v1783 = vld [vmem:[%s1727 + $0x1b8] sm:$0xff]
    %v1784 = vld [vmem:[%s1727 + $0x1c0] sm:$0xff]
    %v1785 = vld [vmem:[%s1727 + $0x1c8] sm:$0xff]
    %v1786 = vld [vmem:[%s1727 + $0x1d0] sm:$0xff]
    %v1787 = vld [vmem:[%s1727 + $0x1d8] sm:$0xff]
    %v1788 = vld [vmem:[%s1727 + $0x1e0] sm:$0xff]
    %v1789 = vld [vmem:[%s1727 + $0x1e8] sm:$0xff]
    %v1790 = vld [vmem:[%s1727 + $0x1f0] sm:$0xff]
    %v1791 = vld [vmem:[%s1727 + $0x1f8] sm:$0xff]
    %s1792 = scalar_lea.vmem [#allocation10], 4
    %v1793 = vld [vmem:[%s1792] sm:$0xf]
    %v1795 = vperm.slane %v1793, 0
    %v1796 = vperm.slane %v1793, 1
    %v1797 = vperm.slane %v1793, 2
    %v1798 = vperm.slane %v1793, 3
    %1803 = vmatpush.msra.mxu0 %v1788
    %1804 = vmatpush.msra.mxu0 %v1784
    %1805 = vmatpush.msra.mxu0 %v1780
    %1806 = vmatpush.msra.mxu0 %v1776
    %1807 = vmatpush.msra.mxu0 %v1772
    %1808 = vmatpush.msra.mxu0 %v1768
    %1809 = vmatpush.msra.mxu0 %v1764
    %1810 = vmatpush.msra.mxu0 %v1760
    %1811 = vmatpush.msra.mxu0 %v1756
    %1812 = vmatpush.msra.mxu0 %v1752
    %1813 = vmatpush.msra.mxu0 %v1748
    %1814 = vmatpush.msra.mxu0 %v1744
    %1815 = vmatpush.msra.mxu0 %v1740
    %1816 = vmatpush.msra.mxu0 %v1736
    %1817 = vmatpush.msra.mxu0 %v1732
    %1818 = vmatpush.msra.mxu0 %v1728
    %1819 = vmatmul.f32.gmra.mxu0 %v1719
    %v1820 = vpop.f32.mrf.mxu0
    %v1821 = vadd.f32 %v1795, %v1820
    %1822 = vmatmul.f32.gmra.mxu0 %v1720
    %v1823 = vpop.f32.mrf.mxu0
    %v1824 = vadd.f32 %v1795, %v1823
    %1825 = vmatmul.f32.gmra.mxu0 %v1721
    %v1826 = vpop.f32.mrf.mxu0
    %v1827 = vadd.f32 %v1795, %v1826
    %1828 = vmatmul.f32.gmra.mxu0 %v1722
    %v1829 = vpop.f32.mrf.mxu0
    %v1830 = vadd.f32 %v1795, %v1829
    %1831 = vmatmul.f32.gmra.mxu0 %v1723
    %v1832 = vpop.f32.mrf.mxu0
    %v1833 = vadd.f32 %v1795, %v1832
    %1834 = vmatmul.f32.gmra.mxu0 %v1724
    %v1835 = vpop.f32.mrf.mxu0
    %v1836 = vadd.f32 %v1795, %v1835
    %1837 = vmatmul.f32.gmra.mxu0 %v1725
    %v1838 = vpop.f32.mrf.mxu0
    %v1839 = vadd.f32 %v1795, %v1838
    %1840 = vmatmul.f32.gmra.mxu0 %v1726
    %v1841 = vpop.f32.mrf.mxu0
    %v1842 = vadd.f32 %v1795, %v1841
    %1843 = vdwg.mxu0
    %1844 = vmatpush.msra.mxu0 %v1789
    %1845 = vmatpush.msra.mxu0 %v1785
    %1846 = vmatpush.msra.mxu0 %v1781
    %1847 = vmatpush.msra.mxu0 %v1777
    %1848 = vmatpush.msra.mxu0 %v1773
    %1849 = vmatpush.msra.mxu0 %v1769
    %1850 = vmatpush.msra.mxu0 %v1765
    %1851 = vmatpush.msra.mxu0 %v1761
    %1852 = vmatpush.msra.mxu0 %v1757
    %1853 = vmatpush.msra.mxu0 %v1753
    %1854 = vmatpush.msra.mxu0 %v1749
    %1855 = vmatpush.msra.mxu0 %v1745
    %1856 = vmatpush.msra.mxu0 %v1741
    %1857 = vmatpush.msra.mxu0 %v1737
    %1858 = vmatpush.msra.mxu0 %v1733
    %1859 = vmatpush.msra.mxu0 %v1729
    %1860 = vmatmul.f32.gmra.mxu0 %v1719
    %v1861 = vpop.f32.mrf.mxu0
    %v1862 = vadd.f32 %v1796, %v1861
    %1863 = vmatmul.f32.gmra.mxu0 %v1720
    %v1864 = vpop.f32.mrf.mxu0
    %v1865 = vadd.f32 %v1796, %v1864
    %1866 = vmatmul.f32.gmra.mxu0 %v1721
    %v1867 = vpop.f32.mrf.mxu0
    %v1868 = vadd.f32 %v1796, %v1867
    %1869 = vmatmul.f32.gmra.mxu0 %v1722
    %v1870 = vpop.f32.mrf.mxu0
    %v1871 = vadd.f32 %v1796, %v1870
    %1872 = vmatmul.f32.gmra.mxu0 %v1723
    %v1873 = vpop.f32.mrf.mxu0
    %v1874 = vadd.f32 %v1796, %v1873
    %1875 = vmatmul.f32.gmra.mxu0 %v1724
    %v1876 = vpop.f32.mrf.mxu0
    %v1877 = vadd.f32 %v1796, %v1876
    %1878 = vmatmul.f32.gmra.mxu0 %v1725
    %v1879 = vpop.f32.mrf.mxu0
    %v1880 = vadd.f32 %v1796, %v1879
    %1881 = vmatmul.f32.gmra.mxu0 %v1726
    %v1882 = vpop.f32.mrf.mxu0
    %v1883 = vadd.f32 %v1796, %v1882
    %1884 = vdwg.mxu0
    %1885 = vmatpush.msra.mxu0 %v1790
    %1886 = vmatpush.msra.mxu0 %v1786
    %1887 = vmatpush.msra.mxu0 %v1782
    %1888 = vmatpush.msra.mxu0 %v1778
    %1889 = vmatpush.msra.mxu0 %v1774
    %1890 = vmatpush.msra.mxu0 %v1770
    %1891 = vmatpush.msra.mxu0 %v1766
    %1892 = vmatpush.msra.mxu0 %v1762
    %1893 = vmatpush.msra.mxu0 %v1758
    %1894 = vmatpush.msra.mxu0 %v1754
    %1895 = vmatpush.msra.mxu0 %v1750
    %1896 = vmatpush.msra.mxu0 %v1746
    %1897 = vmatpush.msra.mxu0 %v1742
    %1898 = vmatpush.msra.mxu0 %v1738
    %1899 = vmatpush.msra.mxu0 %v1734
    %1900 = vmatpush.msra.mxu0 %v1730
    %1901 = vmatmul.f32.gmra.mxu0 %v1719
    %v1902 = vpop.f32.mrf.mxu0
    %v1903 = vadd.f32 %v1797, %v1902
    %1904 = vmatmul.f32.gmra.mxu0 %v1720
    %v1905 = vpop.f32.mrf.mxu0
    %v1906 = vadd.f32 %v1797, %v1905
    %1907 = vmatmul.f32.gmra.mxu0 %v1721
    %v1908 = vpop.f32.mrf.mxu0
    %v1909 = vadd.f32 %v1797, %v1908
    %1910 = vmatmul.f32.gmra.mxu0 %v1722
    %v1911 = vpop.f32.mrf.mxu0
    %v1912 = vadd.f32 %v1797, %v1911
    %1913 = vmatmul.f32.gmra.mxu0 %v1723
    %v1914 = vpop.f32.mrf.mxu0
    %v1915 = vadd.f32 %v1797, %v1914
    %1916 = vmatmul.f32.gmra.mxu0 %v1724
    %v1917 = vpop.f32.mrf.mxu0
    %v1918 = vadd.f32 %v1797, %v1917
    %1919 = vmatmul.f32.gmra.mxu0 %v1725
    %v1920 = vpop.f32.mrf.mxu0
    %v1921 = vadd.f32 %v1797, %v1920
    %1922 = vmatmul.f32.gmra.mxu0 %v1726
    %v1923 = vpop.f32.mrf.mxu0
    %v1924 = vadd.f32 %v1797, %v1923
    %1925 = vdwg.mxu0
    %1926 = vmatpush.msra.mxu0 %v1791
    %1927 = vmatpush.msra.mxu0 %v1787
    %1928 = vmatpush.msra.mxu0 %v1783
    %1929 = vmatpush.msra.mxu0 %v1779
    %1930 = vmatpush.msra.mxu0 %v1775
    %1931 = vmatpush.msra.mxu0 %v1771
    %1932 = vmatpush.msra.mxu0 %v1767
    %1933 = vmatpush.msra.mxu0 %v1763
    %1934 = vmatpush.msra.mxu0 %v1759
    %1935 = vmatpush.msra.mxu0 %v1755
    %1936 = vmatpush.msra.mxu0 %v1751
    %1937 = vmatpush.msra.mxu0 %v1747
    %1938 = vmatpush.msra.mxu0 %v1743
    %1939 = vmatpush.msra.mxu0 %v1739
    %1940 = vmatpush.msra.mxu0 %v1735
    %1941 = vmatpush.msra.mxu0 %v1731
    %1942 = vmatmul.f32.gmra.mxu0 %v1719
    %v1943 = vpop.f32.mrf.mxu0
    %v1944 = vadd.f32 %v1798, %v1943
    %1945 = vmatmul.f32.gmra.mxu0 %v1720
    %v1946 = vpop.f32.mrf.mxu0
    %v1947 = vadd.f32 %v1798, %v1946
    %1948 = vmatmul.f32.gmra.mxu0 %v1721
    %v1949 = vpop.f32.mrf.mxu0
    %v1950 = vadd.f32 %v1798, %v1949
    %1951 = vmatmul.f32.gmra.mxu0 %v1722
    %v1952 = vpop.f32.mrf.mxu0
    %v1953 = vadd.f32 %v1798, %v1952
    %1954 = vmatmul.f32.gmra.mxu0 %v1723
    %v1955 = vpop.f32.mrf.mxu0
    %v1956 = vadd.f32 %v1798, %v1955
    %1957 = vmatmul.f32.gmra.mxu0 %v1724
    %v1958 = vpop.f32.mrf.mxu0
    %v1959 = vadd.f32 %v1798, %v1958
    %1960 = vmatmul.f32.gmra.mxu0 %v1725
    %v1961 = vpop.f32.mrf.mxu0
    %v1962 = vadd.f32 %v1798, %v1961
    %1963 = vmatmul.f32.gmra.mxu0 %v1726
    %v1964 = vpop.f32.mrf.mxu0
    %v1965 = vadd.f32 %v1798, %v1964
    %1966 = vdwg.mxu0
    %1967 = vst [vmem:[#allocation3] sm:$0xff] %v1821
    %1968 = vst [vmem:[#allocation3 + $0x8] sm:$0xff] %v1862
    %1969 = vst [vmem:[#allocation3 + $0x10] sm:$0xff] %v1903
    %1970 = vst [vmem:[#allocation3 + $0x18] sm:$0xff] %v1944
    %1971 = vst [vmem:[#allocation3 + $0x20] sm:$0xff] %v1824
    %1972 = vst [vmem:[#allocation3 + $0x28] sm:$0xff] %v1865
    %1973 = vst [vmem:[#allocation3 + $0x30] sm:$0xff] %v1906
    %1974 = vst [vmem:[#allocation3 + $0x38] sm:$0xff] %v1947
    %1975 = vst [vmem:[#allocation3 + $0x40] sm:$0xff] %v1827
    %1976 = vst [vmem:[#allocation3 + $0x48] sm:$0xff] %v1868
    %1977 = vst [vmem:[#allocation3 + $0x50] sm:$0xff] %v1909
    %1978 = vst [vmem:[#allocation3 + $0x58] sm:$0xff] %v1950
    %1979 = vst [vmem:[#allocation3 + $0x60] sm:$0xff] %v1830
    %1980 = vst [vmem:[#allocation3 + $0x68] sm:$0xff] %v1871
    %1981 = vst [vmem:[#allocation3 + $0x70] sm:$0xff] %v1912
    %1982 = vst [vmem:[#allocation3 + $0x78] sm:$0xff] %v1953
    %1983 = vst [vmem:[#allocation3 + $0x80] sm:$0xff] %v1833
    %1984 = vst [vmem:[#allocation3 + $0x88] sm:$0xff] %v1874
    %1985 = vst [vmem:[#allocation3 + $0x90] sm:$0xff] %v1915
    %1986 = vst [vmem:[#allocation3 + $0x98] sm:$0xff] %v1956
    %1987 = vst [vmem:[#allocation3 + $0xa0] sm:$0xff] %v1836
    %1988 = vst [vmem:[#allocation3 + $0xa8] sm:$0xff] %v1877
    %1989 = vst [vmem:[#allocation3 + $0xb0] sm:$0xff] %v1918
    %1990 = vst [vmem:[#allocation3 + $0xb8] sm:$0xff] %v1959
    %1991 = vst [vmem:[#allocation3 + $0xc0] sm:$0xff] %v1839
    %1992 = vst [vmem:[#allocation3 + $0xc8] sm:$0xff] %v1880
    %1993 = vst [vmem:[#allocation3 + $0xd0] sm:$0xff] %v1921
    %1994 = vst [vmem:[#allocation3 + $0xd8] sm:$0xff] %v1962
    %1995 = vst [vmem:[#allocation3 + $0xe0] sm:$0xff] %v1842
    %1996 = vst [vmem:[#allocation3 + $0xe8] sm:$0xff] %v1883
    %1997 = vst [vmem:[#allocation3 + $0xf0] sm:$0xff] %v1924
    %1998 = vst [vmem:[#allocation3 + $0xf8] sm:$0xff] %v1965
    %s1999 = scalar_lea.vmem [#allocation9], 512
    %v2000 = vld [vmem:[%s1999] sm:$0xff]
    %v2001 = vld [vmem:[%s1999 + $0x8] sm:$0xff]
    %v2002 = vld [vmem:[%s1999 + $0x10] sm:$0xff]
    %v2003 = vld [vmem:[%s1999 + $0x18] sm:$0xff]
    %v2004 = vld [vmem:[%s1999 + $0x20] sm:$0xff]
    %v2005 = vld [vmem:[%s1999 + $0x28] sm:$0xff]
    %v2006 = vld [vmem:[%s1999 + $0x30] sm:$0xff]
    %v2007 = vld [vmem:[%s1999 + $0x38] sm:$0xff]
    %v2008 = vld [vmem:[%s1999 + $0x40] sm:$0xff]
    %v2009 = vld [vmem:[%s1999 + $0x48] sm:$0xff]
    %v2010 = vld [vmem:[%s1999 + $0x50] sm:$0xff]
    %v2011 = vld [vmem:[%s1999 + $0x58] sm:$0xff]
    %v2012 = vld [vmem:[%s1999 + $0x60] sm:$0xff]
    %v2013 = vld [vmem:[%s1999 + $0x68] sm:$0xff]
    %v2014 = vld [vmem:[%s1999 + $0x70] sm:$0xff]
    %v2015 = vld [vmem:[%s1999 + $0x78] sm:$0xff]
    %v2016 = vld [vmem:[%s1999 + $0x80] sm:$0xff]
    %v2017 = vld [vmem:[%s1999 + $0x88] sm:$0xff]
    %v2018 = vld [vmem:[%s1999 + $0x90] sm:$0xff]
    %v2019 = vld [vmem:[%s1999 + $0x98] sm:$0xff]
    %v2020 = vld [vmem:[%s1999 + $0xa0] sm:$0xff]
    %v2021 = vld [vmem:[%s1999 + $0xa8] sm:$0xff]
    %v2022 = vld [vmem:[%s1999 + $0xb0] sm:$0xff]
    %v2023 = vld [vmem:[%s1999 + $0xb8] sm:$0xff]
    %v2024 = vld [vmem:[%s1999 + $0xc0] sm:$0xff]
    %v2025 = vld [vmem:[%s1999 + $0xc8] sm:$0xff]
    %v2026 = vld [vmem:[%s1999 + $0xd0] sm:$0xff]
    %v2027 = vld [vmem:[%s1999 + $0xd8] sm:$0xff]
    %v2028 = vld [vmem:[%s1999 + $0xe0] sm:$0xff]
    %v2029 = vld [vmem:[%s1999 + $0xe8] sm:$0xff]
    %v2030 = vld [vmem:[%s1999 + $0xf0] sm:$0xff]
    %v2031 = vld [vmem:[%s1999 + $0xf8] sm:$0xff]
    %v2032 = vld [vmem:[%s1999 + $0x100] sm:$0xff]
    %v2033 = vld [vmem:[%s1999 + $0x108] sm:$0xff]
    %v2034 = vld [vmem:[%s1999 + $0x110] sm:$0xff]
    %v2035 = vld [vmem:[%s1999 + $0x118] sm:$0xff]
    %v2036 = vld [vmem:[%s1999 + $0x120] sm:$0xff]
    %v2037 = vld [vmem:[%s1999 + $0x128] sm:$0xff]
    %v2038 = vld [vmem:[%s1999 + $0x130] sm:$0xff]
    %v2039 = vld [vmem:[%s1999 + $0x138] sm:$0xff]
    %v2040 = vld [vmem:[%s1999 + $0x140] sm:$0xff]
    %v2041 = vld [vmem:[%s1999 + $0x148] sm:$0xff]
    %v2042 = vld [vmem:[%s1999 + $0x150] sm:$0xff]
    %v2043 = vld [vmem:[%s1999 + $0x158] sm:$0xff]
    %v2044 = vld [vmem:[%s1999 + $0x160] sm:$0xff]
    %v2045 = vld [vmem:[%s1999 + $0x168] sm:$0xff]
    %v2046 = vld [vmem:[%s1999 + $0x170] sm:$0xff]
    %v2047 = vld [vmem:[%s1999 + $0x178] sm:$0xff]
    %v2048 = vld [vmem:[%s1999 + $0x180] sm:$0xff]
    %v2049 = vld [vmem:[%s1999 + $0x188] sm:$0xff]
    %v2050 = vld [vmem:[%s1999 + $0x190] sm:$0xff]
    %v2051 = vld [vmem:[%s1999 + $0x198] sm:$0xff]
    %v2052 = vld [vmem:[%s1999 + $0x1a0] sm:$0xff]
    %v2053 = vld [vmem:[%s1999 + $0x1a8] sm:$0xff]
    %v2054 = vld [vmem:[%s1999 + $0x1b0] sm:$0xff]
    %v2055 = vld [vmem:[%s1999 + $0x1b8] sm:$0xff]
    %v2056 = vld [vmem:[%s1999 + $0x1c0] sm:$0xff]
    %v2057 = vld [vmem:[%s1999 + $0x1c8] sm:$0xff]
    %v2058 = vld [vmem:[%s1999 + $0x1d0] sm:$0xff]
    %v2059 = vld [vmem:[%s1999 + $0x1d8] sm:$0xff]
    %v2060 = vld [vmem:[%s1999 + $0x1e0] sm:$0xff]
    %v2061 = vld [vmem:[%s1999 + $0x1e8] sm:$0xff]
    %v2062 = vld [vmem:[%s1999 + $0x1f0] sm:$0xff]
    %v2063 = vld [vmem:[%s1999 + $0x1f8] sm:$0xff]
    %s2064 = scalar_lea.vmem [#allocation13], 8
    %v2065 = vld [vmem:[%s2064] sm:$0xff]
    %s2066 = scalar_lea.vmem [#allocation15], 8
    %v2067 = vld [vmem:[%s2066] sm:$0xff]
    %v2068 = vld [vmem:[#allocation3] sm:$0xff]
    %v2069 = vld [vmem:[#allocation3 + $0x8] sm:$0xff]
    %v2070 = vld [vmem:[#allocation3 + $0x10] sm:$0xff]
    %v2071 = vld [vmem:[#allocation3 + $0x18] sm:$0xff]
    %2072 = vmatpush.msra.mxu0 %v2060
    %2073 = vmatpush.msra.mxu0 %v2056
    %2074 = vmatpush.msra.mxu0 %v2052
    %2075 = vmatpush.msra.mxu0 %v2048
    %2076 = vmatpush.msra.mxu0 %v2044
    %2077 = vmatpush.msra.mxu0 %v2040
    %2078 = vmatpush.msra.mxu0 %v2036
    %2079 = vmatpush.msra.mxu0 %v2032
    %2080 = vmatpush.msra.mxu0 %v2028
    %2081 = vmatpush.msra.mxu0 %v2024
    %2082 = vmatpush.msra.mxu0 %v2020
    %2083 = vmatpush.msra.mxu0 %v2016
    %2084 = vmatpush.msra.mxu0 %v2012
    %2085 = vmatpush.msra.mxu0 %v2008
    %2086 = vmatpush.msra.mxu0 %v2004
    %2087 = vmatpush.msra.mxu0 %v2000
    %2088 = vmatmul.f32.gmra.mxu0 %v2065
    %v2089 = vpop.f32.mrf.mxu0
    %v2090 = vadd.f32 0.0, %v2089
    %2091 = vdwg.mxu0
    %2092 = vmatpush.msra.mxu0 %v2061
    %2093 = vmatpush.msra.mxu0 %v2057
    %2094 = vmatpush.msra.mxu0 %v2053
    %2095 = vmatpush.msra.mxu0 %v2049
    %2096 = vmatpush.msra.mxu0 %v2045
    %2097 = vmatpush.msra.mxu0 %v2041
    %2098 = vmatpush.msra.mxu0 %v2037
    %2099 = vmatpush.msra.mxu0 %v2033
    %2100 = vmatpush.msra.mxu0 %v2029
    %2101 = vmatpush.msra.mxu0 %v2025
    %2102 = vmatpush.msra.mxu0 %v2021
    %2103 = vmatpush.msra.mxu0 %v2017
    %2104 = vmatpush.msra.mxu0 %v2013
    %2105 = vmatpush.msra.mxu0 %v2009
    %2106 = vmatpush.msra.mxu0 %v2005
    %2107 = vmatpush.msra.mxu0 %v2001
    %2108 = vmatmul.f32.gmra.mxu0 %v2065
    %v2109 = vpop.f32.mrf.mxu0
    %v2110 = vadd.f32 0.0, %v2109
    %2111 = vdwg.mxu0
    %2112 = vmatpush.msra.mxu0 %v2062
    %2113 = vmatpush.msra.mxu0 %v2058
    %2114 = vmatpush.msra.mxu0 %v2054
    %2115 = vmatpush.msra.mxu0 %v2050
    %2116 = vmatpush.msra.mxu0 %v2046
    %2117 = vmatpush.msra.mxu0 %v2042
    %2118 = vmatpush.msra.mxu0 %v2038
    %2119 = vmatpush.msra.mxu0 %v2034
    %2120 = vmatpush.msra.mxu0 %v2030
    %2121 = vmatpush.msra.mxu0 %v2026
    %2122 = vmatpush.msra.mxu0 %v2022
    %2123 = vmatpush.msra.mxu0 %v2018
    %2124 = vmatpush.msra.mxu0 %v2014
    %2125 = vmatpush.msra.mxu0 %v2010
    %2126 = vmatpush.msra.mxu0 %v2006
    %2127 = vmatpush.msra.mxu0 %v2002
    %2128 = vmatmul.f32.gmra.mxu0 %v2065
    %v2129 = vpop.f32.mrf.mxu0
    %v2130 = vadd.f32 0.0, %v2129
    %2131 = vdwg.mxu0
    %2132 = vmatpush.msra.mxu0 %v2063
    %2133 = vmatpush.msra.mxu0 %v2059
    %2134 = vmatpush.msra.mxu0 %v2055
    %2135 = vmatpush.msra.mxu0 %v2051
    %2136 = vmatpush.msra.mxu0 %v2047
    %2137 = vmatpush.msra.mxu0 %v2043
    %2138 = vmatpush.msra.mxu0 %v2039
    %2139 = vmatpush.msra.mxu0 %v2035
    %2140 = vmatpush.msra.mxu0 %v2031
    %2141 = vmatpush.msra.mxu0 %v2027
    %2142 = vmatpush.msra.mxu0 %v2023
    %2143 = vmatpush.msra.mxu0 %v2019
    %2144 = vmatpush.msra.mxu0 %v2015
    %2145 = vmatpush.msra.mxu0 %v2011
    %2146 = vmatpush.msra.mxu0 %v2007
    %2147 = vmatpush.msra.mxu0 %v2003
    %2148 = vmatmul.f32.gmra.mxu0 %v2065
    %v2149 = vpop.f32.mrf.mxu0
    %v2150 = vadd.f32 0.0, %v2149
    %2151 = vdwg.mxu0
    %v2152 = vadd.f32 %v2068, %v2090
    %v2153 = vadd.f32 %v2069, %v2110
    %v2154 = vadd.f32 %v2070, %v2130
    %v2155 = vadd.f32 %v2071, %v2150
    %v2156 = vxor.u32 %v2152, 2147483648
    %v2157 = vmul.f32 %v2156, 1.442695
    %v2158 = vpow.pop %v2157
    %v2159 = vadd.f32 %v2158, 1.0
    %v2160 = vrcp.pop %v2159
    %v2161 = vmul.f32 %v2159, %v2160
    %v2162 = vsub.f32 1.0, %v2161
    %v2163 = vmul.f32 %v2160, %v2162
    %v2164 = vadd.f32 %v2160, %v2163
    %vm2165 = vweird.f32 %v2159
    %vm2166 = vweird.f32 %v2160
    %vm2167 = vmor %vm2165, %vm2166
    %v2168 = vsel %vm2167, %v2160, %v2164
    %v2169 = vand.u32 2147483647, %v2159
    %vm2170 = vcmp.eq.f32.partialorder %v2169, 8.507059e+37
    %v2171 = vand.u32 %v2159, 2147483648
    %v2172 = vor.u32 1.1754944e-38, %v2171
    %v2173 = vsel %vm2170, %v2172, %v2168
    %v2174 = vmul.f32 1.0, %v2173
    %v2175 = vxor.u32 %v2153, 2147483648
    %v2176 = vmul.f32 %v2175, 1.442695
    %v2177 = vpow.pop %v2176
    %v2178 = vadd.f32 %v2177, 1.0
    %v2179 = vrcp.pop %v2178
    %v2180 = vmul.f32 %v2178, %v2179
    %v2181 = vsub.f32 1.0, %v2180
    %v2182 = vmul.f32 %v2179, %v2181
    %v2183 = vadd.f32 %v2179, %v2182
    %vm2184 = vweird.f32 %v2178
    %vm2185 = vweird.f32 %v2179
    %vm2186 = vmor %vm2184, %vm2185
    %v2187 = vsel %vm2186, %v2179, %v2183
    %v2188 = vand.u32 2147483647, %v2178
    %vm2189 = vcmp.eq.f32.partialorder %v2188, 8.507059e+37
    %v2190 = vand.u32 %v2178, 2147483648
    %v2191 = vor.u32 1.1754944e-38, %v2190
    %v2192 = vsel %vm2189, %v2191, %v2187
    %v2193 = vmul.f32 1.0, %v2192
    %v2194 = vtanh.pop %v2154
    %v2195 = vxor.u32 %v2155, 2147483648
    %v2196 = vmul.f32 %v2195, 1.442695
    %v2197 = vpow.pop %v2196
    %v2198 = vadd.f32 %v2197, 1.0
    %v2199 = vrcp.pop %v2198
    %v2200 = vmul.f32 %v2198, %v2199
    %v2201 = vsub.f32 1.0, %v2200
    %v2202 = vmul.f32 %v2199, %v2201
    %v2203 = vadd.f32 %v2199, %v2202
    %vm2204 = vweird.f32 %v2198
    %vm2205 = vweird.f32 %v2199
    %vm2206 = vmor %vm2204, %vm2205
    %v2207 = vsel %vm2206, %v2199, %v2203
    %v2208 = vand.u32 2147483647, %v2198
    %vm2209 = vcmp.eq.f32.partialorder %v2208, 8.507059e+37
    %v2210 = vand.u32 %v2198, 2147483648
    %v2211 = vor.u32 1.1754944e-38, %v2210
    %v2212 = vsel %vm2209, %v2211, %v2207
    %v2213 = vmul.f32 1.0, %v2212
    %v2214 = vmul.f32 %v2193, %v2067
    %v2215 = vmul.f32 %v2174, %v2194
    %v2216 = vadd.f32 %v2214, %v2215
    %v2217 = vtanh.pop %v2216
    %v2218 = vmul.f32 %v2213, %v2217
    %2219 = vst [vmem:[#allocation2] sm:$0xff] %v2218
    %v2220 = vld [vmem:[%s639] sm:$0xff]
    %v2221 = vld [vmem:[%s639 + $0x8] sm:$0xff]
    %v2222 = vld [vmem:[%s639 + $0x10] sm:$0xff]
    %v2223 = vld [vmem:[%s639 + $0x18] sm:$0xff]
    %2224 = vmatpush.msra.mxu0 %v2060
    %2225 = vmatpush.msra.mxu0 %v2056
    %2226 = vmatpush.msra.mxu0 %v2052
    %2227 = vmatpush.msra.mxu0 %v2048
    %2228 = vmatpush.msra.mxu0 %v2044
    %2229 = vmatpush.msra.mxu0 %v2040
    %2230 = vmatpush.msra.mxu0 %v2036
    %2231 = vmatpush.msra.mxu0 %v2032
    %2232 = vmatpush.msra.mxu0 %v2028
    %2233 = vmatpush.msra.mxu0 %v2024
    %2234 = vmatpush.msra.mxu0 %v2020
    %2235 = vmatpush.msra.mxu0 %v2016
    %2236 = vmatpush.msra.mxu0 %v2012
    %2237 = vmatpush.msra.mxu0 %v2008
    %2238 = vmatpush.msra.mxu0 %v2004
    %2239 = vmatpush.msra.mxu0 %v2000
    %2240 = vmatmul.f32.gmra.mxu0 %v2218
    %v2241 = vpop.f32.mrf.mxu0
    %v2242 = vadd.f32 0.0, %v2241
    %2243 = vdwg.mxu0
    %2244 = vmatpush.msra.mxu0 %v2061
    %2245 = vmatpush.msra.mxu0 %v2057
    %2246 = vmatpush.msra.mxu0 %v2053
    %2247 = vmatpush.msra.mxu0 %v2049
    %2248 = vmatpush.msra.mxu0 %v2045
    %2249 = vmatpush.msra.mxu0 %v2041
    %2250 = vmatpush.msra.mxu0 %v2037
    %2251 = vmatpush.msra.mxu0 %v2033
    %2252 = vmatpush.msra.mxu0 %v2029
    %2253 = vmatpush.msra.mxu0 %v2025
    %2254 = vmatpush.msra.mxu0 %v2021
    %2255 = vmatpush.msra.mxu0 %v2017
    %2256 = vmatpush.msra.mxu0 %v2013
    %2257 = vmatpush.msra.mxu0 %v2009
    %2258 = vmatpush.msra.mxu0 %v2005
    %2259 = vmatpush.msra.mxu0 %v2001
    %2260 = vmatmul.f32.gmra.mxu0 %v2218
    %v2261 = vpop.f32.mrf.mxu0
    %v2262 = vadd.f32 0.0, %v2261
    %2263 = vdwg.mxu0
    %2264 = vmatpush.msra.mxu0 %v2062
    %2265 = vmatpush.msra.mxu0 %v2058
    %2266 = vmatpush.msra.mxu0 %v2054
    %2267 = vmatpush.msra.mxu0 %v2050
    %2268 = vmatpush.msra.mxu0 %v2046
    %2269 = vmatpush.msra.mxu0 %v2042
    %2270 = vmatpush.msra.mxu0 %v2038
    %2271 = vmatpush.msra.mxu0 %v2034
    %2272 = vmatpush.msra.mxu0 %v2030
    %2273 = vmatpush.msra.mxu0 %v2026
    %2274 = vmatpush.msra.mxu0 %v2022
    %2275 = vmatpush.msra.mxu0 %v2018
    %2276 = vmatpush.msra.mxu0 %v2014
    %2277 = vmatpush.msra.mxu0 %v2010
    %2278 = vmatpush.msra.mxu0 %v2006
    %2279 = vmatpush.msra.mxu0 %v2002
    %2280 = vmatmul.f32.gmra.mxu0 %v2218
    %v2281 = vpop.f32.mrf.mxu0
    %v2282 = vadd.f32 0.0, %v2281
    %2283 = vdwg.mxu0
    %2284 = vmatpush.msra.mxu0 %v2063
    %2285 = vmatpush.msra.mxu0 %v2059
    %2286 = vmatpush.msra.mxu0 %v2055
    %2287 = vmatpush.msra.mxu0 %v2051
    %2288 = vmatpush.msra.mxu0 %v2047
    %2289 = vmatpush.msra.mxu0 %v2043
    %2290 = vmatpush.msra.mxu0 %v2039
    %2291 = vmatpush.msra.mxu0 %v2035
    %2292 = vmatpush.msra.mxu0 %v2031
    %2293 = vmatpush.msra.mxu0 %v2027
    %2294 = vmatpush.msra.mxu0 %v2023
    %2295 = vmatpush.msra.mxu0 %v2019
    %2296 = vmatpush.msra.mxu0 %v2015
    %2297 = vmatpush.msra.mxu0 %v2011
    %2298 = vmatpush.msra.mxu0 %v2007
    %2299 = vmatpush.msra.mxu0 %v2003
    %2300 = vmatmul.f32.gmra.mxu0 %v2218
    %v2301 = vpop.f32.mrf.mxu0
    %v2302 = vadd.f32 0.0, %v2301
    %2303 = vdwg.mxu0
    %v2304 = vadd.f32 %v2220, %v2242
    %v2305 = vadd.f32 %v2221, %v2262
    %v2306 = vadd.f32 %v2222, %v2282
    %v2307 = vadd.f32 %v2223, %v2302
    %v2308 = vxor.u32 %v2304, 2147483648
    %v2309 = vmul.f32 %v2308, 1.442695
    %v2310 = vpow.pop %v2309
    %v2311 = vadd.f32 %v2310, 1.0
    %v2312 = vrcp.pop %v2311
    %v2313 = vmul.f32 %v2311, %v2312
    %v2314 = vsub.f32 1.0, %v2313
    %v2315 = vmul.f32 %v2312, %v2314
    %v2316 = vadd.f32 %v2312, %v2315
    %vm2317 = vweird.f32 %v2311
    %vm2318 = vweird.f32 %v2312
    %vm2319 = vmor %vm2317, %vm2318
    %v2320 = vsel %vm2319, %v2312, %v2316
    %v2321 = vand.u32 2147483647, %v2311
    %vm2322 = vcmp.eq.f32.partialorder %v2321, 8.507059e+37
    %v2323 = vand.u32 %v2311, 2147483648
    %v2324 = vor.u32 1.1754944e-38, %v2323
    %v2325 = vsel %vm2322, %v2324, %v2320
    %v2326 = vmul.f32 1.0, %v2325
    %v2327 = vxor.u32 %v2305, 2147483648
    %v2328 = vmul.f32 %v2327, 1.442695
    %v2329 = vpow.pop %v2328
    %v2330 = vadd.f32 %v2329, 1.0
    %v2331 = vrcp.pop %v2330
    %v2332 = vmul.f32 %v2330, %v2331
    %v2333 = vsub.f32 1.0, %v2332
    %v2334 = vmul.f32 %v2331, %v2333
    %v2335 = vadd.f32 %v2331, %v2334
    %vm2336 = vweird.f32 %v2330
    %vm2337 = vweird.f32 %v2331
    %vm2338 = vmor %vm2336, %vm2337
    %v2339 = vsel %vm2338, %v2331, %v2335
    %v2340 = vand.u32 2147483647, %v2330
    %vm2341 = vcmp.eq.f32.partialorder %v2340, 8.507059e+37
    %v2342 = vand.u32 %v2330, 2147483648
    %v2343 = vor.u32 1.1754944e-38, %v2342
    %v2344 = vsel %vm2341, %v2343, %v2339
    %v2345 = vmul.f32 1.0, %v2344
    %v2346 = vtanh.pop %v2306
    %v2347 = vxor.u32 %v2307, 2147483648
    %v2348 = vmul.f32 %v2347, 1.442695
    %v2349 = vpow.pop %v2348
    %v2350 = vadd.f32 %v2349, 1.0
    %v2351 = vrcp.pop %v2350
    %v2352 = vmul.f32 %v2350, %v2351
    %v2353 = vsub.f32 1.0, %v2352
    %v2354 = vmul.f32 %v2351, %v2353
    %v2355 = vadd.f32 %v2351, %v2354
    %vm2356 = vweird.f32 %v2350
    %vm2357 = vweird.f32 %v2351
    %vm2358 = vmor %vm2356, %vm2357
    %v2359 = vsel %vm2358, %v2351, %v2355
    %v2360 = vand.u32 2147483647, %v2350
    %vm2361 = vcmp.eq.f32.partialorder %v2360, 8.507059e+37
    %v2362 = vand.u32 %v2350, 2147483648
    %v2363 = vor.u32 1.1754944e-38, %v2362
    %v2364 = vsel %vm2361, %v2363, %v2359
    %v2365 = vmul.f32 1.0, %v2364
    %v2366 = vmul.f32 %v2345, %v2216
    %v2367 = vmul.f32 %v2326, %v2346
    %v2368 = vadd.f32 %v2366, %v2367
    %v2369 = vtanh.pop %v2368
    %v2370 = vmul.f32 %v2365, %v2369
    %2371 = vst [vmem:[%s791] sm:$0xff] %v2370
    %v2372 = vld [vmem:[%s793] sm:$0xff]
    %v2373 = vld [vmem:[%s793 + $0x8] sm:$0xff]
    %v2374 = vld [vmem:[%s793 + $0x10] sm:$0xff]
    %v2375 = vld [vmem:[%s793 + $0x18] sm:$0xff]
    %2376 = vmatpush.msra.mxu0 %v2060
    %2377 = vmatpush.msra.mxu0 %v2056
    %2378 = vmatpush.msra.mxu0 %v2052
    %2379 = vmatpush.msra.mxu0 %v2048
    %2380 = vmatpush.msra.mxu0 %v2044
    %2381 = vmatpush.msra.mxu0 %v2040
    %2382 = vmatpush.msra.mxu0 %v2036
    %2383 = vmatpush.msra.mxu0 %v2032
    %2384 = vmatpush.msra.mxu0 %v2028
    %2385 = vmatpush.msra.mxu0 %v2024
    %2386 = vmatpush.msra.mxu0 %v2020
    %2387 = vmatpush.msra.mxu0 %v2016
    %2388 = vmatpush.msra.mxu0 %v2012
    %2389 = vmatpush.msra.mxu0 %v2008
    %2390 = vmatpush.msra.mxu0 %v2004
    %2391 = vmatpush.msra.mxu0 %v2000
    %2392 = vmatmul.f32.gmra.mxu0 %v2370
    %v2393 = vpop.f32.mrf.mxu0
    %v2394 = vadd.f32 0.0, %v2393
    %2395 = vdwg.mxu0
    %2396 = vmatpush.msra.mxu0 %v2061
    %2397 = vmatpush.msra.mxu0 %v2057
    %2398 = vmatpush.msra.mxu0 %v2053
    %2399 = vmatpush.msra.mxu0 %v2049
    %2400 = vmatpush.msra.mxu0 %v2045
    %2401 = vmatpush.msra.mxu0 %v2041
    %2402 = vmatpush.msra.mxu0 %v2037
    %2403 = vmatpush.msra.mxu0 %v2033
    %2404 = vmatpush.msra.mxu0 %v2029
    %2405 = vmatpush.msra.mxu0 %v2025
    %2406 = vmatpush.msra.mxu0 %v2021
    %2407 = vmatpush.msra.mxu0 %v2017
    %2408 = vmatpush.msra.mxu0 %v2013
    %2409 = vmatpush.msra.mxu0 %v2009
    %2410 = vmatpush.msra.mxu0 %v2005
    %2411 = vmatpush.msra.mxu0 %v2001
    %2412 = vmatmul.f32.gmra.mxu0 %v2370
    %v2413 = vpop.f32.mrf.mxu0
    %v2414 = vadd.f32 0.0, %v2413
    %2415 = vdwg.mxu0
    %2416 = vmatpush.msra.mxu0 %v2062
    %2417 = vmatpush.msra.mxu0 %v2058
    %2418 = vmatpush.msra.mxu0 %v2054
    %2419 = vmatpush.msra.mxu0 %v2050
    %2420 = vmatpush.msra.mxu0 %v2046
    %2421 = vmatpush.msra.mxu0 %v2042
    %2422 = vmatpush.msra.mxu0 %v2038
    %2423 = vmatpush.msra.mxu0 %v2034
    %2424 = vmatpush.msra.mxu0 %v2030
    %2425 = vmatpush.msra.mxu0 %v2026
    %2426 = vmatpush.msra.mxu0 %v2022
    %2427 = vmatpush.msra.mxu0 %v2018
    %2428 = vmatpush.msra.mxu0 %v2014
    %2429 = vmatpush.msra.mxu0 %v2010
    %2430 = vmatpush.msra.mxu0 %v2006
    %2431 = vmatpush.msra.mxu0 %v2002
    %2432 = vmatmul.f32.gmra.mxu0 %v2370
    %v2433 = vpop.f32.mrf.mxu0
    %v2434 = vadd.f32 0.0, %v2433
    %2435 = vdwg.mxu0
    %2436 = vmatpush.msra.mxu0 %v2063
    %2437 = vmatpush.msra.mxu0 %v2059
    %2438 = vmatpush.msra.mxu0 %v2055
    %2439 = vmatpush.msra.mxu0 %v2051
    %2440 = vmatpush.msra.mxu0 %v2047
    %2441 = vmatpush.msra.mxu0 %v2043
    %2442 = vmatpush.msra.mxu0 %v2039
    %2443 = vmatpush.msra.mxu0 %v2035
    %2444 = vmatpush.msra.mxu0 %v2031
    %2445 = vmatpush.msra.mxu0 %v2027
    %2446 = vmatpush.msra.mxu0 %v2023
    %2447 = vmatpush.msra.mxu0 %v2019
    %2448 = vmatpush.msra.mxu0 %v2015
    %2449 = vmatpush.msra.mxu0 %v2011
    %2450 = vmatpush.msra.mxu0 %v2007
    %2451 = vmatpush.msra.mxu0 %v2003
    %2452 = vmatmul.f32.gmra.mxu0 %v2370
    %v2453 = vpop.f32.mrf.mxu0
    %v2454 = vadd.f32 0.0, %v2453
    %2455 = vdwg.mxu0
    %v2456 = vadd.f32 %v2372, %v2394
    %v2457 = vadd.f32 %v2373, %v2414
    %v2458 = vadd.f32 %v2374, %v2434
    %v2459 = vadd.f32 %v2375, %v2454
    %v2460 = vxor.u32 %v2456, 2147483648
    %v2461 = vmul.f32 %v2460, 1.442695
    %v2462 = vpow.pop %v2461
    %v2463 = vadd.f32 %v2462, 1.0
    %v2464 = vrcp.pop %v2463
    %v2465 = vmul.f32 %v2463, %v2464
    %v2466 = vsub.f32 1.0, %v2465
    %v2467 = vmul.f32 %v2464, %v2466
    %v2468 = vadd.f32 %v2464, %v2467
    %vm2469 = vweird.f32 %v2463
    %vm2470 = vweird.f32 %v2464
    %vm2471 = vmor %vm2469, %vm2470
    %v2472 = vsel %vm2471, %v2464, %v2468
    %v2473 = vand.u32 2147483647, %v2463
    %vm2474 = vcmp.eq.f32.partialorder %v2473, 8.507059e+37
    %v2475 = vand.u32 %v2463, 2147483648
    %v2476 = vor.u32 1.1754944e-38, %v2475
    %v2477 = vsel %vm2474, %v2476, %v2472
    %v2478 = vmul.f32 1.0, %v2477
    %v2479 = vxor.u32 %v2457, 2147483648
    %v2480 = vmul.f32 %v2479, 1.442695
    %v2481 = vpow.pop %v2480
    %v2482 = vadd.f32 %v2481, 1.0
    %v2483 = vrcp.pop %v2482
    %v2484 = vmul.f32 %v2482, %v2483
    %v2485 = vsub.f32 1.0, %v2484
    %v2486 = vmul.f32 %v2483, %v2485
    %v2487 = vadd.f32 %v2483, %v2486
    %vm2488 = vweird.f32 %v2482
    %vm2489 = vweird.f32 %v2483
    %vm2490 = vmor %vm2488, %vm2489
    %v2491 = vsel %vm2490, %v2483, %v2487
    %v2492 = vand.u32 2147483647, %v2482
    %vm2493 = vcmp.eq.f32.partialorder %v2492, 8.507059e+37
    %v2494 = vand.u32 %v2482, 2147483648
    %v2495 = vor.u32 1.1754944e-38, %v2494
    %v2496 = vsel %vm2493, %v2495, %v2491
    %v2497 = vmul.f32 1.0, %v2496
    %v2498 = vtanh.pop %v2458
    %v2499 = vxor.u32 %v2459, 2147483648
    %v2500 = vmul.f32 %v2499, 1.442695
    %v2501 = vpow.pop %v2500
    %v2502 = vadd.f32 %v2501, 1.0
    %v2503 = vrcp.pop %v2502
    %v2504 = vmul.f32 %v2502, %v2503
    %v2505 = vsub.f32 1.0, %v2504
    %v2506 = vmul.f32 %v2503, %v2505
    %v2507 = vadd.f32 %v2503, %v2506
    %vm2508 = vweird.f32 %v2502
    %vm2509 = vweird.f32 %v2503
    %vm2510 = vmor %vm2508, %vm2509
    %v2511 = vsel %vm2510, %v2503, %v2507
    %v2512 = vand.u32 2147483647, %v2502
    %vm2513 = vcmp.eq.f32.partialorder %v2512, 8.507059e+37
    %v2514 = vand.u32 %v2502, 2147483648
    %v2515 = vor.u32 1.1754944e-38, %v2514
    %v2516 = vsel %vm2513, %v2515, %v2511
    %v2517 = vmul.f32 1.0, %v2516
    %v2518 = vmul.f32 %v2497, %v2368
    %v2519 = vmul.f32 %v2478, %v2498
    %v2520 = vadd.f32 %v2518, %v2519
    %v2521 = vtanh.pop %v2520
    %v2522 = vmul.f32 %v2517, %v2521
    %2523 = vst [vmem:[%s945] sm:$0xff] %v2522
    %v2524 = vld [vmem:[%s947] sm:$0xff]
    %v2525 = vld [vmem:[%s947 + $0x8] sm:$0xff]
    %v2526 = vld [vmem:[%s947 + $0x10] sm:$0xff]
    %v2527 = vld [vmem:[%s947 + $0x18] sm:$0xff]
    %2528 = vmatpush.msra.mxu0 %v2060
    %2529 = vmatpush.msra.mxu0 %v2056
    %2530 = vmatpush.msra.mxu0 %v2052
    %2531 = vmatpush.msra.mxu0 %v2048
    %2532 = vmatpush.msra.mxu0 %v2044
    %2533 = vmatpush.msra.mxu0 %v2040
    %2534 = vmatpush.msra.mxu0 %v2036
    %2535 = vmatpush.msra.mxu0 %v2032
    %2536 = vmatpush.msra.mxu0 %v2028
    %2537 = vmatpush.msra.mxu0 %v2024
    %2538 = vmatpush.msra.mxu0 %v2020
    %2539 = vmatpush.msra.mxu0 %v2016
    %2540 = vmatpush.msra.mxu0 %v2012
    %2541 = vmatpush.msra.mxu0 %v2008
    %2542 = vmatpush.msra.mxu0 %v2004
    %2543 = vmatpush.msra.mxu0 %v2000
    %2544 = vmatmul.f32.gmra.mxu0 %v2522
    %v2545 = vpop.f32.mrf.mxu0
    %v2546 = vadd.f32 0.0, %v2545
    %2547 = vdwg.mxu0
    %2548 = vmatpush.msra.mxu0 %v2061
    %2549 = vmatpush.msra.mxu0 %v2057
    %2550 = vmatpush.msra.mxu0 %v2053
    %2551 = vmatpush.msra.mxu0 %v2049
    %2552 = vmatpush.msra.mxu0 %v2045
    %2553 = vmatpush.msra.mxu0 %v2041
    %2554 = vmatpush.msra.mxu0 %v2037
    %2555 = vmatpush.msra.mxu0 %v2033
    %2556 = vmatpush.msra.mxu0 %v2029
    %2557 = vmatpush.msra.mxu0 %v2025
    %2558 = vmatpush.msra.mxu0 %v2021
    %2559 = vmatpush.msra.mxu0 %v2017
    %2560 = vmatpush.msra.mxu0 %v2013
    %2561 = vmatpush.msra.mxu0 %v2009
    %2562 = vmatpush.msra.mxu0 %v2005
    %2563 = vmatpush.msra.mxu0 %v2001
    %2564 = vmatmul.f32.gmra.mxu0 %v2522
    %v2565 = vpop.f32.mrf.mxu0
    %v2566 = vadd.f32 0.0, %v2565
    %2567 = vdwg.mxu0
    %2568 = vmatpush.msra.mxu0 %v2062
    %2569 = vmatpush.msra.mxu0 %v2058
    %2570 = vmatpush.msra.mxu0 %v2054
    %2571 = vmatpush.msra.mxu0 %v2050
    %2572 = vmatpush.msra.mxu0 %v2046
    %2573 = vmatpush.msra.mxu0 %v2042
    %2574 = vmatpush.msra.mxu0 %v2038
    %2575 = vmatpush.msra.mxu0 %v2034
    %2576 = vmatpush.msra.mxu0 %v2030
    %2577 = vmatpush.msra.mxu0 %v2026
    %2578 = vmatpush.msra.mxu0 %v2022
    %2579 = vmatpush.msra.mxu0 %v2018
    %2580 = vmatpush.msra.mxu0 %v2014
    %2581 = vmatpush.msra.mxu0 %v2010
    %2582 = vmatpush.msra.mxu0 %v2006
    %2583 = vmatpush.msra.mxu0 %v2002
    %2584 = vmatmul.f32.gmra.mxu0 %v2522
    %v2585 = vpop.f32.mrf.mxu0
    %v2586 = vadd.f32 0.0, %v2585
    %2587 = vdwg.mxu0
    %2588 = vmatpush.msra.mxu0 %v2063
    %2589 = vmatpush.msra.mxu0 %v2059
    %2590 = vmatpush.msra.mxu0 %v2055
    %2591 = vmatpush.msra.mxu0 %v2051
    %2592 = vmatpush.msra.mxu0 %v2047
    %2593 = vmatpush.msra.mxu0 %v2043
    %2594 = vmatpush.msra.mxu0 %v2039
    %2595 = vmatpush.msra.mxu0 %v2035
    %2596 = vmatpush.msra.mxu0 %v2031
    %2597 = vmatpush.msra.mxu0 %v2027
    %2598 = vmatpush.msra.mxu0 %v2023
    %2599 = vmatpush.msra.mxu0 %v2019
    %2600 = vmatpush.msra.mxu0 %v2015
    %2601 = vmatpush.msra.mxu0 %v2011
    %2602 = vmatpush.msra.mxu0 %v2007
    %2603 = vmatpush.msra.mxu0 %v2003
    %2604 = vmatmul.f32.gmra.mxu0 %v2522
    %v2605 = vpop.f32.mrf.mxu0
    %v2606 = vadd.f32 0.0, %v2605
    %2607 = vdwg.mxu0
    %v2608 = vadd.f32 %v2524, %v2546
    %v2609 = vadd.f32 %v2525, %v2566
    %v2610 = vadd.f32 %v2526, %v2586
    %v2611 = vadd.f32 %v2527, %v2606
    %v2612 = vxor.u32 %v2608, 2147483648
    %v2613 = vmul.f32 %v2612, 1.442695
    %v2614 = vpow.pop %v2613
    %v2615 = vadd.f32 %v2614, 1.0
    %v2616 = vrcp.pop %v2615
    %v2617 = vmul.f32 %v2615, %v2616
    %v2618 = vsub.f32 1.0, %v2617
    %v2619 = vmul.f32 %v2616, %v2618
    %v2620 = vadd.f32 %v2616, %v2619
    %vm2621 = vweird.f32 %v2615
    %vm2622 = vweird.f32 %v2616
    %vm2623 = vmor %vm2621, %vm2622
    %v2624 = vsel %vm2623, %v2616, %v2620
    %v2625 = vand.u32 2147483647, %v2615
    %vm2626 = vcmp.eq.f32.partialorder %v2625, 8.507059e+37
    %v2627 = vand.u32 %v2615, 2147483648
    %v2628 = vor.u32 1.1754944e-38, %v2627
    %v2629 = vsel %vm2626, %v2628, %v2624
    %v2630 = vmul.f32 1.0, %v2629
    %v2631 = vxor.u32 %v2609, 2147483648
    %v2632 = vmul.f32 %v2631, 1.442695
    %v2633 = vpow.pop %v2632
    %v2634 = vadd.f32 %v2633, 1.0
    %v2635 = vrcp.pop %v2634
    %v2636 = vmul.f32 %v2634, %v2635
    %v2637 = vsub.f32 1.0, %v2636
    %v2638 = vmul.f32 %v2635, %v2637
    %v2639 = vadd.f32 %v2635, %v2638
    %vm2640 = vweird.f32 %v2634
    %vm2641 = vweird.f32 %v2635
    %vm2642 = vmor %vm2640, %vm2641
    %v2643 = vsel %vm2642, %v2635, %v2639
    %v2644 = vand.u32 2147483647, %v2634
    %vm2645 = vcmp.eq.f32.partialorder %v2644, 8.507059e+37
    %v2646 = vand.u32 %v2634, 2147483648
    %v2647 = vor.u32 1.1754944e-38, %v2646
    %v2648 = vsel %vm2645, %v2647, %v2643
    %v2649 = vmul.f32 1.0, %v2648
    %v2650 = vtanh.pop %v2610
    %v2651 = vxor.u32 %v2611, 2147483648
    %v2652 = vmul.f32 %v2651, 1.442695
    %v2653 = vpow.pop %v2652
    %v2654 = vadd.f32 %v2653, 1.0
    %v2655 = vrcp.pop %v2654
    %v2656 = vmul.f32 %v2654, %v2655
    %v2657 = vsub.f32 1.0, %v2656
    %v2658 = vmul.f32 %v2655, %v2657
    %v2659 = vadd.f32 %v2655, %v2658
    %vm2660 = vweird.f32 %v2654
    %vm2661 = vweird.f32 %v2655
    %vm2662 = vmor %vm2660, %vm2661
    %v2663 = vsel %vm2662, %v2655, %v2659
    %v2664 = vand.u32 2147483647, %v2654
    %vm2665 = vcmp.eq.f32.partialorder %v2664, 8.507059e+37
    %v2666 = vand.u32 %v2654, 2147483648
    %v2667 = vor.u32 1.1754944e-38, %v2666
    %v2668 = vsel %vm2665, %v2667, %v2663
    %v2669 = vmul.f32 1.0, %v2668
    %v2670 = vmul.f32 %v2649, %v2520
    %v2671 = vmul.f32 %v2630, %v2650
    %v2672 = vadd.f32 %v2670, %v2671
    %v2673 = vtanh.pop %v2672
    %v2674 = vmul.f32 %v2669, %v2673
    %2675 = vst [vmem:[%s1099] sm:$0xff] %v2674
    %v2676 = vld [vmem:[%s1101] sm:$0xff]
    %v2677 = vld [vmem:[%s1101 + $0x8] sm:$0xff]
    %v2678 = vld [vmem:[%s1101 + $0x10] sm:$0xff]
    %v2679 = vld [vmem:[%s1101 + $0x18] sm:$0xff]
    %2680 = vmatpush.msra.mxu0 %v2060
    %2681 = vmatpush.msra.mxu0 %v2056
    %2682 = vmatpush.msra.mxu0 %v2052
    %2683 = vmatpush.msra.mxu0 %v2048
    %2684 = vmatpush.msra.mxu0 %v2044
    %2685 = vmatpush.msra.mxu0 %v2040
    %2686 = vmatpush.msra.mxu0 %v2036
    %2687 = vmatpush.msra.mxu0 %v2032
    %2688 = vmatpush.msra.mxu0 %v2028
    %2689 = vmatpush.msra.mxu0 %v2024
    %2690 = vmatpush.msra.mxu0 %v2020
    %2691 = vmatpush.msra.mxu0 %v2016
    %2692 = vmatpush.msra.mxu0 %v2012
    %2693 = vmatpush.msra.mxu0 %v2008
    %2694 = vmatpush.msra.mxu0 %v2004
    %2695 = vmatpush.msra.mxu0 %v2000
    %2696 = vmatmul.f32.gmra.mxu0 %v2674
    %v2697 = vpop.f32.mrf.mxu0
    %v2698 = vadd.f32 0.0, %v2697
    %2699 = vdwg.mxu0
    %2700 = vmatpush.msra.mxu0 %v2061
    %2701 = vmatpush.msra.mxu0 %v2057
    %2702 = vmatpush.msra.mxu0 %v2053
    %2703 = vmatpush.msra.mxu0 %v2049
    %2704 = vmatpush.msra.mxu0 %v2045
    %2705 = vmatpush.msra.mxu0 %v2041
    %2706 = vmatpush.msra.mxu0 %v2037
    %2707 = vmatpush.msra.mxu0 %v2033
    %2708 = vmatpush.msra.mxu0 %v2029
    %2709 = vmatpush.msra.mxu0 %v2025
    %2710 = vmatpush.msra.mxu0 %v2021
    %2711 = vmatpush.msra.mxu0 %v2017
    %2712 = vmatpush.msra.mxu0 %v2013
    %2713 = vmatpush.msra.mxu0 %v2009
    %2714 = vmatpush.msra.mxu0 %v2005
    %2715 = vmatpush.msra.mxu0 %v2001
    %2716 = vmatmul.f32.gmra.mxu0 %v2674
    %v2717 = vpop.f32.mrf.mxu0
    %v2718 = vadd.f32 0.0, %v2717
    %2719 = vdwg.mxu0
    %2720 = vmatpush.msra.mxu0 %v2062
    %2721 = vmatpush.msra.mxu0 %v2058
    %2722 = vmatpush.msra.mxu0 %v2054
    %2723 = vmatpush.msra.mxu0 %v2050
    %2724 = vmatpush.msra.mxu0 %v2046
    %2725 = vmatpush.msra.mxu0 %v2042
    %2726 = vmatpush.msra.mxu0 %v2038
    %2727 = vmatpush.msra.mxu0 %v2034
    %2728 = vmatpush.msra.mxu0 %v2030
    %2729 = vmatpush.msra.mxu0 %v2026
    %2730 = vmatpush.msra.mxu0 %v2022
    %2731 = vmatpush.msra.mxu0 %v2018
    %2732 = vmatpush.msra.mxu0 %v2014
    %2733 = vmatpush.msra.mxu0 %v2010
    %2734 = vmatpush.msra.mxu0 %v2006
    %2735 = vmatpush.msra.mxu0 %v2002
    %2736 = vmatmul.f32.gmra.mxu0 %v2674
    %v2737 = vpop.f32.mrf.mxu0
    %v2738 = vadd.f32 0.0, %v2737
    %2739 = vdwg.mxu0
    %2740 = vmatpush.msra.mxu0 %v2063
    %2741 = vmatpush.msra.mxu0 %v2059
    %2742 = vmatpush.msra.mxu0 %v2055
    %2743 = vmatpush.msra.mxu0 %v2051
    %2744 = vmatpush.msra.mxu0 %v2047
    %2745 = vmatpush.msra.mxu0 %v2043
    %2746 = vmatpush.msra.mxu0 %v2039
    %2747 = vmatpush.msra.mxu0 %v2035
    %2748 = vmatpush.msra.mxu0 %v2031
    %2749 = vmatpush.msra.mxu0 %v2027
    %2750 = vmatpush.msra.mxu0 %v2023
    %2751 = vmatpush.msra.mxu0 %v2019
    %2752 = vmatpush.msra.mxu0 %v2015
    %2753 = vmatpush.msra.mxu0 %v2011
    %2754 = vmatpush.msra.mxu0 %v2007
    %2755 = vmatpush.msra.mxu0 %v2003
    %2756 = vmatmul.f32.gmra.mxu0 %v2674
    %v2757 = vpop.f32.mrf.mxu0
    %v2758 = vadd.f32 0.0, %v2757
    %2759 = vdwg.mxu0
    %v2760 = vadd.f32 %v2676, %v2698
    %v2761 = vadd.f32 %v2677, %v2718
    %v2762 = vadd.f32 %v2678, %v2738
    %v2763 = vadd.f32 %v2679, %v2758
    %v2764 = vxor.u32 %v2760, 2147483648
    %v2765 = vmul.f32 %v2764, 1.442695
    %v2766 = vpow.pop %v2765
    %v2767 = vadd.f32 %v2766, 1.0
    %v2768 = vrcp.pop %v2767
    %v2769 = vmul.f32 %v2767, %v2768
    %v2770 = vsub.f32 1.0, %v2769
    %v2771 = vmul.f32 %v2768, %v2770
    %v2772 = vadd.f32 %v2768, %v2771
    %vm2773 = vweird.f32 %v2767
    %vm2774 = vweird.f32 %v2768
    %vm2775 = vmor %vm2773, %vm2774
    %v2776 = vsel %vm2775, %v2768, %v2772
    %v2777 = vand.u32 2147483647, %v2767
    %vm2778 = vcmp.eq.f32.partialorder %v2777, 8.507059e+37
    %v2779 = vand.u32 %v2767, 2147483648
    %v2780 = vor.u32 1.1754944e-38, %v2779
    %v2781 = vsel %vm2778, %v2780, %v2776
    %v2782 = vmul.f32 1.0, %v2781
    %v2783 = vxor.u32 %v2761, 2147483648
    %v2784 = vmul.f32 %v2783, 1.442695
    %v2785 = vpow.pop %v2784
    %v2786 = vadd.f32 %v2785, 1.0
    %v2787 = vrcp.pop %v2786
    %v2788 = vmul.f32 %v2786, %v2787
    %v2789 = vsub.f32 1.0, %v2788
    %v2790 = vmul.f32 %v2787, %v2789
    %v2791 = vadd.f32 %v2787, %v2790
    %vm2792 = vweird.f32 %v2786
    %vm2793 = vweird.f32 %v2787
    %vm2794 = vmor %vm2792, %vm2793
    %v2795 = vsel %vm2794, %v2787, %v2791
    %v2796 = vand.u32 2147483647, %v2786
    %vm2797 = vcmp.eq.f32.partialorder %v2796, 8.507059e+37
    %v2798 = vand.u32 %v2786, 2147483648
    %v2799 = vor.u32 1.1754944e-38, %v2798
    %v2800 = vsel %vm2797, %v2799, %v2795
    %v2801 = vmul.f32 1.0, %v2800
    %v2802 = vtanh.pop %v2762
    %v2803 = vxor.u32 %v2763, 2147483648
    %v2804 = vmul.f32 %v2803, 1.442695
    %v2805 = vpow.pop %v2804
    %v2806 = vadd.f32 %v2805, 1.0
    %v2807 = vrcp.pop %v2806
    %v2808 = vmul.f32 %v2806, %v2807
    %v2809 = vsub.f32 1.0, %v2808
    %v2810 = vmul.f32 %v2807, %v2809
    %v2811 = vadd.f32 %v2807, %v2810
    %vm2812 = vweird.f32 %v2806
    %vm2813 = vweird.f32 %v2807
    %vm2814 = vmor %vm2812, %vm2813
    %v2815 = vsel %vm2814, %v2807, %v2811
    %v2816 = vand.u32 2147483647, %v2806
    %vm2817 = vcmp.eq.f32.partialorder %v2816, 8.507059e+37
    %v2818 = vand.u32 %v2806, 2147483648
    %v2819 = vor.u32 1.1754944e-38, %v2818
    %v2820 = vsel %vm2817, %v2819, %v2815
    %v2821 = vmul.f32 1.0, %v2820
    %v2822 = vmul.f32 %v2801, %v2672
    %v2823 = vmul.f32 %v2782, %v2802
    %v2824 = vadd.f32 %v2822, %v2823
    %v2825 = vtanh.pop %v2824
    %v2826 = vmul.f32 %v2821, %v2825
    %2827 = vst [vmem:[%s1253] sm:$0xff] %v2826
    %v2828 = vld [vmem:[%s1255] sm:$0xff]
    %v2829 = vld [vmem:[%s1255 + $0x8] sm:$0xff]
    %v2830 = vld [vmem:[%s1255 + $0x10] sm:$0xff]
    %v2831 = vld [vmem:[%s1255 + $0x18] sm:$0xff]
    %2832 = vmatpush.msra.mxu0 %v2060
    %2833 = vmatpush.msra.mxu0 %v2056
    %2834 = vmatpush.msra.mxu0 %v2052
    %2835 = vmatpush.msra.mxu0 %v2048
    %2836 = vmatpush.msra.mxu0 %v2044
    %2837 = vmatpush.msra.mxu0 %v2040
    %2838 = vmatpush.msra.mxu0 %v2036
    %2839 = vmatpush.msra.mxu0 %v2032
    %2840 = vmatpush.msra.mxu0 %v2028
    %2841 = vmatpush.msra.mxu0 %v2024
    %2842 = vmatpush.msra.mxu0 %v2020
    %2843 = vmatpush.msra.mxu0 %v2016
    %2844 = vmatpush.msra.mxu0 %v2012
    %2845 = vmatpush.msra.mxu0 %v2008
    %2846 = vmatpush.msra.mxu0 %v2004
    %2847 = vmatpush.msra.mxu0 %v2000
    %2848 = vmatmul.f32.gmra.mxu0 %v2826
    %v2849 = vpop.f32.mrf.mxu0
    %v2850 = vadd.f32 0.0, %v2849
    %2851 = vdwg.mxu0
    %2852 = vmatpush.msra.mxu0 %v2061
    %2853 = vmatpush.msra.mxu0 %v2057
    %2854 = vmatpush.msra.mxu0 %v2053
    %2855 = vmatpush.msra.mxu0 %v2049
    %2856 = vmatpush.msra.mxu0 %v2045
    %2857 = vmatpush.msra.mxu0 %v2041
    %2858 = vmatpush.msra.mxu0 %v2037
    %2859 = vmatpush.msra.mxu0 %v2033
    %2860 = vmatpush.msra.mxu0 %v2029
    %2861 = vmatpush.msra.mxu0 %v2025
    %2862 = vmatpush.msra.mxu0 %v2021
    %2863 = vmatpush.msra.mxu0 %v2017
    %2864 = vmatpush.msra.mxu0 %v2013
    %2865 = vmatpush.msra.mxu0 %v2009
    %2866 = vmatpush.msra.mxu0 %v2005
    %2867 = vmatpush.msra.mxu0 %v2001
    %2868 = vmatmul.f32.gmra.mxu0 %v2826
    %v2869 = vpop.f32.mrf.mxu0
    %v2870 = vadd.f32 0.0, %v2869
    %2871 = vdwg.mxu0
    %2872 = vmatpush.msra.mxu0 %v2062
    %2873 = vmatpush.msra.mxu0 %v2058
    %2874 = vmatpush.msra.mxu0 %v2054
    %2875 = vmatpush.msra.mxu0 %v2050
    %2876 = vmatpush.msra.mxu0 %v2046
    %2877 = vmatpush.msra.mxu0 %v2042
    %2878 = vmatpush.msra.mxu0 %v2038
    %2879 = vmatpush.msra.mxu0 %v2034
    %2880 = vmatpush.msra.mxu0 %v2030
    %2881 = vmatpush.msra.mxu0 %v2026
    %2882 = vmatpush.msra.mxu0 %v2022
    %2883 = vmatpush.msra.mxu0 %v2018
    %2884 = vmatpush.msra.mxu0 %v2014
    %2885 = vmatpush.msra.mxu0 %v2010
    %2886 = vmatpush.msra.mxu0 %v2006
    %2887 = vmatpush.msra.mxu0 %v2002
    %2888 = vmatmul.f32.gmra.mxu0 %v2826
    %v2889 = vpop.f32.mrf.mxu0
    %v2890 = vadd.f32 0.0, %v2889
    %2891 = vdwg.mxu0
    %2892 = vmatpush.msra.mxu0 %v2063
    %2893 = vmatpush.msra.mxu0 %v2059
    %2894 = vmatpush.msra.mxu0 %v2055
    %2895 = vmatpush.msra.mxu0 %v2051
    %2896 = vmatpush.msra.mxu0 %v2047
    %2897 = vmatpush.msra.mxu0 %v2043
    %2898 = vmatpush.msra.mxu0 %v2039
    %2899 = vmatpush.msra.mxu0 %v2035
    %2900 = vmatpush.msra.mxu0 %v2031
    %2901 = vmatpush.msra.mxu0 %v2027
    %2902 = vmatpush.msra.mxu0 %v2023
    %2903 = vmatpush.msra.mxu0 %v2019
    %2904 = vmatpush.msra.mxu0 %v2015
    %2905 = vmatpush.msra.mxu0 %v2011
    %2906 = vmatpush.msra.mxu0 %v2007
    %2907 = vmatpush.msra.mxu0 %v2003
    %2908 = vmatmul.f32.gmra.mxu0 %v2826
    %v2909 = vpop.f32.mrf.mxu0
    %v2910 = vadd.f32 0.0, %v2909
    %2911 = vdwg.mxu0
    %v2912 = vadd.f32 %v2828, %v2850
    %v2913 = vadd.f32 %v2829, %v2870
    %v2914 = vadd.f32 %v2830, %v2890
    %v2915 = vadd.f32 %v2831, %v2910
    %v2916 = vxor.u32 %v2912, 2147483648
    %v2917 = vmul.f32 %v2916, 1.442695
    %v2918 = vpow.pop %v2917
    %v2919 = vadd.f32 %v2918, 1.0
    %v2920 = vrcp.pop %v2919
    %v2921 = vmul.f32 %v2919, %v2920
    %v2922 = vsub.f32 1.0, %v2921
    %v2923 = vmul.f32 %v2920, %v2922
    %v2924 = vadd.f32 %v2920, %v2923
    %vm2925 = vweird.f32 %v2919
    %vm2926 = vweird.f32 %v2920
    %vm2927 = vmor %vm2925, %vm2926
    %v2928 = vsel %vm2927, %v2920, %v2924
    %v2929 = vand.u32 2147483647, %v2919
    %vm2930 = vcmp.eq.f32.partialorder %v2929, 8.507059e+37
    %v2931 = vand.u32 %v2919, 2147483648
    %v2932 = vor.u32 1.1754944e-38, %v2931
    %v2933 = vsel %vm2930, %v2932, %v2928
    %v2934 = vmul.f32 1.0, %v2933
    %v2935 = vxor.u32 %v2913, 2147483648
    %v2936 = vmul.f32 %v2935, 1.442695
    %v2937 = vpow.pop %v2936
    %v2938 = vadd.f32 %v2937, 1.0
    %v2939 = vrcp.pop %v2938
    %v2940 = vmul.f32 %v2938, %v2939
    %v2941 = vsub.f32 1.0, %v2940
    %v2942 = vmul.f32 %v2939, %v2941
    %v2943 = vadd.f32 %v2939, %v2942
    %vm2944 = vweird.f32 %v2938
    %vm2945 = vweird.f32 %v2939
    %vm2946 = vmor %vm2944, %vm2945
    %v2947 = vsel %vm2946, %v2939, %v2943
    %v2948 = vand.u32 2147483647, %v2938
    %vm2949 = vcmp.eq.f32.partialorder %v2948, 8.507059e+37
    %v2950 = vand.u32 %v2938, 2147483648
    %v2951 = vor.u32 1.1754944e-38, %v2950
    %v2952 = vsel %vm2949, %v2951, %v2947
    %v2953 = vmul.f32 1.0, %v2952
    %v2954 = vtanh.pop %v2914
    %v2955 = vxor.u32 %v2915, 2147483648
    %v2956 = vmul.f32 %v2955, 1.442695
    %v2957 = vpow.pop %v2956
    %v2958 = vadd.f32 %v2957, 1.0
    %v2959 = vrcp.pop %v2958
    %v2960 = vmul.f32 %v2958, %v2959
    %v2961 = vsub.f32 1.0, %v2960
    %v2962 = vmul.f32 %v2959, %v2961
    %v2963 = vadd.f32 %v2959, %v2962
    %vm2964 = vweird.f32 %v2958
    %vm2965 = vweird.f32 %v2959
    %vm2966 = vmor %vm2964, %vm2965
    %v2967 = vsel %vm2966, %v2959, %v2963
    %v2968 = vand.u32 2147483647, %v2958
    %vm2969 = vcmp.eq.f32.partialorder %v2968, 8.507059e+37
    %v2970 = vand.u32 %v2958, 2147483648
    %v2971 = vor.u32 1.1754944e-38, %v2970
    %v2972 = vsel %vm2969, %v2971, %v2967
    %v2973 = vmul.f32 1.0, %v2972
    %v2974 = vmul.f32 %v2953, %v2824
    %v2975 = vmul.f32 %v2934, %v2954
    %v2976 = vadd.f32 %v2974, %v2975
    %v2977 = vtanh.pop %v2976
    %v2978 = vmul.f32 %v2973, %v2977
    %2979 = vst [vmem:[%s1407] sm:$0xff] %v2978
    %v2980 = vld [vmem:[%s1409] sm:$0xff]
    %v2981 = vld [vmem:[%s1409 + $0x8] sm:$0xff]
    %v2982 = vld [vmem:[%s1409 + $0x10] sm:$0xff]
    %v2983 = vld [vmem:[%s1409 + $0x18] sm:$0xff]
    %2984 = vmatpush.msra.mxu0 %v2060
    %2985 = vmatpush.msra.mxu0 %v2056
    %2986 = vmatpush.msra.mxu0 %v2052
    %2987 = vmatpush.msra.mxu0 %v2048
    %2988 = vmatpush.msra.mxu0 %v2044
    %2989 = vmatpush.msra.mxu0 %v2040
    %2990 = vmatpush.msra.mxu0 %v2036
    %2991 = vmatpush.msra.mxu0 %v2032
    %2992 = vmatpush.msra.mxu0 %v2028
    %2993 = vmatpush.msra.mxu0 %v2024
    %2994 = vmatpush.msra.mxu0 %v2020
    %2995 = vmatpush.msra.mxu0 %v2016
    %2996 = vmatpush.msra.mxu0 %v2012
    %2997 = vmatpush.msra.mxu0 %v2008
    %2998 = vmatpush.msra.mxu0 %v2004
    %2999 = vmatpush.msra.mxu0 %v2000
    %3000 = vmatmul.f32.gmra.mxu0 %v2978
    %v3001 = vpop.f32.mrf.mxu0
    %v3002 = vadd.f32 0.0, %v3001
    %3003 = vdwg.mxu0
    %3004 = vmatpush.msra.mxu0 %v2061
    %3005 = vmatpush.msra.mxu0 %v2057
    %3006 = vmatpush.msra.mxu0 %v2053
    %3007 = vmatpush.msra.mxu0 %v2049
    %3008 = vmatpush.msra.mxu0 %v2045
    %3009 = vmatpush.msra.mxu0 %v2041
    %3010 = vmatpush.msra.mxu0 %v2037
    %3011 = vmatpush.msra.mxu0 %v2033
    %3012 = vmatpush.msra.mxu0 %v2029
    %3013 = vmatpush.msra.mxu0 %v2025
    %3014 = vmatpush.msra.mxu0 %v2021
    %3015 = vmatpush.msra.mxu0 %v2017
    %3016 = vmatpush.msra.mxu0 %v2013
    %3017 = vmatpush.msra.mxu0 %v2009
    %3018 = vmatpush.msra.mxu0 %v2005
    %3019 = vmatpush.msra.mxu0 %v2001
    %3020 = vmatmul.f32.gmra.mxu0 %v2978
    %v3021 = vpop.f32.mrf.mxu0
    %v3022 = vadd.f32 0.0, %v3021
    %3023 = vdwg.mxu0
    %3024 = vmatpush.msra.mxu0 %v2062
    %3025 = vmatpush.msra.mxu0 %v2058
    %3026 = vmatpush.msra.mxu0 %v2054
    %3027 = vmatpush.msra.mxu0 %v2050
    %3028 = vmatpush.msra.mxu0 %v2046
    %3029 = vmatpush.msra.mxu0 %v2042
    %3030 = vmatpush.msra.mxu0 %v2038
    %3031 = vmatpush.msra.mxu0 %v2034
    %3032 = vmatpush.msra.mxu0 %v2030
    %3033 = vmatpush.msra.mxu0 %v2026
    %3034 = vmatpush.msra.mxu0 %v2022
    %3035 = vmatpush.msra.mxu0 %v2018
    %3036 = vmatpush.msra.mxu0 %v2014
    %3037 = vmatpush.msra.mxu0 %v2010
    %3038 = vmatpush.msra.mxu0 %v2006
    %3039 = vmatpush.msra.mxu0 %v2002
    %3040 = vmatmul.f32.gmra.mxu0 %v2978
    %v3041 = vpop.f32.mrf.mxu0
    %v3042 = vadd.f32 0.0, %v3041
    %3043 = vdwg.mxu0
    %3044 = vmatpush.msra.mxu0 %v2063
    %3045 = vmatpush.msra.mxu0 %v2059
    %3046 = vmatpush.msra.mxu0 %v2055
    %3047 = vmatpush.msra.mxu0 %v2051
    %3048 = vmatpush.msra.mxu0 %v2047
    %3049 = vmatpush.msra.mxu0 %v2043
    %3050 = vmatpush.msra.mxu0 %v2039
    %3051 = vmatpush.msra.mxu0 %v2035
    %3052 = vmatpush.msra.mxu0 %v2031
    %3053 = vmatpush.msra.mxu0 %v2027
    %3054 = vmatpush.msra.mxu0 %v2023
    %3055 = vmatpush.msra.mxu0 %v2019
    %3056 = vmatpush.msra.mxu0 %v2015
    %3057 = vmatpush.msra.mxu0 %v2011
    %3058 = vmatpush.msra.mxu0 %v2007
    %3059 = vmatpush.msra.mxu0 %v2003
    %3060 = vmatmul.f32.gmra.mxu0 %v2978
    %v3061 = vpop.f32.mrf.mxu0
    %v3062 = vadd.f32 0.0, %v3061
    %3063 = vdwg.mxu0
    %v3064 = vadd.f32 %v2980, %v3002
    %v3065 = vadd.f32 %v2981, %v3022
    %v3066 = vadd.f32 %v2982, %v3042
    %v3067 = vadd.f32 %v2983, %v3062
    %v3068 = vxor.u32 %v3064, 2147483648
    %v3069 = vmul.f32 %v3068, 1.442695
    %v3070 = vpow.pop %v3069
    %v3071 = vadd.f32 %v3070, 1.0
    %v3072 = vrcp.pop %v3071
    %v3073 = vmul.f32 %v3071, %v3072
    %v3074 = vsub.f32 1.0, %v3073
    %v3075 = vmul.f32 %v3072, %v3074
    %v3076 = vadd.f32 %v3072, %v3075
    %vm3077 = vweird.f32 %v3071
    %vm3078 = vweird.f32 %v3072
    %vm3079 = vmor %vm3077, %vm3078
    %v3080 = vsel %vm3079, %v3072, %v3076
    %v3081 = vand.u32 2147483647, %v3071
    %vm3082 = vcmp.eq.f32.partialorder %v3081, 8.507059e+37
    %v3083 = vand.u32 %v3071, 2147483648
    %v3084 = vor.u32 1.1754944e-38, %v3083
    %v3085 = vsel %vm3082, %v3084, %v3080
    %v3086 = vmul.f32 1.0, %v3085
    %v3087 = vxor.u32 %v3065, 2147483648
    %v3088 = vmul.f32 %v3087, 1.442695
    %v3089 = vpow.pop %v3088
    %v3090 = vadd.f32 %v3089, 1.0
    %v3091 = vrcp.pop %v3090
    %v3092 = vmul.f32 %v3090, %v3091
    %v3093 = vsub.f32 1.0, %v3092
    %v3094 = vmul.f32 %v3091, %v3093
    %v3095 = vadd.f32 %v3091, %v3094
    %vm3096 = vweird.f32 %v3090
    %vm3097 = vweird.f32 %v3091
    %vm3098 = vmor %vm3096, %vm3097
    %v3099 = vsel %vm3098, %v3091, %v3095
    %v3100 = vand.u32 2147483647, %v3090
    %vm3101 = vcmp.eq.f32.partialorder %v3100, 8.507059e+37
    %v3102 = vand.u32 %v3090, 2147483648
    %v3103 = vor.u32 1.1754944e-38, %v3102
    %v3104 = vsel %vm3101, %v3103, %v3099
    %v3105 = vmul.f32 1.0, %v3104
    %v3106 = vtanh.pop %v3066
    %v3107 = vxor.u32 %v3067, 2147483648
    %v3108 = vmul.f32 %v3107, 1.442695
    %v3109 = vpow.pop %v3108
    %v3110 = vadd.f32 %v3109, 1.0
    %v3111 = vrcp.pop %v3110
    %v3112 = vmul.f32 %v3110, %v3111
    %v3113 = vsub.f32 1.0, %v3112
    %v3114 = vmul.f32 %v3111, %v3113
    %v3115 = vadd.f32 %v3111, %v3114
    %vm3116 = vweird.f32 %v3110
    %vm3117 = vweird.f32 %v3111
    %vm3118 = vmor %vm3116, %vm3117
    %v3119 = vsel %vm3118, %v3111, %v3115
    %v3120 = vand.u32 2147483647, %v3110
    %vm3121 = vcmp.eq.f32.partialorder %v3120, 8.507059e+37
    %v3122 = vand.u32 %v3110, 2147483648
    %v3123 = vor.u32 1.1754944e-38, %v3122
    %v3124 = vsel %vm3121, %v3123, %v3119
    %v3125 = vmul.f32 1.0, %v3124
    %v3126 = vmul.f32 %v3105, %v2976
    %v3127 = vmul.f32 %v3086, %v3106
    %v3128 = vadd.f32 %v3126, %v3127
    %v3129 = vtanh.pop %v3128
    %v3130 = vmul.f32 %v3125, %v3129
    %3131 = vst [vmem:[%s1561] sm:$0xff] %v3130
    %v3132 = vld [vmem:[%s1563] sm:$0xff]
    %v3133 = vld [vmem:[%s1563 + $0x8] sm:$0xff]
    %v3134 = vld [vmem:[%s1563 + $0x10] sm:$0xff]
    %v3135 = vld [vmem:[%s1563 + $0x18] sm:$0xff]
    %3136 = vmatpush.msra.mxu0 %v2060
    %3137 = vmatpush.msra.mxu0 %v2056
    %3138 = vmatpush.msra.mxu0 %v2052
    %3139 = vmatpush.msra.mxu0 %v2048
    %3140 = vmatpush.msra.mxu0 %v2044
    %3141 = vmatpush.msra.mxu0 %v2040
    %3142 = vmatpush.msra.mxu0 %v2036
    %3143 = vmatpush.msra.mxu0 %v2032
    %3144 = vmatpush.msra.mxu0 %v2028
    %3145 = vmatpush.msra.mxu0 %v2024
    %3146 = vmatpush.msra.mxu0 %v2020
    %3147 = vmatpush.msra.mxu0 %v2016
    %3148 = vmatpush.msra.mxu0 %v2012
    %3149 = vmatpush.msra.mxu0 %v2008
    %3150 = vmatpush.msra.mxu0 %v2004
    %3151 = vmatpush.msra.mxu0 %v2000
    %3152 = vmatmul.f32.gmra.mxu0 %v3130
    %v3153 = vpop.f32.mrf.mxu0
    %v3154 = vadd.f32 0.0, %v3153
    %3155 = vdwg.mxu0
    %3156 = vmatpush.msra.mxu0 %v2061
    %3157 = vmatpush.msra.mxu0 %v2057
    %3158 = vmatpush.msra.mxu0 %v2053
    %3159 = vmatpush.msra.mxu0 %v2049
    %3160 = vmatpush.msra.mxu0 %v2045
    %3161 = vmatpush.msra.mxu0 %v2041
    %3162 = vmatpush.msra.mxu0 %v2037
    %3163 = vmatpush.msra.mxu0 %v2033
    %3164 = vmatpush.msra.mxu0 %v2029
    %3165 = vmatpush.msra.mxu0 %v2025
    %3166 = vmatpush.msra.mxu0 %v2021
    %3167 = vmatpush.msra.mxu0 %v2017
    %3168 = vmatpush.msra.mxu0 %v2013
    %3169 = vmatpush.msra.mxu0 %v2009
    %3170 = vmatpush.msra.mxu0 %v2005
    %3171 = vmatpush.msra.mxu0 %v2001
    %3172 = vmatmul.f32.gmra.mxu0 %v3130
    %v3173 = vpop.f32.mrf.mxu0
    %v3174 = vadd.f32 0.0, %v3173
    %3175 = vdwg.mxu0
    %3176 = vmatpush.msra.mxu0 %v2062
    %3177 = vmatpush.msra.mxu0 %v2058
    %3178 = vmatpush.msra.mxu0 %v2054
    %3179 = vmatpush.msra.mxu0 %v2050
    %3180 = vmatpush.msra.mxu0 %v2046
    %3181 = vmatpush.msra.mxu0 %v2042
    %3182 = vmatpush.msra.mxu0 %v2038
    %3183 = vmatpush.msra.mxu0 %v2034
    %3184 = vmatpush.msra.mxu0 %v2030
    %3185 = vmatpush.msra.mxu0 %v2026
    %3186 = vmatpush.msra.mxu0 %v2022
    %3187 = vmatpush.msra.mxu0 %v2018
    %3188 = vmatpush.msra.mxu0 %v2014
    %3189 = vmatpush.msra.mxu0 %v2010
    %3190 = vmatpush.msra.mxu0 %v2006
    %3191 = vmatpush.msra.mxu0 %v2002
    %3192 = vmatmul.f32.gmra.mxu0 %v3130
    %v3193 = vpop.f32.mrf.mxu0
    %v3194 = vadd.f32 0.0, %v3193
    %3195 = vdwg.mxu0
    %3196 = vmatpush.msra.mxu0 %v2063
    %3197 = vmatpush.msra.mxu0 %v2059
    %3198 = vmatpush.msra.mxu0 %v2055
    %3199 = vmatpush.msra.mxu0 %v2051
    %3200 = vmatpush.msra.mxu0 %v2047
    %3201 = vmatpush.msra.mxu0 %v2043
    %3202 = vmatpush.msra.mxu0 %v2039
    %3203 = vmatpush.msra.mxu0 %v2035
    %3204 = vmatpush.msra.mxu0 %v2031
    %3205 = vmatpush.msra.mxu0 %v2027
    %3206 = vmatpush.msra.mxu0 %v2023
    %3207 = vmatpush.msra.mxu0 %v2019
    %3208 = vmatpush.msra.mxu0 %v2015
    %3209 = vmatpush.msra.mxu0 %v2011
    %3210 = vmatpush.msra.mxu0 %v2007
    %3211 = vmatpush.msra.mxu0 %v2003
    %3212 = vmatmul.f32.gmra.mxu0 %v3130
    %v3213 = vpop.f32.mrf.mxu0
    %v3214 = vadd.f32 0.0, %v3213
    %3215 = vdwg.mxu0
    %v3216 = vadd.f32 %v3132, %v3154
    %v3217 = vadd.f32 %v3133, %v3174
    %v3218 = vadd.f32 %v3134, %v3194
    %v3219 = vadd.f32 %v3135, %v3214
    %v3220 = vxor.u32 %v3216, 2147483648
    %v3221 = vmul.f32 %v3220, 1.442695
    %v3222 = vpow.pop %v3221
    %v3223 = vadd.f32 %v3222, 1.0
    %v3224 = vrcp.pop %v3223
    %v3225 = vmul.f32 %v3223, %v3224
    %v3226 = vsub.f32 1.0, %v3225
    %v3227 = vmul.f32 %v3224, %v3226
    %v3228 = vadd.f32 %v3224, %v3227
    %vm3229 = vweird.f32 %v3223
    %vm3230 = vweird.f32 %v3224
    %vm3231 = vmor %vm3229, %vm3230
    %v3232 = vsel %vm3231, %v3224, %v3228
    %v3233 = vand.u32 2147483647, %v3223
    %vm3234 = vcmp.eq.f32.partialorder %v3233, 8.507059e+37
    %v3235 = vand.u32 %v3223, 2147483648
    %v3236 = vor.u32 1.1754944e-38, %v3235
    %v3237 = vsel %vm3234, %v3236, %v3232
    %v3238 = vmul.f32 1.0, %v3237
    %v3239 = vxor.u32 %v3217, 2147483648
    %v3240 = vmul.f32 %v3239, 1.442695
    %v3241 = vpow.pop %v3240
    %v3242 = vadd.f32 %v3241, 1.0
    %v3243 = vrcp.pop %v3242
    %v3244 = vmul.f32 %v3242, %v3243
    %v3245 = vsub.f32 1.0, %v3244
    %v3246 = vmul.f32 %v3243, %v3245
    %v3247 = vadd.f32 %v3243, %v3246
    %vm3248 = vweird.f32 %v3242
    %vm3249 = vweird.f32 %v3243
    %vm3250 = vmor %vm3248, %vm3249
    %v3251 = vsel %vm3250, %v3243, %v3247
    %v3252 = vand.u32 2147483647, %v3242
    %vm3253 = vcmp.eq.f32.partialorder %v3252, 8.507059e+37
    %v3254 = vand.u32 %v3242, 2147483648
    %v3255 = vor.u32 1.1754944e-38, %v3254
    %v3256 = vsel %vm3253, %v3255, %v3251
    %v3257 = vmul.f32 1.0, %v3256
    %v3258 = vtanh.pop %v3218
    %v3259 = vxor.u32 %v3219, 2147483648
    %v3260 = vmul.f32 %v3259, 1.442695
    %v3261 = vpow.pop %v3260
    %v3262 = vadd.f32 %v3261, 1.0
    %v3263 = vrcp.pop %v3262
    %v3264 = vmul.f32 %v3262, %v3263
    %v3265 = vsub.f32 1.0, %v3264
    %v3266 = vmul.f32 %v3263, %v3265
    %v3267 = vadd.f32 %v3263, %v3266
    %vm3268 = vweird.f32 %v3262
    %vm3269 = vweird.f32 %v3263
    %vm3270 = vmor %vm3268, %vm3269
    %v3271 = vsel %vm3270, %v3263, %v3267
    %v3272 = vand.u32 2147483647, %v3262
    %vm3273 = vcmp.eq.f32.partialorder %v3272, 8.507059e+37
    %v3274 = vand.u32 %v3262, 2147483648
    %v3275 = vor.u32 1.1754944e-38, %v3274
    %v3276 = vsel %vm3273, %v3275, %v3271
    %v3277 = vmul.f32 1.0, %v3276
    %v3278 = vmul.f32 %v3257, %v3128
    %v3279 = vmul.f32 %v3238, %v3258
    %v3280 = vadd.f32 %v3278, %v3279
    %v3281 = vtanh.pop %v3280
    %v3282 = vmul.f32 %v3277, %v3281
    %3283 = vst [vmem:[%s1715] sm:$0xff] %v3282
    %s3284 = scalar_lea.vmem [#allocation17], 8
    %3285 = vst [vmem:[%s3284] sm:$0xff] %v3282
    %s3286 = scalar_lea.vmem [#allocation19], 8
    %3287 = vst [vmem:[%s3286] sm:$0xff] %v3280
    %v3288 = vld [vmem:[#allocation2] sm:$0xff]
    %v3289 = vld [vmem:[#allocation2 + $0x8] sm:$0xff]
    %v3290 = vld [vmem:[#allocation2 + $0x10] sm:$0xff]
    %v3291 = vld [vmem:[#allocation2 + $0x18] sm:$0xff]
    %v3292 = vld [vmem:[#allocation2 + $0x20] sm:$0xff]
    %v3293 = vld [vmem:[#allocation2 + $0x28] sm:$0xff]
    %v3294 = vld [vmem:[#allocation2 + $0x30] sm:$0xff]
    %v3295 = vld [vmem:[#allocation2 + $0x38] sm:$0xff]
    %v3296 = vld [vmem:[#allocation12] sm:$0xff]
    %v3297 = vld [vmem:[#allocation12 + $0x8] sm:$0xff]
    %v3298 = vld [vmem:[#allocation12 + $0x10] sm:$0xff]
    %v3299 = vld [vmem:[#allocation12 + $0x18] sm:$0xff]
    %v3300 = vld [vmem:[#allocation12 + $0x20] sm:$0xff]
    %v3301 = vld [vmem:[#allocation12 + $0x28] sm:$0xff]
    %v3302 = vld [vmem:[#allocation12 + $0x30] sm:$0xff]
    %v3303 = vld [vmem:[#allocation12 + $0x38] sm:$0xff]
    %v3304 = vld [vmem:[#allocation12 + $0x40] sm:$0xff]
    %v3305 = vld [vmem:[#allocation12 + $0x48] sm:$0xff]
    %v3306 = vld [vmem:[#allocation12 + $0x50] sm:$0xff]
    %v3307 = vld [vmem:[#allocation12 + $0x58] sm:$0xff]
    %v3308 = vld [vmem:[#allocation12 + $0x60] sm:$0xff]
    %v3309 = vld [vmem:[#allocation12 + $0x68] sm:$0xff]
    %v3310 = vld [vmem:[#allocation12 + $0x70] sm:$0xff]
    %v3311 = vld [vmem:[#allocation12 + $0x78] sm:$0xff]
    %v3312 = vld [vmem:[%s5] sm:$0x1]
    %v3314 = vperm.slane %v3312, 0
    %3316 = vmatpush.msra.mxu0 %v3311
    %3317 = vmatpush.msra.mxu0 %v3310
    %3318 = vmatpush.msra.mxu0 %v3309
    %3319 = vmatpush.msra.mxu0 %v3308
    %3320 = vmatpush.msra.mxu0 %v3307
    %3321 = vmatpush.msra.mxu0 %v3306
    %3322 = vmatpush.msra.mxu0 %v3305
    %3323 = vmatpush.msra.mxu0 %v3304
    %3324 = vmatpush.msra.mxu0 %v3303
    %3325 = vmatpush.msra.mxu0 %v3302
    %3326 = vmatpush.msra.mxu0 %v3301
    %3327 = vmatpush.msra.mxu0 %v3300
    %3328 = vmatpush.msra.mxu0 %v3299
    %3329 = vmatpush.msra.mxu0 %v3298
    %3330 = vmatpush.msra.mxu0 %v3297
    %3331 = vmatpush.msra.mxu0 %v3296
    %3332 = vmatmul.f32.gmra.mxu0 %v3288
    %v3333 = vpop.f32.mrf.mxu0
    %v3334 = vadd.f32 %v3314, %v3333
    %3335 = vmatmul.f32.gmra.mxu0 %v3289
    %v3336 = vpop.f32.mrf.mxu0
    %v3337 = vadd.f32 %v3314, %v3336
    %3338 = vmatmul.f32.gmra.mxu0 %v3290
    %v3339 = vpop.f32.mrf.mxu0
    %v3340 = vadd.f32 %v3314, %v3339
    %3341 = vmatmul.f32.gmra.mxu0 %v3291
    %v3342 = vpop.f32.mrf.mxu0
    %v3343 = vadd.f32 %v3314, %v3342
    %3344 = vmatmul.f32.gmra.mxu0 %v3292
    %v3345 = vpop.f32.mrf.mxu0
    %v3346 = vadd.f32 %v3314, %v3345
    %3347 = vmatmul.f32.gmra.mxu0 %v3293
    %v3348 = vpop.f32.mrf.mxu0
    %v3349 = vadd.f32 %v3314, %v3348
    %3350 = vmatmul.f32.gmra.mxu0 %v3294
    %v3351 = vpop.f32.mrf.mxu0
    %v3352 = vadd.f32 %v3314, %v3351
    %3353 = vmatmul.f32.gmra.mxu0 %v3295
    %v3354 = vpop.f32.mrf.mxu0
    %v3355 = vadd.f32 %v3314, %v3354
    %3356 = vdwg.mxu0
    %3357 = vst [vmem:[#allocation16] sm:$0xff] %v3334
    %3358 = vst [vmem:[#allocation16 + $0x8] sm:$0xff] %v3337
    %3359 = vst [vmem:[#allocation16 + $0x10] sm:$0xff] %v3340
    %3360 = vst [vmem:[#allocation16 + $0x18] sm:$0xff] %v3343
    %3361 = vst [vmem:[#allocation16 + $0x20] sm:$0xff] %v3346
    %3362 = vst [vmem:[#allocation16 + $0x28] sm:$0xff] %v3349
    %3363 = vst [vmem:[#allocation16 + $0x30] sm:$0xff] %v3352
    %3364 = vst [vmem:[#allocation16 + $0x38] sm:$0xff] %v3355
    // Predicated region
    $region62: #{tpu_custom_call.1} parent=1 // pred_check
      _
    $region63: #{tpu_custom_call.1} parent=1 // pred_check_branch
      %3366 = sbr.rel (0) target = $region65
    $region64: #{tpu_custom_call.1} parent=1 // pred_region
      %3368 = vsyncadd [#allocation6], 0
      %s3369 = sshll.u32 [#allocation16], 4
      %s3370 = int_to_ptr.vmem [resolvable:$true] %s3369
      %s3371 = sshll.u32 %s8, 4
      %s3372 = int_to_ptr.hbm [resolvable:$true] %s3371
      %3377 = dma.vmem_to_hbm [thread:$0]  %s3370, 1024, %s3372, [#allocation6], 128, 128, 8
    $region65: #{tpu_custom_call.1} parent=1 // pred_fallthru
      _
    // Predicated region
    $region66: #{tpu_custom_call.1} parent=1 // pred_check
      _
    $region67: #{tpu_custom_call.1} parent=1 // pred_check_branch
      %3379 = sbr.rel (0) target = $region69
    $region68: #{tpu_custom_call.1} parent=1 // pred_region
      %3381 = vsyncadd [#allocation18], 0
      %s3382 = sshll.u32 [#allocation17], 4
      %s3383 = int_to_ptr.vmem [resolvable:$true] %s3382
      %s3384 = sshll.u32 %s9, 4
      %s3385 = int_to_ptr.hbm [resolvable:$true] %s3384
      %3390 = dma.vmem_to_hbm [thread:$0]  %s3383, 256, %s3385, [#allocation18], 128, 128, 8
    $region69: #{tpu_custom_call.1} parent=1 // pred_fallthru
      _
    // Predicated region
    $region70: #{tpu_custom_call.1} parent=1 // pred_check
      _
    $region71: #{tpu_custom_call.1} parent=1 // pred_check_branch
      %3392 = sbr.rel (0) target = $region73
    $region72: #{tpu_custom_call.1} parent=1 // pred_region
      %3394 = vsyncadd [#allocation18], 0
      %s3395 = sshll.u32 [#allocation19], 4
      %s3396 = int_to_ptr.vmem [resolvable:$true] %s3395
      %s3397 = sshll.u32 %s10, 4
      %s3398 = int_to_ptr.hbm [resolvable:$true] %s3397
      %3403 = dma.vmem_to_hbm [thread:$0]  %s3396, 256, %s3398, [#allocation18], 128, 128, 8
    $region73: #{tpu_custom_call.1} parent=1 // pred_fallthru
      _
    // Predicated region
    $region74: #{tpu_custom_call.1} parent=1 // pred_check
      _
    $region75: #{tpu_custom_call.1} parent=1 // pred_check_branch
      %3405 = sbr.rel (0) target = $region77
    $region76: #{tpu_custom_call.1} parent=1 // pred_region
      %3407 = dma.done [#allocation6], 1024
    $region77: #{tpu_custom_call.1} parent=1 // pred_fallthru
      _
    // Predicated region
    $region78: #{tpu_custom_call.1} parent=1 // pred_check
      _
    $region79: #{tpu_custom_call.1} parent=1 // pred_check_branch
      %3409 = sbr.rel (0) target = $region81
    $region80: #{tpu_custom_call.1} parent=1 // pred_region
      %3411 = dma.done [#allocation18], 256
    $region81: #{tpu_custom_call.1} parent=1 // pred_fallthru
      _
    // Predicated region
    $region82: #{tpu_custom_call.1} parent=1 // pred_check
      _
    $region83: #{tpu_custom_call.1} parent=1 // pred_check_branch
      %3413 = sbr.rel (0) target = $region85
    $region84: #{tpu_custom_call.1} parent=1 // pred_region
      %3415 = dma.done [#allocation18], 256
    $region85: #{tpu_custom_call.1} parent=1 // pred_fallthru
      _
    %3416 = vsyncpa [#allocation5], 1
    %3417 = vsyncpa [#allocation8], 1
    %3418 = vsyncpa [#allocation11], 1
    %3419 = vsyncpa [#allocation14], 1
    %3420 = vsyncpa [#allocation6], 1
    %3421 = vsyncpa [#allocation18], 1

</llo_original>
